<compile_context>
chip_gen: v6e
topology: v6e:2x2x1
jax: 0.10.0
libtpu: 0.0.40
codegen_flags: <defaults>
</compile_context>

<pallas_src>
import functools

import numpy as np
import jax
import jax.numpy as jnp
from jax import lax
from jax.experimental import pallas as pl
from jax.experimental.pallas import tpu as pltpu


def _attention_kernel(x_ref, masks_ref, pw_w_ref, pw_b_ref, dw_w_ref,
                      dw_b_ref, dd_w_ref, dd_b_ref, o_ref,
                      pad1_ref, pad2_ref, *, H, W):
    """One batch element per grid step, NCHW layout with flattened spatial dims.

    x_ref:     (1, C, H*W)   input tile (lane-dense: H*W multiple of 128)
    masks_ref: (10, H*W)     column-validity masks (rows 0-4: conv, 5-9: dilated)
    pw_w_ref:  (C, C)        pointwise weight (C_out, C_in)
    pw_b_ref:  (C, 1)
    dw_w_ref:  (C, 25)       depthwise 5x5 weight, col = kh*5 + kw
    dw_b_ref:  (C, 1)
    dd_w_ref:  (C, 25)       dilated (x3) depthwise 5x5 weight
    dd_b_ref:  (C, 1)
    o_ref:     (1, C, H*W)
    pad1_ref:  (C, (H+6)*W)  scratch, 3 zero halo rows each side (flattened)
    pad2_ref:  (C, (H+14)*W) scratch, 7 zero halo rows each side (flattened)
    """
    C = x_ref.shape[1]
    HW = H * W

    x = x_ref[0]                                         # (C, HW)

    # ---- 1x1 pointwise conv == channel matmul on the MXU, stays NCHW ----
    a = jnp.dot(pw_w_ref[...], x, preferred_element_type=jnp.float32)
    a = a + pw_b_ref[...]                                # (C,1) lane-broadcast

    def depthwise5x5(inp, pad_ref, w_ref, b_ref, dilation, mask_base):
        # 5x5 depthwise conv, stride 1, zero padding 2*dilation, on the
        # flattened (C, H*W) layout.
        halo = (2 * dilation + 1) * W                    # padded rows per side
        L = pad_ref.shape[1]
        # Zero only the halo strips; the interior is fully overwritten below,
        # so this is safe regardless of how grid steps map to cores.
        pad_ref[:, 0:halo] = jnp.zeros((C, halo), jnp.float32)
        pad_ref[:, halo + HW:L] = jnp.zeros((C, L - halo - HW), jnp.float32)
        pad_ref[:, halo:halo + HW] = inp

        wgt = w_ref[...]                                 # (C, 25), hoisted
        acc = jnp.zeros((C, HW), jnp.float32)
        for kw in range(5):
            dw = (kw - 2) * dilation
            part = jnp.zeros((C, HW), jnp.float32)
            for kh in range(5):
                dh = (kh - 2) * dilation
                off = halo + dh * W + dw                 # static lane offset
                w_col = wgt[:, kh * 5 + kw:kh * 5 + kw + 1]       # (C, 1)
                part = part + pad_ref[:, off:off + HW] * w_col
            if dw != 0:
                # zero lanes where the horizontal shift crossed a row boundary
                part = part * masks_ref[mask_base + kw:mask_base + kw + 1, :]
            acc = acc + part
        return acc + b_ref[...]                          # bias added once

    a = depthwise5x5(a, pad1_ref, dw_w_ref, dw_b_ref, dilation=1, mask_base=0)
    a = depthwise5x5(a, pad2_ref, dd_w_ref, dd_b_ref, dilation=3, mask_base=5)

    # ---- gate: u * attn  (lane-dense 256-wide unmasked stores) ----
    o_ref[0] = x * a


def _column_masks(H, W):
    """(10, H*W) f32 masks: rows kw=0..4 for dilation 1, rows 5..9 for dilation 3."""
    w_idx = np.arange(H * W) % W
    rows = []
    for dil in (1, 3):
        for kw in range(5):
            dw = (kw - 2) * dil
            rows.append(((w_idx + dw >= 0) & (w_idx + dw < W)).astype(np.float32))
    return np.stack(rows)


@jax.jit
def attention_forward(x_nchw, pw_w, pw_b, dw_w, dw_b, dd_w, dd_b):
    """x_nchw: (B, C, H, W) float32 (PyTorch layout). Returns (B, C, H, W)."""
    B, C, H, W = x_nchw.shape
    HW = H * W
    x = x_nchw.reshape(B, C, HW)                 # free reshape, no transpose
    masks = jnp.asarray(_column_masks(H, W))     # (10, HW) compile-time constants

    L1 = (H + 2 * 3) * W                         # 3 halo rows each side
    L2 = (H + 2 * 7) * W                         # 7 halo rows each side

    grid_spec = pltpu.PrefetchScalarGridSpec(
        num_scalar_prefetch=0,
        grid=(B,),
        in_specs=[
            pl.BlockSpec((1, C, HW), lambda b: (b, 0, 0)),   # x
            pl.BlockSpec((10, HW), lambda b: (0, 0)),        # column masks
            pl.BlockSpec((C, C), lambda b: (0, 0)),          # pointwise w
            pl.BlockSpec((C, 1), lambda b: (0, 0)),          # pointwise b
            pl.BlockSpec((C, 25), lambda b: (0, 0)),         # depthwise w
            pl.BlockSpec((C, 1), lambda b: (0, 0)),          # depthwise b
            pl.BlockSpec((C, 25), lambda b: (0, 0)),         # dilated depthwise w
            pl.BlockSpec((C, 1), lambda b: (0, 0)),          # dilated depthwise b
        ],
        out_specs=pl.BlockSpec((1, C, HW), lambda b: (b, 0, 0)),
        scratch_shapes=[
            pltpu.VMEM((C, L1), jnp.float32),
            pltpu.VMEM((C, L2), jnp.float32),
        ],
    )

    out = pl.pallas_call(
        functools.partial(_attention_kernel, H=H, W=W),
        out_shape=jax.ShapeDtypeStruct((B, C, HW), jnp.float32),
        grid_spec=grid_spec,
        # Keep a 2-wide parallel batch axis so v7x can shard across its two
        # TensorCores; on single-TC v5e/v6e the per-step overhead is negligible.
        compiler_params=pltpu.CompilerParams(
            dimension_semantics=("parallel",)),
    )(x, masks, pw_w, pw_b, dw_w, dw_b, dd_w, dd_b)

    return out.reshape(B, C, H, W)


def _reference(x, pw_w, pw_b, dw_w, dw_b, dd_w, dd_b):
    """Pure-JAX NCHW reference mirroring the PyTorch module."""
    B, C, H, W = x.shape
    dn = ("NCHW", "OIHW", "NCHW")
    a = lax.conv_general_dilated(
        x, pw_w.reshape(C, C, 1, 1), (1, 1), "VALID",
        dimension_numbers=dn) + pw_b.reshape(1, C, 1, 1)
    a = lax.conv_general_dilated(
        a, dw_w.reshape(C, 1, 5, 5), (1, 1), ((2, 2), (2, 2)),
        dimension_numbers=dn,
        feature_group_count=C) + dw_b.reshape(1, C, 1, 1)
    a = lax.conv_general_dilated(
        a, dd_w.reshape(C, 1, 5, 5), (1, 1), ((6, 6), (6, 6)),
        rhs_dilation=(3, 3), dimension_numbers=dn,
        feature_group_count=C) + dd_b.reshape(1, C, 1, 1)
    return x * a


if __name__ == "__main__":
    B, C, H, W = 2, 32, 16, 16   # dim = 32

    key = jax.random.PRNGKey(0)
    k = jax.random.split(key, 7)
    x = jax.random.normal(k[0], (B, C, H, W), jnp.float32)

    # Deterministic synthetic parameters (shapes follow the nn.Module __init__).
    pw_w = jax.random.normal(k[1], (C, C), jnp.float32) * 0.1    # (C_out, C_in)
    pw_b = jax.random.normal(k[2], (C, 1), jnp.float32) * 0.1
    dw_w = jax.random.normal(k[3], (C, 25), jnp.float32) * 0.1   # col = kh*5+kw
    dw_b = jax.random.normal(k[4], (C, 1), jnp.float32) * 0.1
    dd_w = jax.random.normal(k[5], (C, 25), jnp.float32) * 0.1
    dd_b = jax.random.normal(k[6], (C, 1), jnp.float32) * 0.1

    out = jax.block_until_ready(
        attention_forward(x, pw_w, pw_b, dw_w, dw_b, dd_w, dd_b))
    ref = jax.block_until_ready(
        _reference(x, pw_w, pw_b, dw_w, dw_b, dd_w, dd_b))

    assert out.shape == (B, C, H, W)
    max_err = float(jnp.max(jnp.abs(out - ref)))
    assert jnp.allclose(out, ref, atol=2e-3, rtol=2e-3), max_err

    print("KERNEL_OK")
</pallas_src>

<mosaic_0001>
module attributes {stable_mosaic.version = 11 : i64} {
  func.func @_attention_kernel(%arg0: i32, %arg1: memref<1x32x256xf32, #tpu.memory_space<vmem>>, %arg2: memref<10x256xf32, #tpu.memory_space<vmem>>, %arg3: memref<32x32xf32, #tpu.memory_space<vmem>>, %arg4: memref<32x1xf32, #tpu.memory_space<vmem>>, %arg5: memref<32x25xf32, #tpu.memory_space<vmem>>, %arg6: memref<32x1xf32, #tpu.memory_space<vmem>>, %arg7: memref<32x25xf32, #tpu.memory_space<vmem>>, %arg8: memref<32x1xf32, #tpu.memory_space<vmem>>, %arg9: memref<1x32x256xf32, #tpu.memory_space<vmem>>, %arg10: memref<32x352xf32, #tpu.memory_space<vmem>>, %arg11: memref<32x480xf32, #tpu.memory_space<vmem>>) attributes {dimension_semantics = [#tpu.dimension_semantics<parallel>], iteration_bounds = array<i64: 2>, scalar_prefetch = 0 : i64, scratch_operands = 2 : i64, tpu.core_type = #tpu.core_type<tc>, window_params = [{transform_indices = @transform_0, window_bounds = array<i64: 1, 32, 256>}, {pipeline_mode = #tpu.pipeline_mode<synchronous>, transform_indices = @transform_1, window_bounds = array<i64: 10, 256>}, {pipeline_mode = #tpu.pipeline_mode<synchronous>, transform_indices = @transform_2, window_bounds = array<i64: 32, 32>}, {pipeline_mode = #tpu.pipeline_mode<synchronous>, transform_indices = @transform_3, window_bounds = array<i64: 32, 1>}, {pipeline_mode = #tpu.pipeline_mode<synchronous>, transform_indices = @transform_4, window_bounds = array<i64: 32, 25>}, {pipeline_mode = #tpu.pipeline_mode<synchronous>, transform_indices = @transform_5, window_bounds = array<i64: 32, 1>}, {pipeline_mode = #tpu.pipeline_mode<synchronous>, transform_indices = @transform_6, window_bounds = array<i64: 32, 25>}, {pipeline_mode = #tpu.pipeline_mode<synchronous>, transform_indices = @transform_7, window_bounds = array<i64: 32, 1>}, {transform_indices = @transform_8, window_bounds = array<i64: 1, 32, 256>}]} {
    %c0 = arith.constant 0 : index
    %c0_0 = arith.constant 0 : index
    %c0_1 = arith.constant 0 : index
    %0 = vector.load %arg1[%c0, %c0_0, %c0_1] : memref<1x32x256xf32, #tpu.memory_space<vmem>>, vector<1x32x256xf32>
    %1 = vector.shape_cast %0 : vector<1x32x256xf32> to vector<32x256xf32>
    %c0_2 = arith.constant 0 : index
    %c0_3 = arith.constant 0 : index
    %2 = vector.load %arg3[%c0_2, %c0_3] : memref<32x32xf32, #tpu.memory_space<vmem>>, vector<32x32xf32>
    %cst = arith.constant dense<0.000000e+00> : vector<32x256xf32>
    %3 = tpu.matmul %2, %1, %cst {dimension_numbers = #tpu.dot_dimension_numbers<[1], [0], [0], [1], [0, 0, 1, 1], [], []>} : vector<32x32xf32>, vector<32x256xf32>, vector<32x256xf32> -> vector<32x256xf32>
    %c0_4 = arith.constant 0 : index
    %c0_5 = arith.constant 0 : index
    %4 = vector.load %arg4[%c0_4, %c0_5] : memref<32x1xf32, #tpu.memory_space<vmem>>, vector<32x1xf32>
    %5 = vector.broadcast %4 : vector<32x1xf32> to vector<32x256xf32>
    %6 = arith.addf %3, %5 : vector<32x256xf32>
    %cst_6 = arith.constant 0.000000e+00 : f32
    %7 = vector.broadcast %cst_6 : f32 to vector<32x48xf32>
    %c0_7 = arith.constant 0 : index
    %c0_8 = arith.constant 0 : index
    %8 = vector.load %arg10[%c0_7, %c0_8] : memref<32x352xf32, #tpu.memory_space<vmem>>, vector<32x48xf32>
    tpu.vector_store %arg10[%c0_7, %c0_8], %7 {strides = array<i32>} : memref<32x352xf32, #tpu.memory_space<vmem>>, vector<32x48xf32>,
    %cst_9 = arith.constant 0.000000e+00 : f32
    %9 = vector.broadcast %cst_9 : f32 to vector<32x48xf32>
    %c0_10 = arith.constant 0 : index
    %c304 = arith.constant 304 : index
    %10 = vector.load %arg10[%c0_10, %c304] : memref<32x352xf32, #tpu.memory_space<vmem>>, vector<32x48xf32>
    tpu.vector_store %arg10[%c0_10, %c304], %9 {strides = array<i32>} : memref<32x352xf32, #tpu.memory_space<vmem>>, vector<32x48xf32>,
    %c0_11 = arith.constant 0 : index
    %c48 = arith.constant 48 : index
    %11 = vector.load %arg10[%c0_11, %c48] : memref<32x352xf32, #tpu.memory_space<vmem>>, vector<32x256xf32>
    tpu.vector_store %arg10[%c0_11, %c48], %6 {strides = array<i32>} : memref<32x352xf32, #tpu.memory_space<vmem>>, vector<32x256xf32>,
    %c0_12 = arith.constant 0 : index
    %c0_13 = arith.constant 0 : index
    %12 = vector.load %arg5[%c0_12, %c0_13] : memref<32x25xf32, #tpu.memory_space<vmem>>, vector<32x25xf32>
    %cst_14 = arith.constant 0.000000e+00 : f32
    %13 = vector.broadcast %cst_14 : f32 to vector<32x256xf32>
    %cst_15 = arith.constant 0.000000e+00 : f32
    %14 = vector.broadcast %cst_15 : f32 to vector<32x256xf32>
    %15 = vector.extract_strided_slice %12 {offsets = [0, 0], sizes = [32, 1], strides = [1, 1]} : vector<32x25xf32> to vector<32x1xf32>
    %c0_16 = arith.constant 0 : index
    %c14 = arith.constant 14 : index
    %16 = vector.load %arg10[%c0_16, %c14] : memref<32x352xf32, #tpu.memory_space<vmem>>, vector<32x256xf32>
    %17 = vector.broadcast %15 : vector<32x1xf32> to vector<32x256xf32>
    %18 = arith.mulf %16, %17 : vector<32x256xf32>
    %19 = arith.addf %14, %18 : vector<32x256xf32>
    %20 = vector.extract_strided_slice %12 {offsets = [0, 5], sizes = [32, 1], strides = [1, 1]} : vector<32x25xf32> to vector<32x1xf32>
    %c0_17 = arith.constant 0 : index
    %c30 = arith.constant 30 : index
    %21 = vector.load %arg10[%c0_17, %c30] : memref<32x352xf32, #tpu.memory_space<vmem>>, vector<32x256xf32>
    %22 = vector.broadcast %20 : vector<32x1xf32> to vector<32x256xf32>
    %23 = arith.mulf %21, %22 : vector<32x256xf32>
    %24 = arith.addf %19, %23 : vector<32x256xf32>
    %25 = vector.extract_strided_slice %12 {offsets = [0, 10], sizes = [32, 1], strides = [1, 1]} : vector<32x25xf32> to vector<32x1xf32>
    %c0_18 = arith.constant 0 : index
    %c46 = arith.constant 46 : index
    %26 = vector.load %arg10[%c0_18, %c46] : memref<32x352xf32, #tpu.memory_space<vmem>>, vector<32x256xf32>
    %27 = vector.broadcast %25 : vector<32x1xf32> to vector<32x256xf32>
    %28 = arith.mulf %26, %27 : vector<32x256xf32>
    %29 = arith.addf %24, %28 : vector<32x256xf32>
    %30 = vector.extract_strided_slice %12 {offsets = [0, 15], sizes = [32, 1], strides = [1, 1]} : vector<32x25xf32> to vector<32x1xf32>
    %c0_19 = arith.constant 0 : index
    %c62 = arith.constant 62 : index
    %31 = vector.load %arg10[%c0_19, %c62] : memref<32x352xf32, #tpu.memory_space<vmem>>, vector<32x256xf32>
    %32 = vector.broadcast %30 : vector<32x1xf32> to vector<32x256xf32>
    %33 = arith.mulf %31, %32 : vector<32x256xf32>
    %34 = arith.addf %29, %33 : vector<32x256xf32>
    %35 = vector.extract_strided_slice %12 {offsets = [0, 20], sizes = [32, 1], strides = [1, 1]} : vector<32x25xf32> to vector<32x1xf32>
    %c0_20 = arith.constant 0 : index
    %c78 = arith.constant 78 : index
    %36 = vector.load %arg10[%c0_20, %c78] : memref<32x352xf32, #tpu.memory_space<vmem>>, vector<32x256xf32>
    %37 = vector.broadcast %35 : vector<32x1xf32> to vector<32x256xf32>
    %38 = arith.mulf %36, %37 : vector<32x256xf32>
    %39 = arith.addf %34, %38 : vector<32x256xf32>
    %c0_21 = arith.constant 0 : index
    %c0_22 = arith.constant 0 : index
    %40 = vector.load %arg2[%c0_21, %c0_22] : memref<10x256xf32, #tpu.memory_space<vmem>>, vector<1x256xf32>
    %41 = vector.broadcast %40 : vector<1x256xf32> to vector<32x256xf32>
    %42 = arith.mulf %39, %41 : vector<32x256xf32>
    %43 = arith.addf %13, %42 : vector<32x256xf32>
    %cst_23 = arith.constant 0.000000e+00 : f32
    %44 = vector.broadcast %cst_23 : f32 to vector<32x256xf32>
    %45 = vector.extract_strided_slice %12 {offsets = [0, 1], sizes = [32, 1], strides = [1, 1]} : vector<32x25xf32> to vector<32x1xf32>
    %c0_24 = arith.constant 0 : index
    %c15 = arith.constant 15 : index
    %46 = vector.load %arg10[%c0_24, %c15] : memref<32x352xf32, #tpu.memory_space<vmem>>, vector<32x256xf32>
    %47 = vector.broadcast %45 : vector<32x1xf32> to vector<32x256xf32>
    %48 = arith.mulf %46, %47 : vector<32x256xf32>
    %49 = arith.addf %44, %48 : vector<32x256xf32>
    %50 = vector.extract_strided_slice %12 {offsets = [0, 6], sizes = [32, 1], strides = [1, 1]} : vector<32x25xf32> to vector<32x1xf32>
    %c0_25 = arith.constant 0 : index
    %c31 = arith.constant 31 : index
    %51 = vector.load %arg10[%c0_25, %c31] : memref<32x352xf32, #tpu.memory_space<vmem>>, vector<32x256xf32>
    %52 = vector.broadcast %50 : vector<32x1xf32> to vector<32x256xf32>
    %53 = arith.mulf %51, %52 : vector<32x256xf32>
    %54 = arith.addf %49, %53 : vector<32x256xf32>
    %55 = vector.extract_strided_slice %12 {offsets = [0, 11], sizes = [32, 1], strides = [1, 1]} : vector<32x25xf32> to vector<32x1xf32>
    %c0_26 = arith.constant 0 : index
    %c47 = arith.constant 47 : index
    %56 = vector.load %arg10[%c0_26, %c47] : memref<32x352xf32, #tpu.memory_space<vmem>>, vector<32x256xf32>
    %57 = vector.broadcast %55 : vector<32x1xf32> to vector<32x256xf32>
    %58 = arith.mulf %56, %57 : vector<32x256xf32>
    %59 = arith.addf %54, %58 : vector<32x256xf32>
    %60 = vector.extract_strided_slice %12 {offsets = [0, 16], sizes = [32, 1], strides = [1, 1]} : vector<32x25xf32> to vector<32x1xf32>
    %c0_27 = arith.constant 0 : index
    %c63 = arith.constant 63 : index
    %61 = vector.load %arg10[%c0_27, %c63] : memref<32x352xf32, #tpu.memory_space<vmem>>, vector<32x256xf32>
    %62 = vector.broadcast %60 : vector<32x1xf32> to vector<32x256xf32>
    %63 = arith.mulf %61, %62 : vector<32x256xf32>
    %64 = arith.addf %59, %63 : vector<32x256xf32>
    %65 = vector.extract_strided_slice %12 {offsets = [0, 21], sizes = [32, 1], strides = [1, 1]} : vector<32x25xf32> to vector<32x1xf32>
    %c0_28 = arith.constant 0 : index
    %c79 = arith.constant 79 : index
    %66 = vector.load %arg10[%c0_28, %c79] : memref<32x352xf32, #tpu.memory_space<vmem>>, vector<32x256xf32>
    %67 = vector.broadcast %65 : vector<32x1xf32> to vector<32x256xf32>
    %68 = arith.mulf %66, %67 : vector<32x256xf32>
    %69 = arith.addf %64, %68 : vector<32x256xf32>
    %c1 = arith.constant 1 : index
    %c0_29 = arith.constant 0 : index
    %70 = vector.load %arg2[%c1, %c0_29] : memref<10x256xf32, #tpu.memory_space<vmem>>, vector<1x256xf32>
    %71 = vector.broadcast %70 : vector<1x256xf32> to vector<32x256xf32>
    %72 = arith.mulf %69, %71 : vector<32x256xf32>
    %73 = arith.addf %43, %72 : vector<32x256xf32>
    %cst_30 = arith.constant 0.000000e+00 : f32
    %74 = vector.broadcast %cst_30 : f32 to vector<32x256xf32>
    %75 = vector.extract_strided_slice %12 {offsets = [0, 2], sizes = [32, 1], strides = [1, 1]} : vector<32x25xf32> to vector<32x1xf32>
    %c0_31 = arith.constant 0 : index
    %c16 = arith.constant 16 : index
    %76 = vector.load %arg10[%c0_31, %c16] : memref<32x352xf32, #tpu.memory_space<vmem>>, vector<32x256xf32>
    %77 = vector.broadcast %75 : vector<32x1xf32> to vector<32x256xf32>
    %78 = arith.mulf %76, %77 : vector<32x256xf32>
    %79 = arith.addf %74, %78 : vector<32x256xf32>
    %80 = vector.extract_strided_slice %12 {offsets = [0, 7], sizes = [32, 1], strides = [1, 1]} : vector<32x25xf32> to vector<32x1xf32>
    %c0_32 = arith.constant 0 : index
    %c32 = arith.constant 32 : index
    %81 = vector.load %arg10[%c0_32, %c32] : memref<32x352xf32, #tpu.memory_space<vmem>>, vector<32x256xf32>
    %82 = vector.broadcast %80 : vector<32x1xf32> to vector<32x256xf32>
    %83 = arith.mulf %81, %82 : vector<32x256xf32>
    %84 = arith.addf %79, %83 : vector<32x256xf32>
    %85 = vector.extract_strided_slice %12 {offsets = [0, 12], sizes = [32, 1], strides = [1, 1]} : vector<32x25xf32> to vector<32x1xf32>
    %c0_33 = arith.constant 0 : index
    %c48_34 = arith.constant 48 : index
    %86 = vector.load %arg10[%c0_33, %c48_34] : memref<32x352xf32, #tpu.memory_space<vmem>>, vector<32x256xf32>
    %87 = vector.broadcast %85 : vector<32x1xf32> to vector<32x256xf32>
    %88 = arith.mulf %86, %87 : vector<32x256xf32>
    %89 = arith.addf %84, %88 : vector<32x256xf32>
    %90 = vector.extract_strided_slice %12 {offsets = [0, 17], sizes = [32, 1], strides = [1, 1]} : vector<32x25xf32> to vector<32x1xf32>
    %c0_35 = arith.constant 0 : index
    %c64 = arith.constant 64 : index
    %91 = vector.load %arg10[%c0_35, %c64] : memref<32x352xf32, #tpu.memory_space<vmem>>, vector<32x256xf32>
    %92 = vector.broadcast %90 : vector<32x1xf32> to vector<32x256xf32>
    %93 = arith.mulf %91, %92 : vector<32x256xf32>
    %94 = arith.addf %89, %93 : vector<32x256xf32>
    %95 = vector.extract_strided_slice %12 {offsets = [0, 22], sizes = [32, 1], strides = [1, 1]} : vector<32x25xf32> to vector<32x1xf32>
    %c0_36 = arith.constant 0 : index
    %c80 = arith.constant 80 : index
    %96 = vector.load %arg10[%c0_36, %c80] : memref<32x352xf32, #tpu.memory_space<vmem>>, vector<32x256xf32>
    %97 = vector.broadcast %95 : vector<32x1xf32> to vector<32x256xf32>
    %98 = arith.mulf %96, %97 : vector<32x256xf32>
    %99 = arith.addf %94, %98 : vector<32x256xf32>
    %100 = arith.addf %73, %99 : vector<32x256xf32>
    %cst_37 = arith.constant 0.000000e+00 : f32
    %101 = vector.broadcast %cst_37 : f32 to vector<32x256xf32>
    %102 = vector.extract_strided_slice %12 {offsets = [0, 3], sizes = [32, 1], strides = [1, 1]} : vector<32x25xf32> to vector<32x1xf32>
    %c0_38 = arith.constant 0 : index
    %c17 = arith.constant 17 : index
    %103 = vector.load %arg10[%c0_38, %c17] : memref<32x352xf32, #tpu.memory_space<vmem>>, vector<32x256xf32>
    %104 = vector.broadcast %102 : vector<32x1xf32> to vector<32x256xf32>
    %105 = arith.mulf %103, %104 : vector<32x256xf32>
    %106 = arith.addf %101, %105 : vector<32x256xf32>
    %107 = vector.extract_strided_slice %12 {offsets = [0, 8], sizes = [32, 1], strides = [1, 1]} : vector<32x25xf32> to vector<32x1xf32>
    %c0_39 = arith.constant 0 : index
    %c33 = arith.constant 33 : index
    %108 = vector.load %arg10[%c0_39, %c33] : memref<32x352xf32, #tpu.memory_space<vmem>>, vector<32x256xf32>
    %109 = vector.broadcast %107 : vector<32x1xf32> to vector<32x256xf32>
    %110 = arith.mulf %108, %109 : vector<32x256xf32>
    %111 = arith.addf %106, %110 : vector<32x256xf32>
    %112 = vector.extract_strided_slice %12 {offsets = [0, 13], sizes = [32, 1], strides = [1, 1]} : vector<32x25xf32> to vector<32x1xf32>
    %c0_40 = arith.constant 0 : index
    %c49 = arith.constant 49 : index
    %113 = vector.load %arg10[%c0_40, %c49] : memref<32x352xf32, #tpu.memory_space<vmem>>, vector<32x256xf32>
    %114 = vector.broadcast %112 : vector<32x1xf32> to vector<32x256xf32>
    %115 = arith.mulf %113, %114 : vector<32x256xf32>
    %116 = arith.addf %111, %115 : vector<32x256xf32>
    %117 = vector.extract_strided_slice %12 {offsets = [0, 18], sizes = [32, 1], strides = [1, 1]} : vector<32x25xf32> to vector<32x1xf32>
    %c0_41 = arith.constant 0 : index
    %c65 = arith.constant 65 : index
    %118 = vector.load %arg10[%c0_41, %c65] : memref<32x352xf32, #tpu.memory_space<vmem>>, vector<32x256xf32>
    %119 = vector.broadcast %117 : vector<32x1xf32> to vector<32x256xf32>
    %120 = arith.mulf %118, %119 : vector<32x256xf32>
    %121 = arith.addf %116, %120 : vector<32x256xf32>
    %122 = vector.extract_strided_slice %12 {offsets = [0, 23], sizes = [32, 1], strides = [1, 1]} : vector<32x25xf32> to vector<32x1xf32>
    %c0_42 = arith.constant 0 : index
    %c81 = arith.constant 81 : index
    %123 = vector.load %arg10[%c0_42, %c81] : memref<32x352xf32, #tpu.memory_space<vmem>>, vector<32x256xf32>
    %124 = vector.broadcast %122 : vector<32x1xf32> to vector<32x256xf32>
    %125 = arith.mulf %123, %124 : vector<32x256xf32>
    %126 = arith.addf %121, %125 : vector<32x256xf32>
    %c3 = arith.constant 3 : index
    %c0_43 = arith.constant 0 : index
    %127 = vector.load %arg2[%c3, %c0_43] : memref<10x256xf32, #tpu.memory_space<vmem>>, vector<1x256xf32>
    %128 = vector.broadcast %127 : vector<1x256xf32> to vector<32x256xf32>
    %129 = arith.mulf %126, %128 : vector<32x256xf32>
    %130 = arith.addf %100, %129 : vector<32x256xf32>
    %cst_44 = arith.constant 0.000000e+00 : f32
    %131 = vector.broadcast %cst_44 : f32 to vector<32x256xf32>
    %132 = vector.extract_strided_slice %12 {offsets = [0, 4], sizes = [32, 1], strides = [1, 1]} : vector<32x25xf32> to vector<32x1xf32>
    %c0_45 = arith.constant 0 : index
    %c18 = arith.constant 18 : index
    %133 = vector.load %arg10[%c0_45, %c18] : memref<32x352xf32, #tpu.memory_space<vmem>>, vector<32x256xf32>
    %134 = vector.broadcast %132 : vector<32x1xf32> to vector<32x256xf32>
    %135 = arith.mulf %133, %134 : vector<32x256xf32>
    %136 = arith.addf %131, %135 : vector<32x256xf32>
    %137 = vector.extract_strided_slice %12 {offsets = [0, 9], sizes = [32, 1], strides = [1, 1]} : vector<32x25xf32> to vector<32x1xf32>
    %c0_46 = arith.constant 0 : index
    %c34 = arith.constant 34 : index
    %138 = vector.load %arg10[%c0_46, %c34] : memref<32x352xf32, #tpu.memory_space<vmem>>, vector<32x256xf32>
    %139 = vector.broadcast %137 : vector<32x1xf32> to vector<32x256xf32>
    %140 = arith.mulf %138, %139 : vector<32x256xf32>
    %141 = arith.addf %136, %140 : vector<32x256xf32>
    %142 = vector.extract_strided_slice %12 {offsets = [0, 14], sizes = [32, 1], strides = [1, 1]} : vector<32x25xf32> to vector<32x1xf32>
    %c0_47 = arith.constant 0 : index
    %c50 = arith.constant 50 : index
    %143 = vector.load %arg10[%c0_47, %c50] : memref<32x352xf32, #tpu.memory_space<vmem>>, vector<32x256xf32>
    %144 = vector.broadcast %142 : vector<32x1xf32> to vector<32x256xf32>
    %145 = arith.mulf %143, %144 : vector<32x256xf32>
    %146 = arith.addf %141, %145 : vector<32x256xf32>
    %147 = vector.extract_strided_slice %12 {offsets = [0, 19], sizes = [32, 1], strides = [1, 1]} : vector<32x25xf32> to vector<32x1xf32>
    %c0_48 = arith.constant 0 : index
    %c66 = arith.constant 66 : index
    %148 = vector.load %arg10[%c0_48, %c66] : memref<32x352xf32, #tpu.memory_space<vmem>>, vector<32x256xf32>
    %149 = vector.broadcast %147 : vector<32x1xf32> to vector<32x256xf32>
    %150 = arith.mulf %148, %149 : vector<32x256xf32>
    %151 = arith.addf %146, %150 : vector<32x256xf32>
    %152 = vector.extract_strided_slice %12 {offsets = [0, 24], sizes = [32, 1], strides = [1, 1]} : vector<32x25xf32> to vector<32x1xf32>
    %c0_49 = arith.constant 0 : index
    %c82 = arith.constant 82 : index
    %153 = vector.load %arg10[%c0_49, %c82] : memref<32x352xf32, #tpu.memory_space<vmem>>, vector<32x256xf32>
    %154 = vector.broadcast %152 : vector<32x1xf32> to vector<32x256xf32>
    %155 = arith.mulf %153, %154 : vector<32x256xf32>
    %156 = arith.addf %151, %155 : vector<32x256xf32>
    %c4 = arith.constant 4 : index
    %c0_50 = arith.constant 0 : index
    %157 = vector.load %arg2[%c4, %c0_50] : memref<10x256xf32, #tpu.memory_space<vmem>>, vector<1x256xf32>
    %158 = vector.broadcast %157 : vector<1x256xf32> to vector<32x256xf32>
    %159 = arith.mulf %156, %158 : vector<32x256xf32>
    %160 = arith.addf %130, %159 : vector<32x256xf32>
    %c0_51 = arith.constant 0 : index
    %c0_52 = arith.constant 0 : index
    %161 = vector.load %arg6[%c0_51, %c0_52] : memref<32x1xf32, #tpu.memory_space<vmem>>, vector<32x1xf32>
    %162 = vector.broadcast %161 : vector<32x1xf32> to vector<32x256xf32>
    %163 = arith.addf %160, %162 : vector<32x256xf32>
    %cst_53 = arith.constant 0.000000e+00 : f32
    %164 = vector.broadcast %cst_53 : f32 to vector<32x112xf32>
    %c0_54 = arith.constant 0 : index
    %c0_55 = arith.constant 0 : index
    %165 = vector.load %arg11[%c0_54, %c0_55] : memref<32x480xf32, #tpu.memory_space<vmem>>, vector<32x112xf32>
    tpu.vector_store %arg11[%c0_54, %c0_55], %164 {strides = array<i32>} : memref<32x480xf32, #tpu.memory_space<vmem>>, vector<32x112xf32>,
    %cst_56 = arith.constant 0.000000e+00 : f32
    %166 = vector.broadcast %cst_56 : f32 to vector<32x112xf32>
    %c0_57 = arith.constant 0 : index
    %c368 = arith.constant 368 : index
    %167 = vector.load %arg11[%c0_57, %c368] : memref<32x480xf32, #tpu.memory_space<vmem>>, vector<32x112xf32>
    tpu.vector_store %arg11[%c0_57, %c368], %166 {strides = array<i32>} : memref<32x480xf32, #tpu.memory_space<vmem>>, vector<32x112xf32>,
    %c0_58 = arith.constant 0 : index
    %c112 = arith.constant 112 : index
    %168 = vector.load %arg11[%c0_58, %c112] : memref<32x480xf32, #tpu.memory_space<vmem>>, vector<32x256xf32>
    tpu.vector_store %arg11[%c0_58, %c112], %163 {strides = array<i32>} : memref<32x480xf32, #tpu.memory_space<vmem>>, vector<32x256xf32>,
    %c0_59 = arith.constant 0 : index
    %c0_60 = arith.constant 0 : index
    %169 = vector.load %arg7[%c0_59, %c0_60] : memref<32x25xf32, #tpu.memory_space<vmem>>, vector<32x25xf32>
    %cst_61 = arith.constant 0.000000e+00 : f32
    %170 = vector.broadcast %cst_61 : f32 to vector<32x256xf32>
    %cst_62 = arith.constant 0.000000e+00 : f32
    %171 = vector.broadcast %cst_62 : f32 to vector<32x256xf32>
    %172 = vector.extract_strided_slice %169 {offsets = [0, 0], sizes = [32, 1], strides = [1, 1]} : vector<32x25xf32> to vector<32x1xf32>
    %c0_63 = arith.constant 0 : index
    %c10 = arith.constant 10 : index
    %173 = vector.load %arg11[%c0_63, %c10] : memref<32x480xf32, #tpu.memory_space<vmem>>, vector<32x256xf32>
    %174 = vector.broadcast %172 : vector<32x1xf32> to vector<32x256xf32>
    %175 = arith.mulf %173, %174 : vector<32x256xf32>
    %176 = arith.addf %171, %175 : vector<32x256xf32>
    %177 = vector.extract_strided_slice %169 {offsets = [0, 5], sizes = [32, 1], strides = [1, 1]} : vector<32x25xf32> to vector<32x1xf32>
    %c0_64 = arith.constant 0 : index
    %c58 = arith.constant 58 : index
    %178 = vector.load %arg11[%c0_64, %c58] : memref<32x480xf32, #tpu.memory_space<vmem>>, vector<32x256xf32>
    %179 = vector.broadcast %177 : vector<32x1xf32> to vector<32x256xf32>
    %180 = arith.mulf %178, %179 : vector<32x256xf32>
    %181 = arith.addf %176, %180 : vector<32x256xf32>
    %182 = vector.extract_strided_slice %169 {offsets = [0, 10], sizes = [32, 1], strides = [1, 1]} : vector<32x25xf32> to vector<32x1xf32>
    %c0_65 = arith.constant 0 : index
    %c106 = arith.constant 106 : index
    %183 = vector.load %arg11[%c0_65, %c106] : memref<32x480xf32, #tpu.memory_space<vmem>>, vector<32x256xf32>
    %184 = vector.broadcast %182 : vector<32x1xf32> to vector<32x256xf32>
    %185 = arith.mulf %183, %184 : vector<32x256xf32>
    %186 = arith.addf %181, %185 : vector<32x256xf32>
    %187 = vector.extract_strided_slice %169 {offsets = [0, 15], sizes = [32, 1], strides = [1, 1]} : vector<32x25xf32> to vector<32x1xf32>
    %c0_66 = arith.constant 0 : index
    %c154 = arith.constant 154 : index
    %188 = vector.load %arg11[%c0_66, %c154] : memref<32x480xf32, #tpu.memory_space<vmem>>, vector<32x256xf32>
    %189 = vector.broadcast %187 : vector<32x1xf32> to vector<32x256xf32>
    %190 = arith.mulf %188, %189 : vector<32x256xf32>
    %191 = arith.addf %186, %190 : vector<32x256xf32>
    %192 = vector.extract_strided_slice %169 {offsets = [0, 20], sizes = [32, 1], strides = [1, 1]} : vector<32x25xf32> to vector<32x1xf32>
    %c0_67 = arith.constant 0 : index
    %c202 = arith.constant 202 : index
    %193 = vector.load %arg11[%c0_67, %c202] : memref<32x480xf32, #tpu.memory_space<vmem>>, vector<32x256xf32>
    %194 = vector.broadcast %192 : vector<32x1xf32> to vector<32x256xf32>
    %195 = arith.mulf %193, %194 : vector<32x256xf32>
    %196 = arith.addf %191, %195 : vector<32x256xf32>
    %c5 = arith.constant 5 : index
    %c0_68 = arith.constant 0 : index
    %197 = vector.load %arg2[%c5, %c0_68] : memref<10x256xf32, #tpu.memory_space<vmem>>, vector<1x256xf32>
    %198 = vector.broadcast %197 : vector<1x256xf32> to vector<32x256xf32>
    %199 = arith.mulf %196, %198 : vector<32x256xf32>
    %200 = arith.addf %170, %199 : vector<32x256xf32>
    %cst_69 = arith.constant 0.000000e+00 : f32
    %201 = vector.broadcast %cst_69 : f32 to vector<32x256xf32>
    %202 = vector.extract_strided_slice %169 {offsets = [0, 1], sizes = [32, 1], strides = [1, 1]} : vector<32x25xf32> to vector<32x1xf32>
    %c0_70 = arith.constant 0 : index
    %c13 = arith.constant 13 : index
    %203 = vector.load %arg11[%c0_70, %c13] : memref<32x480xf32, #tpu.memory_space<vmem>>, vector<32x256xf32>
    %204 = vector.broadcast %202 : vector<32x1xf32> to vector<32x256xf32>
    %205 = arith.mulf %203, %204 : vector<32x256xf32>
    %206 = arith.addf %201, %205 : vector<32x256xf32>
    %207 = vector.extract_strided_slice %169 {offsets = [0, 6], sizes = [32, 1], strides = [1, 1]} : vector<32x25xf32> to vector<32x1xf32>
    %c0_71 = arith.constant 0 : index
    %c61 = arith.constant 61 : index
    %208 = vector.load %arg11[%c0_71, %c61] : memref<32x480xf32, #tpu.memory_space<vmem>>, vector<32x256xf32>
    %209 = vector.broadcast %207 : vector<32x1xf32> to vector<32x256xf32>
    %210 = arith.mulf %208, %209 : vector<32x256xf32>
    %211 = arith.addf %206, %210 : vector<32x256xf32>
    %212 = vector.extract_strided_slice %169 {offsets = [0, 11], sizes = [32, 1], strides = [1, 1]} : vector<32x25xf32> to vector<32x1xf32>
    %c0_72 = arith.constant 0 : index
    %c109 = arith.constant 109 : index
    %213 = vector.load %arg11[%c0_72, %c109] : memref<32x480xf32, #tpu.memory_space<vmem>>, vector<32x256xf32>
    %214 = vector.broadcast %212 : vector<32x1xf32> to vector<32x256xf32>
    %215 = arith.mulf %213, %214 : vector<32x256xf32>
    %216 = arith.addf %211, %215 : vector<32x256xf32>
    %217 = vector.extract_strided_slice %169 {offsets = [0, 16], sizes = [32, 1], strides = [1, 1]} : vector<32x25xf32> to vector<32x1xf32>
    %c0_73 = arith.constant 0 : index
    %c157 = arith.constant 157 : index
    %218 = vector.load %arg11[%c0_73, %c157] : memref<32x480xf32, #tpu.memory_space<vmem>>, vector<32x256xf32>
    %219 = vector.broadcast %217 : vector<32x1xf32> to vector<32x256xf32>
    %220 = arith.mulf %218, %219 : vector<32x256xf32>
    %221 = arith.addf %216, %220 : vector<32x256xf32>
    %222 = vector.extract_strided_slice %169 {offsets = [0, 21], sizes = [32, 1], strides = [1, 1]} : vector<32x25xf32> to vector<32x1xf32>
    %c0_74 = arith.constant 0 : index
    %c205 = arith.constant 205 : index
    %223 = vector.load %arg11[%c0_74, %c205] : memref<32x480xf32, #tpu.memory_space<vmem>>, vector<32x256xf32>
    %224 = vector.broadcast %222 : vector<32x1xf32> to vector<32x256xf32>
    %225 = arith.mulf %223, %224 : vector<32x256xf32>
    %226 = arith.addf %221, %225 : vector<32x256xf32>
    %c6 = arith.constant 6 : index
    %c0_75 = arith.constant 0 : index
    %227 = vector.load %arg2[%c6, %c0_75] : memref<10x256xf32, #tpu.memory_space<vmem>>, vector<1x256xf32>
    %228 = vector.broadcast %227 : vector<1x256xf32> to vector<32x256xf32>
    %229 = arith.mulf %226, %228 : vector<32x256xf32>
    %230 = arith.addf %200, %229 : vector<32x256xf32>
    %cst_76 = arith.constant 0.000000e+00 : f32
    %231 = vector.broadcast %cst_76 : f32 to vector<32x256xf32>
    %232 = vector.extract_strided_slice %169 {offsets = [0, 2], sizes = [32, 1], strides = [1, 1]} : vector<32x25xf32> to vector<32x1xf32>
    %c0_77 = arith.constant 0 : index
    %c16_78 = arith.constant 16 : index
    %233 = vector.load %arg11[%c0_77, %c16_78] : memref<32x480xf32, #tpu.memory_space<vmem>>, vector<32x256xf32>
    %234 = vector.broadcast %232 : vector<32x1xf32> to vector<32x256xf32>
    %235 = arith.mulf %233, %234 : vector<32x256xf32>
    %236 = arith.addf %231, %235 : vector<32x256xf32>
    %237 = vector.extract_strided_slice %169 {offsets = [0, 7], sizes = [32, 1], strides = [1, 1]} : vector<32x25xf32> to vector<32x1xf32>
    %c0_79 = arith.constant 0 : index
    %c64_80 = arith.constant 64 : index
    %238 = vector.load %arg11[%c0_79, %c64_80] : memref<32x480xf32, #tpu.memory_space<vmem>>, vector<32x256xf32>
    %239 = vector.broadcast %237 : vector<32x1xf32> to vector<32x256xf32>
    %240 = arith.mulf %238, %239 : vector<32x256xf32>
    %241 = arith.addf %236, %240 : vector<32x256xf32>
    %242 = vector.extract_strided_slice %169 {offsets = [0, 12], sizes = [32, 1], strides = [1, 1]} : vector<32x25xf32> to vector<32x1xf32>
    %c0_81 = arith.constant 0 : index
    %c112_82 = arith.constant 112 : index
    %243 = vector.load %arg11[%c0_81, %c112_82] : memref<32x480xf32, #tpu.memory_space<vmem>>, vector<32x256xf32>
    %244 = vector.broadcast %242 : vector<32x1xf32> to vector<32x256xf32>
    %245 = arith.mulf %243, %244 : vector<32x256xf32>
    %246 = arith.addf %241, %245 : vector<32x256xf32>
    %247 = vector.extract_strided_slice %169 {offsets = [0, 17], sizes = [32, 1], strides = [1, 1]} : vector<32x25xf32> to vector<32x1xf32>
    %c0_83 = arith.constant 0 : index
    %c160 = arith.constant 160 : index
    %248 = vector.load %arg11[%c0_83, %c160] : memref<32x480xf32, #tpu.memory_space<vmem>>, vector<32x256xf32>
    %249 = vector.broadcast %247 : vector<32x1xf32> to vector<32x256xf32>
    %250 = arith.mulf %248, %249 : vector<32x256xf32>
    %251 = arith.addf %246, %250 : vector<32x256xf32>
    %252 = vector.extract_strided_slice %169 {offsets = [0, 22], sizes = [32, 1], strides = [1, 1]} : vector<32x25xf32> to vector<32x1xf32>
    %c0_84 = arith.constant 0 : index
    %c208 = arith.constant 208 : index
    %253 = vector.load %arg11[%c0_84, %c208] : memref<32x480xf32, #tpu.memory_space<vmem>>, vector<32x256xf32>
    %254 = vector.broadcast %252 : vector<32x1xf32> to vector<32x256xf32>
    %255 = arith.mulf %253, %254 : vector<32x256xf32>
    %256 = arith.addf %251, %255 : vector<32x256xf32>
    %257 = arith.addf %230, %256 : vector<32x256xf32>
    %cst_85 = arith.constant 0.000000e+00 : f32
    %258 = vector.broadcast %cst_85 : f32 to vector<32x256xf32>
    %259 = vector.extract_strided_slice %169 {offsets = [0, 3], sizes = [32, 1], strides = [1, 1]} : vector<32x25xf32> to vector<32x1xf32>
    %c0_86 = arith.constant 0 : index
    %c19 = arith.constant 19 : index
    %260 = vector.load %arg11[%c0_86, %c19] : memref<32x480xf32, #tpu.memory_space<vmem>>, vector<32x256xf32>
    %261 = vector.broadcast %259 : vector<32x1xf32> to vector<32x256xf32>
    %262 = arith.mulf %260, %261 : vector<32x256xf32>
    %263 = arith.addf %258, %262 : vector<32x256xf32>
    %264 = vector.extract_strided_slice %169 {offsets = [0, 8], sizes = [32, 1], strides = [1, 1]} : vector<32x25xf32> to vector<32x1xf32>
    %c0_87 = arith.constant 0 : index
    %c67 = arith.constant 67 : index
    %265 = vector.load %arg11[%c0_87, %c67] : memref<32x480xf32, #tpu.memory_space<vmem>>, vector<32x256xf32>
    %266 = vector.broadcast %264 : vector<32x1xf32> to vector<32x256xf32>
    %267 = arith.mulf %265, %266 : vector<32x256xf32>
    %268 = arith.addf %263, %267 : vector<32x256xf32>
    %269 = vector.extract_strided_slice %169 {offsets = [0, 13], sizes = [32, 1], strides = [1, 1]} : vector<32x25xf32> to vector<32x1xf32>
    %c0_88 = arith.constant 0 : index
    %c115 = arith.constant 115 : index
    %270 = vector.load %arg11[%c0_88, %c115] : memref<32x480xf32, #tpu.memory_space<vmem>>, vector<32x256xf32>
    %271 = vector.broadcast %269 : vector<32x1xf32> to vector<32x256xf32>
    %272 = arith.mulf %270, %271 : vector<32x256xf32>
    %273 = arith.addf %268, %272 : vector<32x256xf32>
    %274 = vector.extract_strided_slice %169 {offsets = [0, 18], sizes = [32, 1], strides = [1, 1]} : vector<32x25xf32> to vector<32x1xf32>
    %c0_89 = arith.constant 0 : index
    %c163 = arith.constant 163 : index
    %275 = vector.load %arg11[%c0_89, %c163] : memref<32x480xf32, #tpu.memory_space<vmem>>, vector<32x256xf32>
    %276 = vector.broadcast %274 : vector<32x1xf32> to vector<32x256xf32>
    %277 = arith.mulf %275, %276 : vector<32x256xf32>
    %278 = arith.addf %273, %277 : vector<32x256xf32>
    %279 = vector.extract_strided_slice %169 {offsets = [0, 23], sizes = [32, 1], strides = [1, 1]} : vector<32x25xf32> to vector<32x1xf32>
    %c0_90 = arith.constant 0 : index
    %c211 = arith.constant 211 : index
    %280 = vector.load %arg11[%c0_90, %c211] : memref<32x480xf32, #tpu.memory_space<vmem>>, vector<32x256xf32>
    %281 = vector.broadcast %279 : vector<32x1xf32> to vector<32x256xf32>
    %282 = arith.mulf %280, %281 : vector<32x256xf32>
    %283 = arith.addf %278, %282 : vector<32x256xf32>
    %c8 = arith.constant 8 : index
    %c0_91 = arith.constant 0 : index
    %284 = vector.load %arg2[%c8, %c0_91] : memref<10x256xf32, #tpu.memory_space<vmem>>, vector<1x256xf32>
    %285 = vector.broadcast %284 : vector<1x256xf32> to vector<32x256xf32>
    %286 = arith.mulf %283, %285 : vector<32x256xf32>
    %287 = arith.addf %257, %286 : vector<32x256xf32>
    %cst_92 = arith.constant 0.000000e+00 : f32
    %288 = vector.broadcast %cst_92 : f32 to vector<32x256xf32>
    %289 = vector.extract_strided_slice %169 {offsets = [0, 4], sizes = [32, 1], strides = [1, 1]} : vector<32x25xf32> to vector<32x1xf32>
    %c0_93 = arith.constant 0 : index
    %c22 = arith.constant 22 : index
    %290 = vector.load %arg11[%c0_93, %c22] : memref<32x480xf32, #tpu.memory_space<vmem>>, vector<32x256xf32>
    %291 = vector.broadcast %289 : vector<32x1xf32> to vector<32x256xf32>
    %292 = arith.mulf %290, %291 : vector<32x256xf32>
    %293 = arith.addf %288, %292 : vector<32x256xf32>
    %294 = vector.extract_strided_slice %169 {offsets = [0, 9], sizes = [32, 1], strides = [1, 1]} : vector<32x25xf32> to vector<32x1xf32>
    %c0_94 = arith.constant 0 : index
    %c70 = arith.constant 70 : index
    %295 = vector.load %arg11[%c0_94, %c70] : memref<32x480xf32, #tpu.memory_space<vmem>>, vector<32x256xf32>
    %296 = vector.broadcast %294 : vector<32x1xf32> to vector<32x256xf32>
    %297 = arith.mulf %295, %296 : vector<32x256xf32>
    %298 = arith.addf %293, %297 : vector<32x256xf32>
    %299 = vector.extract_strided_slice %169 {offsets = [0, 14], sizes = [32, 1], strides = [1, 1]} : vector<32x25xf32> to vector<32x1xf32>
    %c0_95 = arith.constant 0 : index
    %c118 = arith.constant 118 : index
    %300 = vector.load %arg11[%c0_95, %c118] : memref<32x480xf32, #tpu.memory_space<vmem>>, vector<32x256xf32>
    %301 = vector.broadcast %299 : vector<32x1xf32> to vector<32x256xf32>
    %302 = arith.mulf %300, %301 : vector<32x256xf32>
    %303 = arith.addf %298, %302 : vector<32x256xf32>
    %304 = vector.extract_strided_slice %169 {offsets = [0, 19], sizes = [32, 1], strides = [1, 1]} : vector<32x25xf32> to vector<32x1xf32>
    %c0_96 = arith.constant 0 : index
    %c166 = arith.constant 166 : index
    %305 = vector.load %arg11[%c0_96, %c166] : memref<32x480xf32, #tpu.memory_space<vmem>>, vector<32x256xf32>
    %306 = vector.broadcast %304 : vector<32x1xf32> to vector<32x256xf32>
    %307 = arith.mulf %305, %306 : vector<32x256xf32>
    %308 = arith.addf %303, %307 : vector<32x256xf32>
    %309 = vector.extract_strided_slice %169 {offsets = [0, 24], sizes = [32, 1], strides = [1, 1]} : vector<32x25xf32> to vector<32x1xf32>
    %c0_97 = arith.constant 0 : index
    %c214 = arith.constant 214 : index
    %310 = vector.load %arg11[%c0_97, %c214] : memref<32x480xf32, #tpu.memory_space<vmem>>, vector<32x256xf32>
    %311 = vector.broadcast %309 : vector<32x1xf32> to vector<32x256xf32>
    %312 = arith.mulf %310, %311 : vector<32x256xf32>
    %313 = arith.addf %308, %312 : vector<32x256xf32>
    %c9 = arith.constant 9 : index
    %c0_98 = arith.constant 0 : index
    %314 = vector.load %arg2[%c9, %c0_98] : memref<10x256xf32, #tpu.memory_space<vmem>>, vector<1x256xf32>
    %315 = vector.broadcast %314 : vector<1x256xf32> to vector<32x256xf32>
    %316 = arith.mulf %313, %315 : vector<32x256xf32>
    %317 = arith.addf %287, %316 : vector<32x256xf32>
    %c0_99 = arith.constant 0 : index
    %c0_100 = arith.constant 0 : index
    %318 = vector.load %arg8[%c0_99, %c0_100] : memref<32x1xf32, #tpu.memory_space<vmem>>, vector<32x1xf32>
    %319 = vector.broadcast %318 : vector<32x1xf32> to vector<32x256xf32>
    %320 = arith.addf %317, %319 : vector<32x256xf32>
    %321 = arith.mulf %1, %320 : vector<32x256xf32>
    %c0_101 = arith.constant 0 : index
    %c0_102 = arith.constant 0 : index
    %c0_103 = arith.constant 0 : index
    %322 = vector.load %arg9[%c0_101, %c0_102, %c0_103] : memref<1x32x256xf32, #tpu.memory_space<vmem>>, vector<1x32x256xf32>
    %323 = vector.shape_cast %322 : vector<1x32x256xf32> to vector<32x256xf32>
    %324 = vector.shape_cast %321 : vector<32x256xf32> to vector<1x32x256xf32>
    tpu.vector_store %arg9[%c0_101, %c0_102, %c0_103], %324 {strides = array<i32>} : memref<1x32x256xf32, #tpu.memory_space<vmem>>, vector<1x32x256xf32>,
    return
  }
  func.func @transform_0(%arg0: i32) -> (i32, i32, i32) {
    %c0_i32 = arith.constant 0 : i32
    %c0_i32_0 = arith.constant 0 : i32
    %c0_i32_1 = arith.constant 0 : i32
    return %arg0, %c0_i32, %c0_i32_0 : i32, i32, i32
  }
  func.func @transform_1(%arg0: i32) -> (i32, i32) {
    %c0_i32 = arith.constant 0 : i32
    %c0_i32_0 = arith.constant 0 : i32
    %c0_i32_1 = arith.constant 0 : i32
    return %c0_i32, %c0_i32_0 : i32, i32
  }
  func.func @transform_2(%arg0: i32) -> (i32, i32) {
    %c0_i32 = arith.constant 0 : i32
    %c0_i32_0 = arith.constant 0 : i32
    %c0_i32_1 = arith.constant 0 : i32
    return %c0_i32, %c0_i32_0 : i32, i32
  }
  func.func @transform_3(%arg0: i32) -> (i32, i32) {
    %c0_i32 = arith.constant 0 : i32
    %c0_i32_0 = arith.constant 0 : i32
    %c0_i32_1 = arith.constant 0 : i32
    return %c0_i32, %c0_i32_0 : i32, i32
  }
  func.func @transform_4(%arg0: i32) -> (i32, i32) {
    %c0_i32 = arith.constant 0 : i32
    %c0_i32_0 = arith.constant 0 : i32
    %c0_i32_1 = arith.constant 0 : i32
    return %c0_i32, %c0_i32_0 : i32, i32
  }
  func.func @transform_5(%arg0: i32) -> (i32, i32) {
    %c0_i32 = arith.constant 0 : i32
    %c0_i32_0 = arith.constant 0 : i32
    %c0_i32_1 = arith.constant 0 : i32
    return %c0_i32, %c0_i32_0 : i32, i32
  }
  func.func @transform_6(%arg0: i32) -> (i32, i32) {
    %c0_i32 = arith.constant 0 : i32
    %c0_i32_0 = arith.constant 0 : i32
    %c0_i32_1 = arith.constant 0 : i32
    return %c0_i32, %c0_i32_0 : i32, i32
  }
  func.func @transform_7(%arg0: i32) -> (i32, i32) {
    %c0_i32 = arith.constant 0 : i32
    %c0_i32_0 = arith.constant 0 : i32
    %c0_i32_1 = arith.constant 0 : i32
    return %c0_i32, %c0_i32_0 : i32, i32
  }
  func.func @transform_8(%arg0: i32) -> (i32, i32, i32) {
    %c0_i32 = arith.constant 0 : i32
    %c0_i32_0 = arith.constant 0 : i32
    %c0_i32_1 = arith.constant 0 : i32
    return %arg0, %c0_i32, %c0_i32_0 : i32, i32, i32
  }
}

</mosaic_0001>

<llo_original>
// kernel: attention_forward.1
$region0: #{attention_forward.1}
  #allocation0 [shape = 'u32[]', space=smem, size = 0x4, offset = 0x4, fixed_abs, tag = 'smem constant byte address 0x4 - core index']
  #allocation1 [shape = 'u32[144,128]{1,0:T(1,128)}', space=vmem, size = 0x12000, scoped, tag = 'internal scratch']
  #allocation2 [shape = 'f32[32,352]{1,0:T(8,128)}', space=vmem, size = 0xc000, scoped, tag = 'scratch operand']
  #allocation3 [shape = 'f32[32,480]{1,0:T(8,128)}', space=vmem, size = 0x10000, scoped, tag = 'scratch operand']
  %s0 = inlined_call_operand.vmem [shape: f32[2,32,256], index: 0, kind: input, shape index: {}]
  %s1 = inlined_call_operand.vmem [shape: f32[10,256], index: 1, kind: input, shape index: {}]
  %s2 = inlined_call_operand.vmem [shape: f32[32,32], index: 2, kind: input, shape index: {}]
  %s3 = inlined_call_operand.vmem [shape: f32[32,1], index: 3, kind: input, shape index: {}]
  %s4 = inlined_call_operand.vmem [shape: f32[32,25], index: 4, kind: input, shape index: {}]
  %s5 = inlined_call_operand.vmem [shape: f32[32,1], index: 5, kind: input, shape index: {}]
  %s6 = inlined_call_operand.vmem [shape: f32[32,25], index: 6, kind: input, shape index: {}]
  %s7 = inlined_call_operand.vmem [shape: f32[32,1], index: 7, kind: input, shape index: {}]
  %s8 = inlined_call_operand.vmem [shape: f32[2,32,256], index: 8, kind: output, shape index: {}]
  %s9 = sld [smem:[#allocation0]]
  $region65: #{attention_forward.1} parent=0
    _
  %s11 = ssub.s32 1, %s9
  %s12 = scalar_select 0, %s11, %s9
  loop: start=0, step=1, limit=4
  $region2: #{attention_forward.1} parent=0 // loop_pre_header
    _
  $region3: #{attention_forward.1} parent=0 // loop_header
    %s14 = sphi 0, %s18
    %p15 = scmp.ge.s32.totalorder %s14, 4
    %s24 = sphi 0, %s26
    %s27 = sphi 0, %s24
    %s28 = sphi 0, %s27
    %s44 = sphi 0, %s28
    %s48 = sphi 0, %s48
    %s50 = sphi 0, %s48
    %s51 = sphi 0, %s50
    %s65 = sphi 0, %s51
    %s69 = sphi 0, %s69
    %s71 = sphi 0, %s69
    %s72 = sphi 0, %s71
    %s86 = sphi 0, %s72
    %s90 = sphi 0, %s90
    %s92 = sphi 0, %s90
    %s93 = sphi 0, %s92
    %s107 = sphi 0, %s93
    %s111 = sphi 0, %s111
    %s113 = sphi 0, %s111
    %s114 = sphi 0, %s113
    %s128 = sphi 0, %s114
    %s132 = sphi 0, %s132
    %s134 = sphi 0, %s132
    %s135 = sphi 0, %s134
    %s149 = sphi 0, %s135
    %s153 = sphi 0, %s153
    %s155 = sphi 0, %s153
    %s156 = sphi 0, %s155
    %s170 = sphi 0, %s156
    %s174 = sphi 0, %s174
    %s176 = sphi 0, %s174
    %s177 = sphi 0, %s176
    %s191 = sphi 0, %s177
    %s197 = sphi 0, %s199
    %s200 = sphi 0, %s197
    %s201 = sphi 0, %s200
    %s217 = sphi 0, %s201
  $region4: #{attention_forward.1} parent=0 // loop_header_branch
    %17 = sbr.rel (%p15) target = $region8
  $region5: #{attention_forward.1} parent=0 // loop_body
    %s19 = ssub.s32 %s14, 1
    %s20 = ssub.s32 %s14, 2
    %s21 = sadd.s32 %s14, 1
    %s22 = ssub.s32 %s14, %s21
    %p23 = scmp.eq.s32.totalorder %s22, 0
    %s25 = sadd.s32 %s24, 1
    %s26 = scalar_select %p23, %s24, %s25
    %p29 = pneg %p23
    %p30 = scmp.eq.s32.totalorder %s14, 1
    %p31 = por %p29, %p30
    %p32 = scmp.ne.s32.totalorder %s24, %s27
    %p33 = scmp.eq.s32.totalorder %s14, 0
    %p34 = por %p32, %p33
    %p35 = scmp.ne.s32.totalorder %s24, %s27
    %p36 = scmp.eq.s32.totalorder %s19, 1
    %p37 = por %p35, %p36
    %p38 = scmp.ne.s32.totalorder %s27, %s28
    %p39 = scmp.eq.s32.totalorder %s19, 0
    %p40 = por %p38, %p39
    %p41 = scmp.ne.s32.totalorder %s27, %s28
    %p42 = scmp.eq.s32.totalorder %s20, 1
    %p43 = por %p41, %p42
    %p45 = scmp.ne.s32.totalorder %s28, %s44
    %p46 = scmp.eq.s32.totalorder %s20, 0
    %p47 = por %p45, %p46
    %s49 = sadd.s32 %s48, 1
    %p52 = scmp.eq.s32.totalorder %s14, 1
    %p53 = scmp.ne.s32.totalorder %s48, %s50
    %p54 = scmp.eq.s32.totalorder %s14, 0
    %p55 = por %p53, %p54
    %p56 = scmp.ne.s32.totalorder %s48, %s50
    %p57 = scmp.eq.s32.totalorder %s19, 1
    %p58 = por %p56, %p57
    %p59 = scmp.ne.s32.totalorder %s50, %s51
    %p60 = scmp.eq.s32.totalorder %s19, 0
    %p61 = por %p59, %p60
    %p62 = scmp.ne.s32.totalorder %s50, %s51
    %p63 = scmp.eq.s32.totalorder %s20, 1
    %p64 = por %p62, %p63
    %p66 = scmp.ne.s32.totalorder %s51, %s65
    %p67 = scmp.eq.s32.totalorder %s20, 0
    %p68 = por %p66, %p67
    %s70 = sadd.s32 %s69, 1
    %p73 = scmp.eq.s32.totalorder %s14, 1
    %p74 = scmp.ne.s32.totalorder %s69, %s71
    %p75 = scmp.eq.s32.totalorder %s14, 0
    %p76 = por %p74, %p75
    %p77 = scmp.ne.s32.totalorder %s69, %s71
    %p78 = scmp.eq.s32.totalorder %s19, 1
    %p79 = por %p77, %p78
    %p80 = scmp.ne.s32.totalorder %s71, %s72
    %p81 = scmp.eq.s32.totalorder %s19, 0
    %p82 = por %p80, %p81
    %p83 = scmp.ne.s32.totalorder %s71, %s72
    %p84 = scmp.eq.s32.totalorder %s20, 1
    %p85 = por %p83, %p84
    %p87 = scmp.ne.s32.totalorder %s72, %s86
    %p88 = scmp.eq.s32.totalorder %s20, 0
    %p89 = por %p87, %p88
    %s91 = sadd.s32 %s90, 1
    %p94 = scmp.eq.s32.totalorder %s14, 1
    %p95 = scmp.ne.s32.totalorder %s90, %s92
    %p96 = scmp.eq.s32.totalorder %s14, 0
    %p97 = por %p95, %p96
    %p98 = scmp.ne.s32.totalorder %s90, %s92
    %p99 = scmp.eq.s32.totalorder %s19, 1
    %p100 = por %p98, %p99
    %p101 = scmp.ne.s32.totalorder %s92, %s93
    %p102 = scmp.eq.s32.totalorder %s19, 0
    %p103 = por %p101, %p102
    %p104 = scmp.ne.s32.totalorder %s92, %s93
    %p105 = scmp.eq.s32.totalorder %s20, 1
    %p106 = por %p104, %p105
    %p108 = scmp.ne.s32.totalorder %s93, %s107
    %p109 = scmp.eq.s32.totalorder %s20, 0
    %p110 = por %p108, %p109
    %s112 = sadd.s32 %s111, 1
    %p115 = scmp.eq.s32.totalorder %s14, 1
    %p116 = scmp.ne.s32.totalorder %s111, %s113
    %p117 = scmp.eq.s32.totalorder %s14, 0
    %p118 = por %p116, %p117
    %p119 = scmp.ne.s32.totalorder %s111, %s113
    %p120 = scmp.eq.s32.totalorder %s19, 1
    %p121 = por %p119, %p120
    %p122 = scmp.ne.s32.totalorder %s113, %s114
    %p123 = scmp.eq.s32.totalorder %s19, 0
    %p124 = por %p122, %p123
    %p125 = scmp.ne.s32.totalorder %s113, %s114
    %p126 = scmp.eq.s32.totalorder %s20, 1
    %p127 = por %p125, %p126
    %p129 = scmp.ne.s32.totalorder %s114, %s128
    %p130 = scmp.eq.s32.totalorder %s20, 0
    %p131 = por %p129, %p130
    %s133 = sadd.s32 %s132, 1
    %p136 = scmp.eq.s32.totalorder %s14, 1
    %p137 = scmp.ne.s32.totalorder %s132, %s134
    %p138 = scmp.eq.s32.totalorder %s14, 0
    %p139 = por %p137, %p138
    %p140 = scmp.ne.s32.totalorder %s132, %s134
    %p141 = scmp.eq.s32.totalorder %s19, 1
    %p142 = por %p140, %p141
    %p143 = scmp.ne.s32.totalorder %s134, %s135
    %p144 = scmp.eq.s32.totalorder %s19, 0
    %p145 = por %p143, %p144
    %p146 = scmp.ne.s32.totalorder %s134, %s135
    %p147 = scmp.eq.s32.totalorder %s20, 1
    %p148 = por %p146, %p147
    %p150 = scmp.ne.s32.totalorder %s135, %s149
    %p151 = scmp.eq.s32.totalorder %s20, 0
    %p152 = por %p150, %p151
    %s154 = sadd.s32 %s153, 1
    %p157 = scmp.eq.s32.totalorder %s14, 1
    %p158 = scmp.ne.s32.totalorder %s153, %s155
    %p159 = scmp.eq.s32.totalorder %s14, 0
    %p160 = por %p158, %p159
    %p161 = scmp.ne.s32.totalorder %s153, %s155
    %p162 = scmp.eq.s32.totalorder %s19, 1
    %p163 = por %p161, %p162
    %p164 = scmp.ne.s32.totalorder %s155, %s156
    %p165 = scmp.eq.s32.totalorder %s19, 0
    %p166 = por %p164, %p165
    %p167 = scmp.ne.s32.totalorder %s155, %s156
    %p168 = scmp.eq.s32.totalorder %s20, 1
    %p169 = por %p167, %p168
    %p171 = scmp.ne.s32.totalorder %s156, %s170
    %p172 = scmp.eq.s32.totalorder %s20, 0
    %p173 = por %p171, %p172
    %s175 = sadd.s32 %s174, 1
    %p178 = scmp.eq.s32.totalorder %s14, 1
    %p179 = scmp.ne.s32.totalorder %s174, %s176
    %p180 = scmp.eq.s32.totalorder %s14, 0
    %p181 = por %p179, %p180
    %p182 = scmp.ne.s32.totalorder %s174, %s176
    %p183 = scmp.eq.s32.totalorder %s19, 1
    %p184 = por %p182, %p183
    %p185 = scmp.ne.s32.totalorder %s176, %s177
    %p186 = scmp.eq.s32.totalorder %s19, 0
    %p187 = por %p185, %p186
    %p188 = scmp.ne.s32.totalorder %s176, %s177
    %p189 = scmp.eq.s32.totalorder %s20, 1
    %p190 = por %p188, %p189
    %p192 = scmp.ne.s32.totalorder %s177, %s191
    %p193 = scmp.eq.s32.totalorder %s20, 0
    %p194 = por %p192, %p193
    %s195 = ssub.s32 %s14, %s21
    %p196 = scmp.eq.s32.totalorder %s195, 0
    %s198 = sadd.s32 %s197, 1
    %s199 = scalar_select %p196, %s197, %s198
    %p202 = pneg %p196
    %p203 = scmp.eq.s32.totalorder %s14, 1
    %p204 = por %p202, %p203
    %p205 = scmp.ne.s32.totalorder %s197, %s200
    %p206 = scmp.eq.s32.totalorder %s14, 0
    %p207 = por %p205, %p206
    %p208 = scmp.ne.s32.totalorder %s197, %s200
    %p209 = scmp.eq.s32.totalorder %s19, 1
    %p210 = por %p208, %p209
    %p211 = scmp.ne.s32.totalorder %s200, %s201
    %p212 = scmp.eq.s32.totalorder %s19, 0
    %p213 = por %p211, %p212
    %p214 = scmp.ne.s32.totalorder %s200, %s201
    %p215 = scmp.eq.s32.totalorder %s20, 1
    %p216 = por %p214, %p215
    %p218 = scmp.ne.s32.totalorder %s201, %s217
    %p219 = scmp.eq.s32.totalorder %s20, 0
    %p220 = por %p218, %p219
    %p221 = scmp.le.s32.totalorder 1, %s14
    %p222 = scmp.lt.s32.totalorder %s14, 3
    %p223 = pnand %p221, %p222
    %p224 = pneg %p223
    // Predicated region
    $region9: #{attention_forward.1} parent=5 // pred_check
      _
    $region10: #{attention_forward.1} parent=5 // pred_check_branch
      %226 = sbr.rel (%p223) target = $region12
    $region11: #{attention_forward.1} parent=5 // pred_region
      %s227 = ssub.s32 %s14, 1
      // Predicated region
      $region13: #{attention_forward.1} parent=11 // pred_check
        %p228 = pneg %p61
      $region14: #{attention_forward.1} parent=11 // pred_check_branch
        %230 = sbr.rel (%p228) target = $region16
      $region15: #{attention_forward.1} parent=11 // pred_region
        _
      $region16: #{attention_forward.1} parent=11 // pred_fallthru
        _
      // Predicated region
      $region17: #{attention_forward.1} parent=11 // pred_check
        %p231 = pneg %p82
      $region18: #{attention_forward.1} parent=11 // pred_check_branch
        %233 = sbr.rel (%p231) target = $region20
      $region19: #{attention_forward.1} parent=11 // pred_region
        _
      $region20: #{attention_forward.1} parent=11 // pred_fallthru
        _
      // Predicated region
      $region21: #{attention_forward.1} parent=11 // pred_check
        %p234 = pneg %p103
      $region22: #{attention_forward.1} parent=11 // pred_check_branch
        %236 = sbr.rel (%p234) target = $region24
      $region23: #{attention_forward.1} parent=11 // pred_region
        _
      $region24: #{attention_forward.1} parent=11 // pred_fallthru
        _
      // Predicated region
      $region25: #{attention_forward.1} parent=11 // pred_check
        %p237 = pneg %p124
      $region26: #{attention_forward.1} parent=11 // pred_check_branch
        %239 = sbr.rel (%p237) target = $region28
      $region27: #{attention_forward.1} parent=11 // pred_region
        _
      $region28: #{attention_forward.1} parent=11 // pred_fallthru
        _
      // Predicated region
      $region29: #{attention_forward.1} parent=11 // pred_check
        %p240 = pneg %p145
      $region30: #{attention_forward.1} parent=11 // pred_check_branch
        %242 = sbr.rel (%p240) target = $region32
      $region31: #{attention_forward.1} parent=11 // pred_region
        _
      $region32: #{attention_forward.1} parent=11 // pred_fallthru
        _
      // Predicated region
      $region33: #{attention_forward.1} parent=11 // pred_check
        %p243 = pneg %p166
      $region34: #{attention_forward.1} parent=11 // pred_check_branch
        %245 = sbr.rel (%p243) target = $region36
      $region35: #{attention_forward.1} parent=11 // pred_region
        _
      $region36: #{attention_forward.1} parent=11 // pred_fallthru
        _
      // Predicated region
      $region37: #{attention_forward.1} parent=11 // pred_check
        %p246 = pneg %p187
      $region38: #{attention_forward.1} parent=11 // pred_check_branch
        %248 = sbr.rel (%p246) target = $region40
      $region39: #{attention_forward.1} parent=11 // pred_region
        _
      $region40: #{attention_forward.1} parent=11 // pred_fallthru
        _
    $region12: #{attention_forward.1} parent=5 // pred_fallthru
      _
    %p249 = scmp.lt.s32.totalorder %s14, 2
    // Predicated region
    $region41: #{attention_forward.1} parent=5 // pred_check
      %p250 = pneg %p249
    $region42: #{attention_forward.1} parent=5 // pred_check_branch
      %252 = sbr.rel (%p250) target = $region44
    $region43: #{attention_forward.1} parent=5 // pred_region
      // Predicated region
      $region45: #{attention_forward.1} parent=43 // pred_check
        %p253 = pneg %p34
      $region46: #{attention_forward.1} parent=43 // pred_check_branch
        %255 = sbr.rel (%p253) target = $region48
      $region47: #{attention_forward.1} parent=43 // pred_region
        %p256 = scmp.lt.s32.totalorder %s14, 1
        %s257 = scalar_select %p256, %s14, 1
        %s258 = smul.addr %s257, 8
        %s259 = smul.addr %s258, 8
        %s260 = scalar_lea.vmem %s0, %s259
      $region48: #{attention_forward.1} parent=43 // pred_fallthru
        _
    $region44: #{attention_forward.1} parent=5 // pred_fallthru
      _
    %p261 = scmp.le.s32.totalorder 1, %s14
    %p262 = scmp.lt.s32.totalorder %s14, 3
    %p263 = pnand %p261, %p262
    %p264 = pneg %p263
    // Predicated region
    $region49: #{attention_forward.1} parent=5 // pred_check
      _
    $region50: #{attention_forward.1} parent=5 // pred_check_branch
      %266 = sbr.rel (%p263) target = $region52
    $region51: #{attention_forward.1} parent=5 // pred_region
      %s267 = ssub.s32 %s14, 1
      %p268 = scmp.lt.s32.totalorder %s19, 1
      %s269 = scalar_select %p268, %s19, 1
      %s270 = smul.addr %s269, 8
      %s271 = smul.addr %s270, 8
      %s272 = scalar_lea.vmem %s0, %s271
      %p273 = pneg %p40
      %p274 = pneg %p37
      %p275 = pneg %p61
      %p276 = pneg %p58
      %p277 = pneg %p82
      %p278 = pneg %p79
      %p279 = pneg %p103
      %p280 = pneg %p100
      %p281 = pneg %p124
      %p282 = pneg %p121
      %p283 = pneg %p145
      %p284 = pneg %p142
      %p285 = pneg %p166
      %p286 = pneg %p163
      %p287 = pneg %p187
      %p288 = pneg %p184
      %p289 = pneg %p213
      %p290 = pneg %p210
      %p291 = scmp.lt.s32.totalorder %s19, 1
      %s292 = scalar_select %p291, %s19, 1
      %s293 = smul.addr %s292, 8
      %s294 = smul.addr %s293, 8
      %s295 = scalar_lea.vmem %s8, %s294
      %p296 = scmp.lt.s32.totalorder %s19, 1
      %s297 = scalar_select %p296, %s19, 1
      %s298 = smul.addr %s297, 8
      %s299 = smul.addr %s298, 8
      %s300 = scalar_lea.vmem %s0, %s299
      %p301 = scmp.lt.s32.totalorder %s19, 1
      %s302 = scalar_select %p301, %s19, 1
      %s303 = smul.addr %s302, 8
      %s304 = smul.addr %s303, 8
      %s305 = scalar_lea.vmem %s8, %s304
      %v306 = vld [vmem:[%s300] sm:$0xff]
      %v307 = vld [vmem:[%s300 + $0x8] sm:$0xff]
      %v308 = vld [vmem:[%s300 + $0x10] sm:$0xff]
      %v309 = vld [vmem:[%s300 + $0x18] sm:$0xff]
      %v310 = vld [vmem:[%s300 + $0x20] sm:$0xff]
      %v311 = vld [vmem:[%s300 + $0x28] sm:$0xff]
      %v312 = vld [vmem:[%s300 + $0x30] sm:$0xff]
      %v313 = vld [vmem:[%s300 + $0x38] sm:$0xff]
      %v314 = vld [vmem:[%s2] sm:$0xff]
      %v315 = vld [vmem:[%s2 + $0x8] sm:$0xff]
      %v316 = vld [vmem:[%s2 + $0x10] sm:$0xff]
      %v317 = vld [vmem:[%s2 + $0x18] sm:$0xff]
      %v318 = vld [vmem:[%s3] sm:$0xff]
      %v319 = vld [vmem:[%s3 + $0x8] sm:$0xff]
      %v320 = vld [vmem:[%s3 + $0x10] sm:$0xff]
      %v321 = vld [vmem:[%s3 + $0x18] sm:$0xff]
      %323 = vset.pattern.permute.xlu0 0
      %324 = vperm.xlu0 %323, %v318
      %v325 = vpop.permute.xlu0 %324
      %328 = vset.pattern.permute.xlu0 0
      %329 = vperm.xlu0 %328, %v319
      %v330 = vpop.permute.xlu0 %329
      %333 = vset.pattern.permute.xlu0 0
      %334 = vperm.xlu0 %333, %v320
      %v335 = vpop.permute.xlu0 %334
      %338 = vset.pattern.permute.xlu0 0
      %339 = vperm.xlu0 %338, %v321
      %v340 = vpop.permute.xlu0 %339
      %vm342 = vcmask 261120
      %v344 = vsel %vm342, %v314, 0
      %v347 = vsel %vm342, %v315, 0
      %v350 = vsel %vm342, %v316, 0
      %v353 = vsel %vm342, %v317, 0
      %355 = vmatprep.subr.mxu0 0.0
      %356 = vmatpush1.msra.mxu0 0.0
      %357 = vmatprep.subr.mxu0 0.0
      %358 = vmatpush1.msra.mxu0 0.0
      %359 = vmatprep.subr.mxu0 0.0
      %360 = vmatpush1.msra.mxu0 0.0
      %361 = vmatprep.subr.mxu0 0.0
      %362 = vmatpush1.msra.mxu0 0.0
      %363 = vmatprep.subr.mxu0 0.0
      %364 = vmatpush1.msra.mxu0 0.0
      %365 = vmatprep.subr.mxu0 0.0
      %366 = vmatpush1.msra.mxu0 0.0
      %367 = vmatprep.subr.mxu0 0.0
      %368 = vmatpush1.msra.mxu0 0.0
      %369 = vmatprep.subr.mxu0 0.0
      %370 = vmatpush1.msra.mxu0 0.0
      %371 = vmatprep.subr.mxu0 0.0
      %372 = vmatpush1.msra.mxu0 0.0
      %373 = vmatprep.subr.mxu0 0.0
      %374 = vmatpush1.msra.mxu0 0.0
      %375 = vmatprep.subr.mxu0 0.0
      %376 = vmatpush1.msra.mxu0 0.0
      %377 = vmatprep.subr.mxu0 0.0
      %378 = vmatpush1.msra.mxu0 0.0
      %379 = vmatprep.subr.mxu0 %v313
      %380 = vmatpush1.msra.mxu0 %v312
      %381 = vmatprep.subr.mxu0 %v311
      %382 = vmatpush1.msra.mxu0 %v310
      %383 = vmatprep.subr.mxu0 %v309
      %384 = vmatpush1.msra.mxu0 %v308
      %385 = vmatprep.subr.mxu0 %v307
      %386 = vmatpush1.msra.mxu0 %v306
      %387 = vmatprep.subr.mxu0 0.0
      %388 = vmatpush2.msra.mxu0 0.0
      %389 = vmatprep.subr.mxu0 0.0
      %390 = vmatpush2.msra.mxu0 0.0
      %391 = vmatprep.subr.mxu0 0.0
      %392 = vmatpush2.msra.mxu0 0.0
      %393 = vmatprep.subr.mxu0 0.0
      %394 = vmatpush2.msra.mxu0 0.0
      %395 = vmatprep.subr.mxu0 0.0
      %396 = vmatpush2.msra.mxu0 0.0
      %397 = vmatprep.subr.mxu0 0.0
      %398 = vmatpush2.msra.mxu0 0.0
      %399 = vmatprep.subr.mxu0 0.0
      %400 = vmatpush2.msra.mxu0 0.0
      %401 = vmatprep.subr.mxu0 0.0
      %402 = vmatpush2.msra.mxu0 0.0
      %403 = vmatprep.subr.mxu0 0.0
      %404 = vmatpush2.msra.mxu0 0.0
      %405 = vmatprep.subr.mxu0 0.0
      %406 = vmatpush2.msra.mxu0 0.0
      %407 = vmatprep.subr.mxu0 0.0
      %408 = vmatpush2.msra.mxu0 0.0
      %409 = vmatprep.subr.mxu0 0.0
      %410 = vmatpush2.msra.mxu0 0.0
      %411 = vmatprep.subr.mxu0 0.0
      %412 = vmatpush2.msra.mxu0 0.0
      %413 = vmatprep.subr.mxu0 0.0
      %414 = vmatpush2.msra.mxu0 0.0
      %415 = vmatprep.subr.mxu0 0.0
      %416 = vmatpush2.msra.mxu0 0.0
      %417 = vmatprep.subr.mxu0 0.0
      %418 = vmatpush2.msra.mxu0 0.0
      %419 = vmatprep.mubr.f32.mxu0 0.0
      %420 = vmatmul.mubr.f32.gmra.mxu0 %v344
      %v421 = vpop.f32.mrf.mxu0
      %v422 = vadd.f32 %v325, %v421
      %v423 = vpop.f32.mrf.mxu0
      %v424 = vadd.f32 %v325, %v423
      %425 = vmatprep.mubr.f32.mxu0 0.0
      %426 = vmatmul.mubr.f32.gmra.mxu0 %v347
      %v427 = vpop.f32.mrf.mxu0
      %v428 = vadd.f32 %v330, %v427
      %v429 = vpop.f32.mrf.mxu0
      %v430 = vadd.f32 %v330, %v429
      %431 = vmatprep.mubr.f32.mxu0 0.0
      %432 = vmatmul.mubr.f32.gmra.mxu0 %v350
      %v433 = vpop.f32.mrf.mxu0
      %v434 = vadd.f32 %v335, %v433
      %v435 = vpop.f32.mrf.mxu0
      %v436 = vadd.f32 %v335, %v435
      %437 = vmatprep.mubr.f32.mxu0 0.0
      %438 = vmatmul.mubr.f32.gmra.mxu0 %v353
      %v439 = vpop.f32.mrf.mxu0
      %v440 = vadd.f32 %v340, %v439
      %v441 = vpop.f32.mrf.mxu0
      %v442 = vadd.f32 %v340, %v441
      %443 = vdwg.mxu0
      %vm444 = vcmask 392192
      %445 = vst.msk [vmem:[#allocation2] sm:$0xff] %vm444, 0.0
      %446 = vst.msk [vmem:[#allocation2 + $0x18] sm:$0xff] %vm444, 0.0
      %447 = vst.msk [vmem:[#allocation2 + $0x30] sm:$0xff] %vm444, 0.0
      %448 = vst.msk [vmem:[#allocation2 + $0x48] sm:$0xff] %vm444, 0.0
      %vm449 = vcmask 785792
      %450 = vst.msk [vmem:[#allocation2 + $0x10] sm:$0xff] %vm449, 0.0
      %451 = vst.msk [vmem:[#allocation2 + $0x28] sm:$0xff] %vm449, 0.0
      %452 = vst.msk [vmem:[#allocation2 + $0x40] sm:$0xff] %vm449, 0.0
      %453 = vst.msk [vmem:[#allocation2 + $0x58] sm:$0xff] %vm449, 0.0
      %462 = vrot.lane.b32.xlu0 %v422, 48
      %v463 = vpop.permute.xlu0 %462
      %464 = vrot.lane.b32.xlu0 %v424, 48
      %v465 = vpop.permute.xlu0 %464
      %466 = vrot.lane.b32.xlu0 %v428, 48
      %v467 = vpop.permute.xlu0 %466
      %468 = vrot.lane.b32.xlu0 %v430, 48
      %v469 = vpop.permute.xlu0 %468
      %470 = vrot.lane.b32.xlu0 %v434, 48
      %v471 = vpop.permute.xlu0 %470
      %472 = vrot.lane.b32.xlu0 %v436, 48
      %v473 = vpop.permute.xlu0 %472
      %474 = vrot.lane.b32.xlu0 %v440, 48
      %v475 = vpop.permute.xlu0 %474
      %476 = vrot.lane.b32.xlu0 %v442, 48
      %v477 = vpop.permute.xlu0 %476
      %v478 = vsel %vm444, %v463, %v465
      %v479 = vsel %vm444, %v467, %v469
      %v480 = vsel %vm444, %v471, %v473
      %v481 = vsel %vm444, %v475, %v477
      %vm494 = vcmask 1047936
      %495 = vst.msk [vmem:[#allocation2] sm:$0xff] %vm494, %v463
      %496 = vst [vmem:[#allocation2 + $0x8] sm:$0xff] %v478
      %497 = vst.msk [vmem:[#allocation2 + $0x10] sm:$0xff] %vm444, %v465
      %498 = vst.msk [vmem:[#allocation2 + $0x18] sm:$0xff] %vm494, %v467
      %499 = vst [vmem:[#allocation2 + $0x20] sm:$0xff] %v479
      %500 = vst.msk [vmem:[#allocation2 + $0x28] sm:$0xff] %vm444, %v469
      %501 = vst.msk [vmem:[#allocation2 + $0x30] sm:$0xff] %vm494, %v471
      %502 = vst [vmem:[#allocation2 + $0x38] sm:$0xff] %v480
      %503 = vst.msk [vmem:[#allocation2 + $0x40] sm:$0xff] %vm444, %v473
      %504 = vst.msk [vmem:[#allocation2 + $0x48] sm:$0xff] %vm494, %v475
      %505 = vst [vmem:[#allocation2 + $0x50] sm:$0xff] %v481
      %506 = vst.msk [vmem:[#allocation2 + $0x58] sm:$0xff] %vm444, %v477
      %v507 = vld [vmem:[%s4] sm:$0xff]
      %v508 = vld [vmem:[%s4 + $0x8] sm:$0xff]
      %v509 = vld [vmem:[%s4 + $0x10] sm:$0xff]
      %v510 = vld [vmem:[%s4 + $0x18] sm:$0xff]
      %v511 = vld [vmem:[#allocation2] sm:$0xff]
      %v512 = vld [vmem:[#allocation2 + $0x8] sm:$0xff]
      %v513 = vld [vmem:[#allocation2 + $0x10] sm:$0xff]
      %v514 = vld [vmem:[#allocation2 + $0x18] sm:$0xff]
      %v515 = vld [vmem:[#allocation2 + $0x20] sm:$0xff]
      %v516 = vld [vmem:[#allocation2 + $0x28] sm:$0xff]
      %v517 = vld [vmem:[#allocation2 + $0x30] sm:$0xff]
      %v518 = vld [vmem:[#allocation2 + $0x38] sm:$0xff]
      %v519 = vld [vmem:[#allocation2 + $0x40] sm:$0xff]
      %v520 = vld [vmem:[#allocation2 + $0x48] sm:$0xff]
      %v521 = vld [vmem:[#allocation2 + $0x50] sm:$0xff]
      %v522 = vld [vmem:[#allocation2 + $0x58] sm:$0xff]
      %524 = vset.pattern.permute.xlu0 0
      %525 = vperm.xlu0 %524, %v507
      %v526 = vpop.permute.xlu0 %525
      %529 = vset.pattern.permute.xlu0 0
      %530 = vperm.xlu0 %529, %v508
      %v531 = vpop.permute.xlu0 %530
      %534 = vset.pattern.permute.xlu0 0
      %535 = vperm.xlu0 %534, %v509
      %v536 = vpop.permute.xlu0 %535
      %539 = vset.pattern.permute.xlu0 0
      %540 = vperm.xlu0 %539, %v510
      %v541 = vpop.permute.xlu0 %540
      %v543 = vmul.f32 %v511, %v526
      %v544 = vmul.f32 %v512, %v526
      %v545 = vmul.f32 %v513, %v526
      %v546 = vmul.f32 %v514, %v531
      %v547 = vmul.f32 %v515, %v531
      %v548 = vmul.f32 %v516, %v531
      %v549 = vmul.f32 %v517, %v536
      %v550 = vmul.f32 %v518, %v536
      %v551 = vmul.f32 %v519, %v536
      %v552 = vmul.f32 %v520, %v541
      %v553 = vmul.f32 %v521, %v541
      %v554 = vmul.f32 %v522, %v541
      %v555 = vadd.f32 %v543, 0.0
      %v556 = vadd.f32 %v544, 0.0
      %v557 = vadd.f32 %v545, 0.0
      %v558 = vadd.f32 %v546, 0.0
      %v559 = vadd.f32 %v547, 0.0
      %v560 = vadd.f32 %v548, 0.0
      %v561 = vadd.f32 %v549, 0.0
      %v562 = vadd.f32 %v550, 0.0
      %v563 = vadd.f32 %v551, 0.0
      %v564 = vadd.f32 %v552, 0.0
      %v565 = vadd.f32 %v553, 0.0
      %v566 = vadd.f32 %v554, 0.0
      %567 = vset.pattern.permute.xlu0 5
      %568 = vperm.xlu0 %567, %v507
      %v569 = vpop.permute.xlu0 %568
      %571 = vset.pattern.permute.xlu0 5
      %572 = vperm.xlu0 %571, %v508
      %v573 = vpop.permute.xlu0 %572
      %575 = vset.pattern.permute.xlu0 5
      %576 = vperm.xlu0 %575, %v509
      %v577 = vpop.permute.xlu0 %576
      %579 = vset.pattern.permute.xlu0 5
      %580 = vperm.xlu0 %579, %v510
      %v581 = vpop.permute.xlu0 %580
      %v583 = vmul.f32 %v511, %v569
      %v584 = vmul.f32 %v512, %v569
      %v585 = vmul.f32 %v513, %v569
      %v586 = vmul.f32 %v514, %v573
      %v587 = vmul.f32 %v515, %v573
      %v588 = vmul.f32 %v516, %v573
      %v589 = vmul.f32 %v517, %v577
      %v590 = vmul.f32 %v518, %v577
      %v591 = vmul.f32 %v519, %v577
      %v592 = vmul.f32 %v520, %v581
      %v593 = vmul.f32 %v521, %v581
      %v594 = vmul.f32 %v522, %v581
      %607 = vrot.lane.b32.xlu0 %v583, 112
      %v608 = vpop.permute.xlu0 %607
      %609 = vrot.lane.b32.xlu0 %v584, 112
      %v610 = vpop.permute.xlu0 %609
      %611 = vrot.lane.b32.xlu0 %v585, 112
      %v612 = vpop.permute.xlu0 %611
      %613 = vrot.lane.b32.xlu0 %v586, 112
      %v614 = vpop.permute.xlu0 %613
      %615 = vrot.lane.b32.xlu0 %v587, 112
      %v616 = vpop.permute.xlu0 %615
      %617 = vrot.lane.b32.xlu0 %v588, 112
      %v618 = vpop.permute.xlu0 %617
      %619 = vrot.lane.b32.xlu0 %v589, 112
      %v620 = vpop.permute.xlu0 %619
      %621 = vrot.lane.b32.xlu0 %v590, 112
      %v622 = vpop.permute.xlu0 %621
      %623 = vrot.lane.b32.xlu0 %v591, 112
      %v624 = vpop.permute.xlu0 %623
      %625 = vrot.lane.b32.xlu0 %v592, 112
      %v626 = vpop.permute.xlu0 %625
      %627 = vrot.lane.b32.xlu0 %v593, 112
      %v628 = vpop.permute.xlu0 %627
      %629 = vrot.lane.b32.xlu0 %v594, 112
      %v630 = vpop.permute.xlu0 %629
      %vm631 = vcmask 916480
      %v632 = vsel %vm631, %v608, %v610
      %v633 = vsel %vm631, %v610, %v612
      %v634 = vsel %vm631, %v614, %v616
      %v635 = vsel %vm631, %v616, %v618
      %v636 = vsel %vm631, %v620, %v622
      %v637 = vsel %vm631, %v622, %v624
      %v638 = vsel %vm631, %v626, %v628
      %v639 = vsel %vm631, %v628, %v630
      %v652 = vadd.f32 %v555, %v632
      %v653 = vadd.f32 %v556, %v633
      %v654 = vadd.f32 %v557, %v612
      %v655 = vadd.f32 %v558, %v634
      %v656 = vadd.f32 %v559, %v635
      %v657 = vadd.f32 %v560, %v618
      %v658 = vadd.f32 %v561, %v636
      %v659 = vadd.f32 %v562, %v637
      %v660 = vadd.f32 %v563, %v624
      %v661 = vadd.f32 %v564, %v638
      %v662 = vadd.f32 %v565, %v639
      %v663 = vadd.f32 %v566, %v630
      %664 = vset.pattern.permute.xlu0 10
      %665 = vperm.xlu0 %664, %v507
      %v666 = vpop.permute.xlu0 %665
      %668 = vset.pattern.permute.xlu0 10
      %669 = vperm.xlu0 %668, %v508
      %v670 = vpop.permute.xlu0 %669
      %672 = vset.pattern.permute.xlu0 10
      %673 = vperm.xlu0 %672, %v509
      %v674 = vpop.permute.xlu0 %673
      %676 = vset.pattern.permute.xlu0 10
      %677 = vperm.xlu0 %676, %v510
      %v678 = vpop.permute.xlu0 %677
      %v680 = vmul.f32 %v511, %v666
      %v681 = vmul.f32 %v512, %v666
      %v682 = vmul.f32 %v513, %v666
      %v683 = vmul.f32 %v514, %v670
      %v684 = vmul.f32 %v515, %v670
      %v685 = vmul.f32 %v516, %v670
      %v686 = vmul.f32 %v517, %v674
      %v687 = vmul.f32 %v518, %v674
      %v688 = vmul.f32 %v519, %v674
      %v689 = vmul.f32 %v520, %v678
      %v690 = vmul.f32 %v521, %v678
      %v691 = vmul.f32 %v522, %v678
      %704 = vrot.lane.b32.xlu0 %v680, 96
      %v705 = vpop.permute.xlu0 %704
      %706 = vrot.lane.b32.xlu0 %v681, 96
      %v707 = vpop.permute.xlu0 %706
      %708 = vrot.lane.b32.xlu0 %v682, 96
      %v709 = vpop.permute.xlu0 %708
      %710 = vrot.lane.b32.xlu0 %v683, 96
      %v711 = vpop.permute.xlu0 %710
      %712 = vrot.lane.b32.xlu0 %v684, 96
      %v713 = vpop.permute.xlu0 %712
      %714 = vrot.lane.b32.xlu0 %v685, 96
      %v715 = vpop.permute.xlu0 %714
      %716 = vrot.lane.b32.xlu0 %v686, 96
      %v717 = vpop.permute.xlu0 %716
      %718 = vrot.lane.b32.xlu0 %v687, 96
      %v719 = vpop.permute.xlu0 %718
      %720 = vrot.lane.b32.xlu0 %v688, 96
      %v721 = vpop.permute.xlu0 %720
      %722 = vrot.lane.b32.xlu0 %v689, 96
      %v723 = vpop.permute.xlu0 %722
      %724 = vrot.lane.b32.xlu0 %v690, 96
      %v725 = vpop.permute.xlu0 %724
      %726 = vrot.lane.b32.xlu0 %v691, 96
      %v727 = vpop.permute.xlu0 %726
      %vm728 = vcmask 785408
      %v729 = vsel %vm728, %v705, %v707
      %v730 = vsel %vm728, %v707, %v709
      %v731 = vsel %vm728, %v711, %v713
      %v732 = vsel %vm728, %v713, %v715
      %v733 = vsel %vm728, %v717, %v719
      %v734 = vsel %vm728, %v719, %v721
      %v735 = vsel %vm728, %v723, %v725
      %v736 = vsel %vm728, %v725, %v727
      %v749 = vadd.f32 %v652, %v729
      %v750 = vadd.f32 %v653, %v730
      %v751 = vadd.f32 %v654, %v709
      %v752 = vadd.f32 %v655, %v731
      %v753 = vadd.f32 %v656, %v732
      %v754 = vadd.f32 %v657, %v715
      %v755 = vadd.f32 %v658, %v733
      %v756 = vadd.f32 %v659, %v734
      %v757 = vadd.f32 %v660, %v721
      %v758 = vadd.f32 %v661, %v735
      %v759 = vadd.f32 %v662, %v736
      %v760 = vadd.f32 %v663, %v727
      %761 = vset.pattern.permute.xlu0 15
      %762 = vperm.xlu0 %761, %v507
      %v763 = vpop.permute.xlu0 %762
      %765 = vset.pattern.permute.xlu0 15
      %766 = vperm.xlu0 %765, %v508
      %v767 = vpop.permute.xlu0 %766
      %769 = vset.pattern.permute.xlu0 15
      %770 = vperm.xlu0 %769, %v509
      %v771 = vpop.permute.xlu0 %770
      %773 = vset.pattern.permute.xlu0 15
      %774 = vperm.xlu0 %773, %v510
      %v775 = vpop.permute.xlu0 %774
      %v777 = vmul.f32 %v511, %v763
      %v778 = vmul.f32 %v512, %v763
      %v779 = vmul.f32 %v513, %v763
      %v780 = vmul.f32 %v514, %v767
      %v781 = vmul.f32 %v515, %v767
      %v782 = vmul.f32 %v516, %v767
      %v783 = vmul.f32 %v517, %v771
      %v784 = vmul.f32 %v518, %v771
      %v785 = vmul.f32 %v519, %v771
      %v786 = vmul.f32 %v520, %v775
      %v787 = vmul.f32 %v521, %v775
      %v788 = vmul.f32 %v522, %v775
      %801 = vrot.lane.b32.xlu0 %v777, 80
      %v802 = vpop.permute.xlu0 %801
      %803 = vrot.lane.b32.xlu0 %v778, 80
      %v804 = vpop.permute.xlu0 %803
      %805 = vrot.lane.b32.xlu0 %v779, 80
      %v806 = vpop.permute.xlu0 %805
      %807 = vrot.lane.b32.xlu0 %v780, 80
      %v808 = vpop.permute.xlu0 %807
      %809 = vrot.lane.b32.xlu0 %v781, 80
      %v810 = vpop.permute.xlu0 %809
      %811 = vrot.lane.b32.xlu0 %v782, 80
      %v812 = vpop.permute.xlu0 %811
      %813 = vrot.lane.b32.xlu0 %v783, 80
      %v814 = vpop.permute.xlu0 %813
      %815 = vrot.lane.b32.xlu0 %v784, 80
      %v816 = vpop.permute.xlu0 %815
      %817 = vrot.lane.b32.xlu0 %v785, 80
      %v818 = vpop.permute.xlu0 %817
      %819 = vrot.lane.b32.xlu0 %v786, 80
      %v820 = vpop.permute.xlu0 %819
      %821 = vrot.lane.b32.xlu0 %v787, 80
      %v822 = vpop.permute.xlu0 %821
      %823 = vrot.lane.b32.xlu0 %v788, 80
      %v824 = vpop.permute.xlu0 %823
      %vm825 = vcmask 654336
      %v826 = vsel %vm825, %v802, %v804
      %v827 = vsel %vm825, %v804, %v806
      %v828 = vsel %vm825, %v808, %v810
      %v829 = vsel %vm825, %v810, %v812
      %v830 = vsel %vm825, %v814, %v816
      %v831 = vsel %vm825, %v816, %v818
      %v832 = vsel %vm825, %v820, %v822
      %v833 = vsel %vm825, %v822, %v824
      %v846 = vadd.f32 %v749, %v826
      %v847 = vadd.f32 %v750, %v827
      %v848 = vadd.f32 %v751, %v806
      %v849 = vadd.f32 %v752, %v828
      %v850 = vadd.f32 %v753, %v829
      %v851 = vadd.f32 %v754, %v812
      %v852 = vadd.f32 %v755, %v830
      %v853 = vadd.f32 %v756, %v831
      %v854 = vadd.f32 %v757, %v818
      %v855 = vadd.f32 %v758, %v832
      %v856 = vadd.f32 %v759, %v833
      %v857 = vadd.f32 %v760, %v824
      %858 = vset.pattern.permute.xlu0 20
      %859 = vperm.xlu0 %858, %v507
      %v860 = vpop.permute.xlu0 %859
      %862 = vset.pattern.permute.xlu0 20
      %863 = vperm.xlu0 %862, %v508
      %v864 = vpop.permute.xlu0 %863
      %866 = vset.pattern.permute.xlu0 20
      %867 = vperm.xlu0 %866, %v509
      %v868 = vpop.permute.xlu0 %867
      %870 = vset.pattern.permute.xlu0 20
      %871 = vperm.xlu0 %870, %v510
      %v872 = vpop.permute.xlu0 %871
      %v874 = vmul.f32 %v511, %v860
      %v875 = vmul.f32 %v512, %v860
      %v876 = vmul.f32 %v513, %v860
      %v877 = vmul.f32 %v514, %v864
      %v878 = vmul.f32 %v515, %v864
      %v879 = vmul.f32 %v516, %v864
      %v880 = vmul.f32 %v517, %v868
      %v881 = vmul.f32 %v518, %v868
      %v882 = vmul.f32 %v519, %v868
      %v883 = vmul.f32 %v520, %v872
      %v884 = vmul.f32 %v521, %v872
      %v885 = vmul.f32 %v522, %v872
      %898 = vrot.lane.b32.xlu0 %v874, 64
      %v899 = vpop.permute.xlu0 %898
      %900 = vrot.lane.b32.xlu0 %v875, 64
      %v901 = vpop.permute.xlu0 %900
      %902 = vrot.lane.b32.xlu0 %v876, 64
      %v903 = vpop.permute.xlu0 %902
      %904 = vrot.lane.b32.xlu0 %v877, 64
      %v905 = vpop.permute.xlu0 %904
      %906 = vrot.lane.b32.xlu0 %v878, 64
      %v907 = vpop.permute.xlu0 %906
      %908 = vrot.lane.b32.xlu0 %v879, 64
      %v909 = vpop.permute.xlu0 %908
      %910 = vrot.lane.b32.xlu0 %v880, 64
      %v911 = vpop.permute.xlu0 %910
      %912 = vrot.lane.b32.xlu0 %v881, 64
      %v913 = vpop.permute.xlu0 %912
      %914 = vrot.lane.b32.xlu0 %v882, 64
      %v915 = vpop.permute.xlu0 %914
      %916 = vrot.lane.b32.xlu0 %v883, 64
      %v917 = vpop.permute.xlu0 %916
      %918 = vrot.lane.b32.xlu0 %v884, 64
      %v919 = vpop.permute.xlu0 %918
      %920 = vrot.lane.b32.xlu0 %v885, 64
      %v921 = vpop.permute.xlu0 %920
      %vm922 = vcmask 523264
      %v923 = vsel %vm922, %v899, %v901
      %v924 = vsel %vm922, %v901, %v903
      %v925 = vsel %vm922, %v905, %v907
      %v926 = vsel %vm922, %v907, %v909
      %v927 = vsel %vm922, %v911, %v913
      %v928 = vsel %vm922, %v913, %v915
      %v929 = vsel %vm922, %v917, %v919
      %v930 = vsel %vm922, %v919, %v921
      %v943 = vadd.f32 %v846, %v923
      %v944 = vadd.f32 %v847, %v924
      %v945 = vadd.f32 %v848, %v903
      %v946 = vadd.f32 %v849, %v925
      %v947 = vadd.f32 %v850, %v926
      %v948 = vadd.f32 %v851, %v909
      %v949 = vadd.f32 %v852, %v927
      %v950 = vadd.f32 %v853, %v928
      %v951 = vadd.f32 %v854, %v915
      %v952 = vadd.f32 %v855, %v929
      %v953 = vadd.f32 %v856, %v930
      %v954 = vadd.f32 %v857, %v921
      %v955 = vld [vmem:[%s1] ss:$8 sm:$0x3]
      %v957 = vlaneseq
      %v958 = vshrl.u32 %v957, 7
      %v959 = vsub.s32 0, %v958
      %v960 = vrot.slane %v955, %v959
      %v961 = vlaneseq
      %v962 = vshrl.u32 %v961, 7
      %v963 = vsub.s32 1, %v962
      %v964 = vrot.slane %v955, %v963
      %965 = vrot.lane.b32.xlu0 %v960, 14
      %v966 = vpop.permute.xlu0 %965
      %967 = vrot.lane.b32.xlu0 %v964, 14
      %v968 = vpop.permute.xlu0 %967
      %vm969 = vcmask 113664
      %v970 = vsel %vm969, %v966, %v968
      %v974 = vmul.f32 %v943, %v966
      %v975 = vmul.f32 %v944, %v970
      %v976 = vmul.f32 %v945, %v968
      %v977 = vmul.f32 %v946, %v966
      %v978 = vmul.f32 %v947, %v970
      %v979 = vmul.f32 %v948, %v968
      %v980 = vmul.f32 %v949, %v966
      %v981 = vmul.f32 %v950, %v970
      %v982 = vmul.f32 %v951, %v968
      %v983 = vmul.f32 %v952, %v966
      %v984 = vmul.f32 %v953, %v970
      %v985 = vmul.f32 %v954, %v968
      %v986 = vadd.f32 %v974, 0.0
      %v987 = vadd.f32 %v975, 0.0
      %v988 = vadd.f32 %v976, 0.0
      %v989 = vadd.f32 %v977, 0.0
      %v990 = vadd.f32 %v978, 0.0
      %v991 = vadd.f32 %v979, 0.0
      %v992 = vadd.f32 %v980, 0.0
      %v993 = vadd.f32 %v981, 0.0
      %v994 = vadd.f32 %v982, 0.0
      %v995 = vadd.f32 %v983, 0.0
      %v996 = vadd.f32 %v984, 0.0
      %v997 = vadd.f32 %v985, 0.0
      %998 = vset.pattern.permute.xlu0 1
      %999 = vperm.xlu0 %998, %v507
      %v1000 = vpop.permute.xlu0 %999
      %1002 = vset.pattern.permute.xlu0 1
      %1003 = vperm.xlu0 %1002, %v508
      %v1004 = vpop.permute.xlu0 %1003
      %1006 = vset.pattern.permute.xlu0 1
      %1007 = vperm.xlu0 %1006, %v509
      %v1008 = vpop.permute.xlu0 %1007
      %1010 = vset.pattern.permute.xlu0 1
      %1011 = vperm.xlu0 %1010, %v510
      %v1012 = vpop.permute.xlu0 %1011
      %v1014 = vmul.f32 %v511, %v1000
      %v1015 = vmul.f32 %v512, %v1000
      %v1016 = vmul.f32 %v513, %v1000
      %v1017 = vmul.f32 %v514, %v1004
      %v1018 = vmul.f32 %v515, %v1004
      %v1019 = vmul.f32 %v516, %v1004
      %v1020 = vmul.f32 %v517, %v1008
      %v1021 = vmul.f32 %v518, %v1008
      %v1022 = vmul.f32 %v519, %v1008
      %v1023 = vmul.f32 %v520, %v1012
      %v1024 = vmul.f32 %v521, %v1012
      %v1025 = vmul.f32 %v522, %v1012
      %v1026 = vadd.f32 %v1014, 0.0
      %v1027 = vadd.f32 %v1015, 0.0
      %v1028 = vadd.f32 %v1016, 0.0
      %v1029 = vadd.f32 %v1017, 0.0
      %v1030 = vadd.f32 %v1018, 0.0
      %v1031 = vadd.f32 %v1019, 0.0
      %v1032 = vadd.f32 %v1020, 0.0
      %v1033 = vadd.f32 %v1021, 0.0
      %v1034 = vadd.f32 %v1022, 0.0
      %v1035 = vadd.f32 %v1023, 0.0
      %v1036 = vadd.f32 %v1024, 0.0
      %v1037 = vadd.f32 %v1025, 0.0
      %1038 = vset.pattern.permute.xlu0 6
      %1039 = vperm.xlu0 %1038, %v507
      %v1040 = vpop.permute.xlu0 %1039
      %1042 = vset.pattern.permute.xlu0 6
      %1043 = vperm.xlu0 %1042, %v508
      %v1044 = vpop.permute.xlu0 %1043
      %1046 = vset.pattern.permute.xlu0 6
      %1047 = vperm.xlu0 %1046, %v509
      %v1048 = vpop.permute.xlu0 %1047
      %1050 = vset.pattern.permute.xlu0 6
      %1051 = vperm.xlu0 %1050, %v510
      %v1052 = vpop.permute.xlu0 %1051
      %v1054 = vmul.f32 %v511, %v1040
      %v1055 = vmul.f32 %v512, %v1040
      %v1056 = vmul.f32 %v513, %v1040
      %v1057 = vmul.f32 %v514, %v1044
      %v1058 = vmul.f32 %v515, %v1044
      %v1059 = vmul.f32 %v516, %v1044
      %v1060 = vmul.f32 %v517, %v1048
      %v1061 = vmul.f32 %v518, %v1048
      %v1062 = vmul.f32 %v519, %v1048
      %v1063 = vmul.f32 %v520, %v1052
      %v1064 = vmul.f32 %v521, %v1052
      %v1065 = vmul.f32 %v522, %v1052
      %1078 = vrot.lane.b32.xlu0 %v1054, 112
      %v1079 = vpop.permute.xlu0 %1078
      %1080 = vrot.lane.b32.xlu0 %v1055, 112
      %v1081 = vpop.permute.xlu0 %1080
      %1082 = vrot.lane.b32.xlu0 %v1056, 112
      %v1083 = vpop.permute.xlu0 %1082
      %1084 = vrot.lane.b32.xlu0 %v1057, 112
      %v1085 = vpop.permute.xlu0 %1084
      %1086 = vrot.lane.b32.xlu0 %v1058, 112
      %v1087 = vpop.permute.xlu0 %1086
      %1088 = vrot.lane.b32.xlu0 %v1059, 112
      %v1089 = vpop.permute.xlu0 %1088
      %1090 = vrot.lane.b32.xlu0 %v1060, 112
      %v1091 = vpop.permute.xlu0 %1090
      %1092 = vrot.lane.b32.xlu0 %v1061, 112
      %v1093 = vpop.permute.xlu0 %1092
      %1094 = vrot.lane.b32.xlu0 %v1062, 112
      %v1095 = vpop.permute.xlu0 %1094
      %1096 = vrot.lane.b32.xlu0 %v1063, 112
      %v1097 = vpop.permute.xlu0 %1096
      %1098 = vrot.lane.b32.xlu0 %v1064, 112
      %v1099 = vpop.permute.xlu0 %1098
      %1100 = vrot.lane.b32.xlu0 %v1065, 112
      %v1101 = vpop.permute.xlu0 %1100
      %v1102 = vsel %vm631, %v1079, %v1081
      %v1103 = vsel %vm631, %v1081, %v1083
      %v1104 = vsel %vm631, %v1085, %v1087
      %v1105 = vsel %vm631, %v1087, %v1089
      %v1106 = vsel %vm631, %v1091, %v1093
      %v1107 = vsel %vm631, %v1093, %v1095
      %v1108 = vsel %vm631, %v1097, %v1099
      %v1109 = vsel %vm631, %v1099, %v1101
      %v1122 = vadd.f32 %v1026, %v1102
      %v1123 = vadd.f32 %v1027, %v1103
      %v1124 = vadd.f32 %v1028, %v1083
      %v1125 = vadd.f32 %v1029, %v1104
      %v1126 = vadd.f32 %v1030, %v1105
      %v1127 = vadd.f32 %v1031, %v1089
      %v1128 = vadd.f32 %v1032, %v1106
      %v1129 = vadd.f32 %v1033, %v1107
      %v1130 = vadd.f32 %v1034, %v1095
      %v1131 = vadd.f32 %v1035, %v1108
      %v1132 = vadd.f32 %v1036, %v1109
      %v1133 = vadd.f32 %v1037, %v1101
      %1134 = vset.pattern.permute.xlu0 11
      %1135 = vperm.xlu0 %1134, %v507
      %v1136 = vpop.permute.xlu0 %1135
      %1138 = vset.pattern.permute.xlu0 11
      %1139 = vperm.xlu0 %1138, %v508
      %v1140 = vpop.permute.xlu0 %1139
      %1142 = vset.pattern.permute.xlu0 11
      %1143 = vperm.xlu0 %1142, %v509
      %v1144 = vpop.permute.xlu0 %1143
      %1146 = vset.pattern.permute.xlu0 11
      %1147 = vperm.xlu0 %1146, %v510
      %v1148 = vpop.permute.xlu0 %1147
      %v1150 = vmul.f32 %v511, %v1136
      %v1151 = vmul.f32 %v512, %v1136
      %v1152 = vmul.f32 %v513, %v1136
      %v1153 = vmul.f32 %v514, %v1140
      %v1154 = vmul.f32 %v515, %v1140
      %v1155 = vmul.f32 %v516, %v1140
      %v1156 = vmul.f32 %v517, %v1144
      %v1157 = vmul.f32 %v518, %v1144
      %v1158 = vmul.f32 %v519, %v1144
      %v1159 = vmul.f32 %v520, %v1148
      %v1160 = vmul.f32 %v521, %v1148
      %v1161 = vmul.f32 %v522, %v1148
      %1174 = vrot.lane.b32.xlu0 %v1150, 96
      %v1175 = vpop.permute.xlu0 %1174
      %1176 = vrot.lane.b32.xlu0 %v1151, 96
      %v1177 = vpop.permute.xlu0 %1176
      %1178 = vrot.lane.b32.xlu0 %v1152, 96
      %v1179 = vpop.permute.xlu0 %1178
      %1180 = vrot.lane.b32.xlu0 %v1153, 96
      %v1181 = vpop.permute.xlu0 %1180
      %1182 = vrot.lane.b32.xlu0 %v1154, 96
      %v1183 = vpop.permute.xlu0 %1182
      %1184 = vrot.lane.b32.xlu0 %v1155, 96
      %v1185 = vpop.permute.xlu0 %1184
      %1186 = vrot.lane.b32.xlu0 %v1156, 96
      %v1187 = vpop.permute.xlu0 %1186
      %1188 = vrot.lane.b32.xlu0 %v1157, 96
      %v1189 = vpop.permute.xlu0 %1188
      %1190 = vrot.lane.b32.xlu0 %v1158, 96
      %v1191 = vpop.permute.xlu0 %1190
      %1192 = vrot.lane.b32.xlu0 %v1159, 96
      %v1193 = vpop.permute.xlu0 %1192
      %1194 = vrot.lane.b32.xlu0 %v1160, 96
      %v1195 = vpop.permute.xlu0 %1194
      %1196 = vrot.lane.b32.xlu0 %v1161, 96
      %v1197 = vpop.permute.xlu0 %1196
      %v1198 = vsel %vm728, %v1175, %v1177
      %v1199 = vsel %vm728, %v1177, %v1179
      %v1200 = vsel %vm728, %v1181, %v1183
      %v1201 = vsel %vm728, %v1183, %v1185
      %v1202 = vsel %vm728, %v1187, %v1189
      %v1203 = vsel %vm728, %v1189, %v1191
      %v1204 = vsel %vm728, %v1193, %v1195
      %v1205 = vsel %vm728, %v1195, %v1197
      %v1218 = vadd.f32 %v1122, %v1198
      %v1219 = vadd.f32 %v1123, %v1199
      %v1220 = vadd.f32 %v1124, %v1179
      %v1221 = vadd.f32 %v1125, %v1200
      %v1222 = vadd.f32 %v1126, %v1201
      %v1223 = vadd.f32 %v1127, %v1185
      %v1224 = vadd.f32 %v1128, %v1202
      %v1225 = vadd.f32 %v1129, %v1203
      %v1226 = vadd.f32 %v1130, %v1191
      %v1227 = vadd.f32 %v1131, %v1204
      %v1228 = vadd.f32 %v1132, %v1205
      %v1229 = vadd.f32 %v1133, %v1197
      %1230 = vset.pattern.permute.xlu0 16
      %1231 = vperm.xlu0 %1230, %v507
      %v1232 = vpop.permute.xlu0 %1231
      %1234 = vset.pattern.permute.xlu0 16
      %1235 = vperm.xlu0 %1234, %v508
      %v1236 = vpop.permute.xlu0 %1235
      %1238 = vset.pattern.permute.xlu0 16
      %1239 = vperm.xlu0 %1238, %v509
      %v1240 = vpop.permute.xlu0 %1239
      %1242 = vset.pattern.permute.xlu0 16
      %1243 = vperm.xlu0 %1242, %v510
      %v1244 = vpop.permute.xlu0 %1243
      %v1246 = vmul.f32 %v511, %v1232
      %v1247 = vmul.f32 %v512, %v1232
      %v1248 = vmul.f32 %v513, %v1232
      %v1249 = vmul.f32 %v514, %v1236
      %v1250 = vmul.f32 %v515, %v1236
      %v1251 = vmul.f32 %v516, %v1236
      %v1252 = vmul.f32 %v517, %v1240
      %v1253 = vmul.f32 %v518, %v1240
      %v1254 = vmul.f32 %v519, %v1240
      %v1255 = vmul.f32 %v520, %v1244
      %v1256 = vmul.f32 %v521, %v1244
      %v1257 = vmul.f32 %v522, %v1244
      %1270 = vrot.lane.b32.xlu0 %v1246, 80
      %v1271 = vpop.permute.xlu0 %1270
      %1272 = vrot.lane.b32.xlu0 %v1247, 80
      %v1273 = vpop.permute.xlu0 %1272
      %1274 = vrot.lane.b32.xlu0 %v1248, 80
      %v1275 = vpop.permute.xlu0 %1274
      %1276 = vrot.lane.b32.xlu0 %v1249, 80
      %v1277 = vpop.permute.xlu0 %1276
      %1278 = vrot.lane.b32.xlu0 %v1250, 80
      %v1279 = vpop.permute.xlu0 %1278
      %1280 = vrot.lane.b32.xlu0 %v1251, 80
      %v1281 = vpop.permute.xlu0 %1280
      %1282 = vrot.lane.b32.xlu0 %v1252, 80
      %v1283 = vpop.permute.xlu0 %1282
      %1284 = vrot.lane.b32.xlu0 %v1253, 80
      %v1285 = vpop.permute.xlu0 %1284
      %1286 = vrot.lane.b32.xlu0 %v1254, 80
      %v1287 = vpop.permute.xlu0 %1286
      %1288 = vrot.lane.b32.xlu0 %v1255, 80
      %v1289 = vpop.permute.xlu0 %1288
      %1290 = vrot.lane.b32.xlu0 %v1256, 80
      %v1291 = vpop.permute.xlu0 %1290
      %1292 = vrot.lane.b32.xlu0 %v1257, 80
      %v1293 = vpop.permute.xlu0 %1292
      %v1294 = vsel %vm825, %v1271, %v1273
      %v1295 = vsel %vm825, %v1273, %v1275
      %v1296 = vsel %vm825, %v1277, %v1279
      %v1297 = vsel %vm825, %v1279, %v1281
      %v1298 = vsel %vm825, %v1283, %v1285
      %v1299 = vsel %vm825, %v1285, %v1287
      %v1300 = vsel %vm825, %v1289, %v1291
      %v1301 = vsel %vm825, %v1291, %v1293
      %v1314 = vadd.f32 %v1218, %v1294
      %v1315 = vadd.f32 %v1219, %v1295
      %v1316 = vadd.f32 %v1220, %v1275
      %v1317 = vadd.f32 %v1221, %v1296
      %v1318 = vadd.f32 %v1222, %v1297
      %v1319 = vadd.f32 %v1223, %v1281
      %v1320 = vadd.f32 %v1224, %v1298
      %v1321 = vadd.f32 %v1225, %v1299
      %v1322 = vadd.f32 %v1226, %v1287
      %v1323 = vadd.f32 %v1227, %v1300
      %v1324 = vadd.f32 %v1228, %v1301
      %v1325 = vadd.f32 %v1229, %v1293
      %1326 = vset.pattern.permute.xlu0 21
      %1327 = vperm.xlu0 %1326, %v507
      %v1328 = vpop.permute.xlu0 %1327
      %1330 = vset.pattern.permute.xlu0 21
      %1331 = vperm.xlu0 %1330, %v508
      %v1332 = vpop.permute.xlu0 %1331
      %1334 = vset.pattern.permute.xlu0 21
      %1335 = vperm.xlu0 %1334, %v509
      %v1336 = vpop.permute.xlu0 %1335
      %1338 = vset.pattern.permute.xlu0 21
      %1339 = vperm.xlu0 %1338, %v510
      %v1340 = vpop.permute.xlu0 %1339
      %v1342 = vmul.f32 %v511, %v1328
      %v1343 = vmul.f32 %v512, %v1328
      %v1344 = vmul.f32 %v513, %v1328
      %v1345 = vmul.f32 %v514, %v1332
      %v1346 = vmul.f32 %v515, %v1332
      %v1347 = vmul.f32 %v516, %v1332
      %v1348 = vmul.f32 %v517, %v1336
      %v1349 = vmul.f32 %v518, %v1336
      %v1350 = vmul.f32 %v519, %v1336
      %v1351 = vmul.f32 %v520, %v1340
      %v1352 = vmul.f32 %v521, %v1340
      %v1353 = vmul.f32 %v522, %v1340
      %1366 = vrot.lane.b32.xlu0 %v1342, 64
      %v1367 = vpop.permute.xlu0 %1366
      %1368 = vrot.lane.b32.xlu0 %v1343, 64
      %v1369 = vpop.permute.xlu0 %1368
      %1370 = vrot.lane.b32.xlu0 %v1344, 64
      %v1371 = vpop.permute.xlu0 %1370
      %1372 = vrot.lane.b32.xlu0 %v1345, 64
      %v1373 = vpop.permute.xlu0 %1372
      %1374 = vrot.lane.b32.xlu0 %v1346, 64
      %v1375 = vpop.permute.xlu0 %1374
      %1376 = vrot.lane.b32.xlu0 %v1347, 64
      %v1377 = vpop.permute.xlu0 %1376
      %1378 = vrot.lane.b32.xlu0 %v1348, 64
      %v1379 = vpop.permute.xlu0 %1378
      %1380 = vrot.lane.b32.xlu0 %v1349, 64
      %v1381 = vpop.permute.xlu0 %1380
      %1382 = vrot.lane.b32.xlu0 %v1350, 64
      %v1383 = vpop.permute.xlu0 %1382
      %1384 = vrot.lane.b32.xlu0 %v1351, 64
      %v1385 = vpop.permute.xlu0 %1384
      %1386 = vrot.lane.b32.xlu0 %v1352, 64
      %v1387 = vpop.permute.xlu0 %1386
      %1388 = vrot.lane.b32.xlu0 %v1353, 64
      %v1389 = vpop.permute.xlu0 %1388
      %v1390 = vsel %vm922, %v1367, %v1369
      %v1391 = vsel %vm922, %v1369, %v1371
      %v1392 = vsel %vm922, %v1373, %v1375
      %v1393 = vsel %vm922, %v1375, %v1377
      %v1394 = vsel %vm922, %v1379, %v1381
      %v1395 = vsel %vm922, %v1381, %v1383
      %v1396 = vsel %vm922, %v1385, %v1387
      %v1397 = vsel %vm922, %v1387, %v1389
      %v1410 = vadd.f32 %v1314, %v1390
      %v1411 = vadd.f32 %v1315, %v1391
      %v1412 = vadd.f32 %v1316, %v1371
      %v1413 = vadd.f32 %v1317, %v1392
      %v1414 = vadd.f32 %v1318, %v1393
      %v1415 = vadd.f32 %v1319, %v1377
      %v1416 = vadd.f32 %v1320, %v1394
      %v1417 = vadd.f32 %v1321, %v1395
      %v1418 = vadd.f32 %v1322, %v1383
      %v1419 = vadd.f32 %v1323, %v1396
      %v1420 = vadd.f32 %v1324, %v1397
      %v1421 = vadd.f32 %v1325, %v1389
      %s1422 = scalar_lea.vmem %s1, 1
      %v1423 = vld [vmem:[%s1422] ss:$8 sm:$0x3]
      %v1425 = vlaneseq
      %v1426 = vshrl.u32 %v1425, 7
      %v1427 = vsub.s32 0, %v1426
      %v1428 = vrot.slane %v1423, %v1427
      %v1429 = vlaneseq
      %v1430 = vshrl.u32 %v1429, 7
      %v1431 = vsub.s32 1, %v1430
      %v1432 = vrot.slane %v1423, %v1431
      %1433 = vrot.lane.b32.xlu0 %v1428, 15
      %v1434 = vpop.permute.xlu0 %1433
      %1435 = vrot.lane.b32.xlu0 %v1432, 15
      %v1436 = vpop.permute.xlu0 %1435
      %vm1437 = vcmask 121856
      %v1438 = vsel %vm1437, %v1434, %v1436
      %v1442 = vmul.f32 %v1410, %v1434
      %v1443 = vmul.f32 %v1411, %v1438
      %v1444 = vmul.f32 %v1412, %v1436
      %v1445 = vmul.f32 %v1413, %v1434
      %v1446 = vmul.f32 %v1414, %v1438
      %v1447 = vmul.f32 %v1415, %v1436
      %v1448 = vmul.f32 %v1416, %v1434
      %v1449 = vmul.f32 %v1417, %v1438
      %v1450 = vmul.f32 %v1418, %v1436
      %v1451 = vmul.f32 %v1419, %v1434
      %v1452 = vmul.f32 %v1420, %v1438
      %v1453 = vmul.f32 %v1421, %v1436
      %1466 = vrot.lane.b32.xlu0 %v1442, 127
      %v1467 = vpop.permute.xlu0 %1466
      %1468 = vrot.lane.b32.xlu0 %v1443, 127
      %v1469 = vpop.permute.xlu0 %1468
      %1470 = vrot.lane.b32.xlu0 %v1444, 127
      %v1471 = vpop.permute.xlu0 %1470
      %1472 = vrot.lane.b32.xlu0 %v1445, 127
      %v1473 = vpop.permute.xlu0 %1472
      %1474 = vrot.lane.b32.xlu0 %v1446, 127
      %v1475 = vpop.permute.xlu0 %1474
      %1476 = vrot.lane.b32.xlu0 %v1447, 127
      %v1477 = vpop.permute.xlu0 %1476
      %1478 = vrot.lane.b32.xlu0 %v1448, 127
      %v1479 = vpop.permute.xlu0 %1478
      %1480 = vrot.lane.b32.xlu0 %v1449, 127
      %v1481 = vpop.permute.xlu0 %1480
      %1482 = vrot.lane.b32.xlu0 %v1450, 127
      %v1483 = vpop.permute.xlu0 %1482
      %1484 = vrot.lane.b32.xlu0 %v1451, 127
      %v1485 = vpop.permute.xlu0 %1484
      %1486 = vrot.lane.b32.xlu0 %v1452, 127
      %v1487 = vpop.permute.xlu0 %1486
      %1488 = vrot.lane.b32.xlu0 %v1453, 127
      %v1489 = vpop.permute.xlu0 %1488
      %vm1490 = vcmask 1039360
      %v1491 = vsel %vm1490, %v1467, %v1469
      %v1492 = vsel %vm1490, %v1469, %v1471
      %v1493 = vsel %vm1490, %v1473, %v1475
      %v1494 = vsel %vm1490, %v1475, %v1477
      %v1495 = vsel %vm1490, %v1479, %v1481
      %v1496 = vsel %vm1490, %v1481, %v1483
      %v1497 = vsel %vm1490, %v1485, %v1487
      %v1498 = vsel %vm1490, %v1487, %v1489
      %v1511 = vadd.f32 %v986, %v1491
      %v1512 = vadd.f32 %v987, %v1492
      %v1513 = vadd.f32 %v988, %v1471
      %v1514 = vadd.f32 %v989, %v1493
      %v1515 = vadd.f32 %v990, %v1494
      %v1516 = vadd.f32 %v991, %v1477
      %v1517 = vadd.f32 %v992, %v1495
      %v1518 = vadd.f32 %v993, %v1496
      %v1519 = vadd.f32 %v994, %v1483
      %v1520 = vadd.f32 %v995, %v1497
      %v1521 = vadd.f32 %v996, %v1498
      %v1522 = vadd.f32 %v997, %v1489
      %1523 = vset.pattern.permute.xlu0 2
      %1524 = vperm.xlu0 %1523, %v507
      %v1525 = vpop.permute.xlu0 %1524
      %1527 = vset.pattern.permute.xlu0 2
      %1528 = vperm.xlu0 %1527, %v508
      %v1529 = vpop.permute.xlu0 %1528
      %1531 = vset.pattern.permute.xlu0 2
      %1532 = vperm.xlu0 %1531, %v509
      %v1533 = vpop.permute.xlu0 %1532
      %1535 = vset.pattern.permute.xlu0 2
      %1536 = vperm.xlu0 %1535, %v510
      %v1537 = vpop.permute.xlu0 %1536
      %v1539 = vmul.f32 %v511, %v1525
      %v1540 = vmul.f32 %v512, %v1525
      %v1541 = vmul.f32 %v513, %v1525
      %v1542 = vmul.f32 %v514, %v1529
      %v1543 = vmul.f32 %v515, %v1529
      %v1544 = vmul.f32 %v516, %v1529
      %v1545 = vmul.f32 %v517, %v1533
      %v1546 = vmul.f32 %v518, %v1533
      %v1547 = vmul.f32 %v519, %v1533
      %v1548 = vmul.f32 %v520, %v1537
      %v1549 = vmul.f32 %v521, %v1537
      %v1550 = vmul.f32 %v522, %v1537
      %v1551 = vadd.f32 %v1539, 0.0
      %v1552 = vadd.f32 %v1540, 0.0
      %v1553 = vadd.f32 %v1541, 0.0
      %v1554 = vadd.f32 %v1542, 0.0
      %v1555 = vadd.f32 %v1543, 0.0
      %v1556 = vadd.f32 %v1544, 0.0
      %v1557 = vadd.f32 %v1545, 0.0
      %v1558 = vadd.f32 %v1546, 0.0
      %v1559 = vadd.f32 %v1547, 0.0
      %v1560 = vadd.f32 %v1548, 0.0
      %v1561 = vadd.f32 %v1549, 0.0
      %v1562 = vadd.f32 %v1550, 0.0
      %1563 = vset.pattern.permute.xlu0 7
      %1564 = vperm.xlu0 %1563, %v507
      %v1565 = vpop.permute.xlu0 %1564
      %1567 = vset.pattern.permute.xlu0 7
      %1568 = vperm.xlu0 %1567, %v508
      %v1569 = vpop.permute.xlu0 %1568
      %1571 = vset.pattern.permute.xlu0 7
      %1572 = vperm.xlu0 %1571, %v509
      %v1573 = vpop.permute.xlu0 %1572
      %1575 = vset.pattern.permute.xlu0 7
      %1576 = vperm.xlu0 %1575, %v510
      %v1577 = vpop.permute.xlu0 %1576
      %v1579 = vmul.f32 %v511, %v1565
      %v1580 = vmul.f32 %v512, %v1565
      %v1581 = vmul.f32 %v513, %v1565
      %v1582 = vmul.f32 %v514, %v1569
      %v1583 = vmul.f32 %v515, %v1569
      %v1584 = vmul.f32 %v516, %v1569
      %v1585 = vmul.f32 %v517, %v1573
      %v1586 = vmul.f32 %v518, %v1573
      %v1587 = vmul.f32 %v519, %v1573
      %v1588 = vmul.f32 %v520, %v1577
      %v1589 = vmul.f32 %v521, %v1577
      %v1590 = vmul.f32 %v522, %v1577
      %1603 = vrot.lane.b32.xlu0 %v1579, 112
      %v1604 = vpop.permute.xlu0 %1603
      %1605 = vrot.lane.b32.xlu0 %v1580, 112
      %v1606 = vpop.permute.xlu0 %1605
      %1607 = vrot.lane.b32.xlu0 %v1581, 112
      %v1608 = vpop.permute.xlu0 %1607
      %1609 = vrot.lane.b32.xlu0 %v1582, 112
      %v1610 = vpop.permute.xlu0 %1609
      %1611 = vrot.lane.b32.xlu0 %v1583, 112
      %v1612 = vpop.permute.xlu0 %1611
      %1613 = vrot.lane.b32.xlu0 %v1584, 112
      %v1614 = vpop.permute.xlu0 %1613
      %1615 = vrot.lane.b32.xlu0 %v1585, 112
      %v1616 = vpop.permute.xlu0 %1615
      %1617 = vrot.lane.b32.xlu0 %v1586, 112
      %v1618 = vpop.permute.xlu0 %1617
      %1619 = vrot.lane.b32.xlu0 %v1587, 112
      %v1620 = vpop.permute.xlu0 %1619
      %1621 = vrot.lane.b32.xlu0 %v1588, 112
      %v1622 = vpop.permute.xlu0 %1621
      %1623 = vrot.lane.b32.xlu0 %v1589, 112
      %v1624 = vpop.permute.xlu0 %1623
      %1625 = vrot.lane.b32.xlu0 %v1590, 112
      %v1626 = vpop.permute.xlu0 %1625
      %v1627 = vsel %vm631, %v1604, %v1606
      %v1628 = vsel %vm631, %v1606, %v1608
      %v1629 = vsel %vm631, %v1610, %v1612
      %v1630 = vsel %vm631, %v1612, %v1614
      %v1631 = vsel %vm631, %v1616, %v1618
      %v1632 = vsel %vm631, %v1618, %v1620
      %v1633 = vsel %vm631, %v1622, %v1624
      %v1634 = vsel %vm631, %v1624, %v1626
      %v1647 = vadd.f32 %v1551, %v1627
      %v1648 = vadd.f32 %v1552, %v1628
      %v1649 = vadd.f32 %v1553, %v1608
      %v1650 = vadd.f32 %v1554, %v1629
      %v1651 = vadd.f32 %v1555, %v1630
      %v1652 = vadd.f32 %v1556, %v1614
      %v1653 = vadd.f32 %v1557, %v1631
      %v1654 = vadd.f32 %v1558, %v1632
      %v1655 = vadd.f32 %v1559, %v1620
      %v1656 = vadd.f32 %v1560, %v1633
      %v1657 = vadd.f32 %v1561, %v1634
      %v1658 = vadd.f32 %v1562, %v1626
      %1659 = vset.pattern.permute.xlu0 12
      %1660 = vperm.xlu0 %1659, %v507
      %v1661 = vpop.permute.xlu0 %1660
      %1663 = vset.pattern.permute.xlu0 12
      %1664 = vperm.xlu0 %1663, %v508
      %v1665 = vpop.permute.xlu0 %1664
      %1667 = vset.pattern.permute.xlu0 12
      %1668 = vperm.xlu0 %1667, %v509
      %v1669 = vpop.permute.xlu0 %1668
      %1671 = vset.pattern.permute.xlu0 12
      %1672 = vperm.xlu0 %1671, %v510
      %v1673 = vpop.permute.xlu0 %1672
      %v1675 = vmul.f32 %v511, %v1661
      %v1676 = vmul.f32 %v512, %v1661
      %v1677 = vmul.f32 %v513, %v1661
      %v1678 = vmul.f32 %v514, %v1665
      %v1679 = vmul.f32 %v515, %v1665
      %v1680 = vmul.f32 %v516, %v1665
      %v1681 = vmul.f32 %v517, %v1669
      %v1682 = vmul.f32 %v518, %v1669
      %v1683 = vmul.f32 %v519, %v1669
      %v1684 = vmul.f32 %v520, %v1673
      %v1685 = vmul.f32 %v521, %v1673
      %v1686 = vmul.f32 %v522, %v1673
      %1699 = vrot.lane.b32.xlu0 %v1675, 96
      %v1700 = vpop.permute.xlu0 %1699
      %1701 = vrot.lane.b32.xlu0 %v1676, 96
      %v1702 = vpop.permute.xlu0 %1701
      %1703 = vrot.lane.b32.xlu0 %v1677, 96
      %v1704 = vpop.permute.xlu0 %1703
      %1705 = vrot.lane.b32.xlu0 %v1678, 96
      %v1706 = vpop.permute.xlu0 %1705
      %1707 = vrot.lane.b32.xlu0 %v1679, 96
      %v1708 = vpop.permute.xlu0 %1707
      %1709 = vrot.lane.b32.xlu0 %v1680, 96
      %v1710 = vpop.permute.xlu0 %1709
      %1711 = vrot.lane.b32.xlu0 %v1681, 96
      %v1712 = vpop.permute.xlu0 %1711
      %1713 = vrot.lane.b32.xlu0 %v1682, 96
      %v1714 = vpop.permute.xlu0 %1713
      %1715 = vrot.lane.b32.xlu0 %v1683, 96
      %v1716 = vpop.permute.xlu0 %1715
      %1717 = vrot.lane.b32.xlu0 %v1684, 96
      %v1718 = vpop.permute.xlu0 %1717
      %1719 = vrot.lane.b32.xlu0 %v1685, 96
      %v1720 = vpop.permute.xlu0 %1719
      %1721 = vrot.lane.b32.xlu0 %v1686, 96
      %v1722 = vpop.permute.xlu0 %1721
      %v1723 = vsel %vm728, %v1700, %v1702
      %v1724 = vsel %vm728, %v1702, %v1704
      %v1725 = vsel %vm728, %v1706, %v1708
      %v1726 = vsel %vm728, %v1708, %v1710
      %v1727 = vsel %vm728, %v1712, %v1714
      %v1728 = vsel %vm728, %v1714, %v1716
      %v1729 = vsel %vm728, %v1718, %v1720
      %v1730 = vsel %vm728, %v1720, %v1722
      %v1743 = vadd.f32 %v1647, %v1723
      %v1744 = vadd.f32 %v1648, %v1724
      %v1745 = vadd.f32 %v1649, %v1704
      %v1746 = vadd.f32 %v1650, %v1725
      %v1747 = vadd.f32 %v1651, %v1726
      %v1748 = vadd.f32 %v1652, %v1710
      %v1749 = vadd.f32 %v1653, %v1727
      %v1750 = vadd.f32 %v1654, %v1728
      %v1751 = vadd.f32 %v1655, %v1716
      %v1752 = vadd.f32 %v1656, %v1729
      %v1753 = vadd.f32 %v1657, %v1730
      %v1754 = vadd.f32 %v1658, %v1722
      %1755 = vset.pattern.permute.xlu0 17
      %1756 = vperm.xlu0 %1755, %v507
      %v1757 = vpop.permute.xlu0 %1756
      %1759 = vset.pattern.permute.xlu0 17
      %1760 = vperm.xlu0 %1759, %v508
      %v1761 = vpop.permute.xlu0 %1760
      %1763 = vset.pattern.permute.xlu0 17
      %1764 = vperm.xlu0 %1763, %v509
      %v1765 = vpop.permute.xlu0 %1764
      %1767 = vset.pattern.permute.xlu0 17
      %1768 = vperm.xlu0 %1767, %v510
      %v1769 = vpop.permute.xlu0 %1768
      %v1771 = vmul.f32 %v511, %v1757
      %v1772 = vmul.f32 %v512, %v1757
      %v1773 = vmul.f32 %v513, %v1757
      %v1774 = vmul.f32 %v514, %v1761
      %v1775 = vmul.f32 %v515, %v1761
      %v1776 = vmul.f32 %v516, %v1761
      %v1777 = vmul.f32 %v517, %v1765
      %v1778 = vmul.f32 %v518, %v1765
      %v1779 = vmul.f32 %v519, %v1765
      %v1780 = vmul.f32 %v520, %v1769
      %v1781 = vmul.f32 %v521, %v1769
      %v1782 = vmul.f32 %v522, %v1769
      %1795 = vrot.lane.b32.xlu0 %v1771, 80
      %v1796 = vpop.permute.xlu0 %1795
      %1797 = vrot.lane.b32.xlu0 %v1772, 80
      %v1798 = vpop.permute.xlu0 %1797
      %1799 = vrot.lane.b32.xlu0 %v1773, 80
      %v1800 = vpop.permute.xlu0 %1799
      %1801 = vrot.lane.b32.xlu0 %v1774, 80
      %v1802 = vpop.permute.xlu0 %1801
      %1803 = vrot.lane.b32.xlu0 %v1775, 80
      %v1804 = vpop.permute.xlu0 %1803
      %1805 = vrot.lane.b32.xlu0 %v1776, 80
      %v1806 = vpop.permute.xlu0 %1805
      %1807 = vrot.lane.b32.xlu0 %v1777, 80
      %v1808 = vpop.permute.xlu0 %1807
      %1809 = vrot.lane.b32.xlu0 %v1778, 80
      %v1810 = vpop.permute.xlu0 %1809
      %1811 = vrot.lane.b32.xlu0 %v1779, 80
      %v1812 = vpop.permute.xlu0 %1811
      %1813 = vrot.lane.b32.xlu0 %v1780, 80
      %v1814 = vpop.permute.xlu0 %1813
      %1815 = vrot.lane.b32.xlu0 %v1781, 80
      %v1816 = vpop.permute.xlu0 %1815
      %1817 = vrot.lane.b32.xlu0 %v1782, 80
      %v1818 = vpop.permute.xlu0 %1817
      %v1819 = vsel %vm825, %v1796, %v1798
      %v1820 = vsel %vm825, %v1798, %v1800
      %v1821 = vsel %vm825, %v1802, %v1804
      %v1822 = vsel %vm825, %v1804, %v1806
      %v1823 = vsel %vm825, %v1808, %v1810
      %v1824 = vsel %vm825, %v1810, %v1812
      %v1825 = vsel %vm825, %v1814, %v1816
      %v1826 = vsel %vm825, %v1816, %v1818
      %v1839 = vadd.f32 %v1743, %v1819
      %v1840 = vadd.f32 %v1744, %v1820
      %v1841 = vadd.f32 %v1745, %v1800
      %v1842 = vadd.f32 %v1746, %v1821
      %v1843 = vadd.f32 %v1747, %v1822
      %v1844 = vadd.f32 %v1748, %v1806
      %v1845 = vadd.f32 %v1749, %v1823
      %v1846 = vadd.f32 %v1750, %v1824
      %v1847 = vadd.f32 %v1751, %v1812
      %v1848 = vadd.f32 %v1752, %v1825
      %v1849 = vadd.f32 %v1753, %v1826
      %v1850 = vadd.f32 %v1754, %v1818
      %1851 = vset.pattern.permute.xlu0 22
      %1852 = vperm.xlu0 %1851, %v507
      %v1853 = vpop.permute.xlu0 %1852
      %1855 = vset.pattern.permute.xlu0 22
      %1856 = vperm.xlu0 %1855, %v508
      %v1857 = vpop.permute.xlu0 %1856
      %1859 = vset.pattern.permute.xlu0 22
      %1860 = vperm.xlu0 %1859, %v509
      %v1861 = vpop.permute.xlu0 %1860
      %1863 = vset.pattern.permute.xlu0 22
      %1864 = vperm.xlu0 %1863, %v510
      %v1865 = vpop.permute.xlu0 %1864
      %v1867 = vmul.f32 %v511, %v1853
      %v1868 = vmul.f32 %v512, %v1853
      %v1869 = vmul.f32 %v513, %v1853
      %v1870 = vmul.f32 %v514, %v1857
      %v1871 = vmul.f32 %v515, %v1857
      %v1872 = vmul.f32 %v516, %v1857
      %v1873 = vmul.f32 %v517, %v1861
      %v1874 = vmul.f32 %v518, %v1861
      %v1875 = vmul.f32 %v519, %v1861
      %v1876 = vmul.f32 %v520, %v1865
      %v1877 = vmul.f32 %v521, %v1865
      %v1878 = vmul.f32 %v522, %v1865
      %1891 = vrot.lane.b32.xlu0 %v1867, 64
      %v1892 = vpop.permute.xlu0 %1891
      %1893 = vrot.lane.b32.xlu0 %v1868, 64
      %v1894 = vpop.permute.xlu0 %1893
      %1895 = vrot.lane.b32.xlu0 %v1869, 64
      %v1896 = vpop.permute.xlu0 %1895
      %1897 = vrot.lane.b32.xlu0 %v1870, 64
      %v1898 = vpop.permute.xlu0 %1897
      %1899 = vrot.lane.b32.xlu0 %v1871, 64
      %v1900 = vpop.permute.xlu0 %1899
      %1901 = vrot.lane.b32.xlu0 %v1872, 64
      %v1902 = vpop.permute.xlu0 %1901
      %1903 = vrot.lane.b32.xlu0 %v1873, 64
      %v1904 = vpop.permute.xlu0 %1903
      %1905 = vrot.lane.b32.xlu0 %v1874, 64
      %v1906 = vpop.permute.xlu0 %1905
      %1907 = vrot.lane.b32.xlu0 %v1875, 64
      %v1908 = vpop.permute.xlu0 %1907
      %1909 = vrot.lane.b32.xlu0 %v1876, 64
      %v1910 = vpop.permute.xlu0 %1909
      %1911 = vrot.lane.b32.xlu0 %v1877, 64
      %v1912 = vpop.permute.xlu0 %1911
      %1913 = vrot.lane.b32.xlu0 %v1878, 64
      %v1914 = vpop.permute.xlu0 %1913
      %v1915 = vsel %vm922, %v1892, %v1894
      %v1916 = vsel %vm922, %v1894, %v1896
      %v1917 = vsel %vm922, %v1898, %v1900
      %v1918 = vsel %vm922, %v1900, %v1902
      %v1919 = vsel %vm922, %v1904, %v1906
      %v1920 = vsel %vm922, %v1906, %v1908
      %v1921 = vsel %vm922, %v1910, %v1912
      %v1922 = vsel %vm922, %v1912, %v1914
      %v1935 = vadd.f32 %v1839, %v1915
      %v1936 = vadd.f32 %v1840, %v1916
      %v1937 = vadd.f32 %v1841, %v1896
      %v1938 = vadd.f32 %v1842, %v1917
      %v1939 = vadd.f32 %v1843, %v1918
      %v1940 = vadd.f32 %v1844, %v1902
      %v1941 = vadd.f32 %v1845, %v1919
      %v1942 = vadd.f32 %v1846, %v1920
      %v1943 = vadd.f32 %v1847, %v1908
      %v1944 = vadd.f32 %v1848, %v1921
      %v1945 = vadd.f32 %v1849, %v1922
      %v1946 = vadd.f32 %v1850, %v1914
      %1959 = vrot.lane.b32.xlu0 %v1935, 126
      %v1960 = vpop.permute.xlu0 %1959
      %1961 = vrot.lane.b32.xlu0 %v1936, 126
      %v1962 = vpop.permute.xlu0 %1961
      %1963 = vrot.lane.b32.xlu0 %v1937, 126
      %v1964 = vpop.permute.xlu0 %1963
      %1965 = vrot.lane.b32.xlu0 %v1938, 126
      %v1966 = vpop.permute.xlu0 %1965
      %1967 = vrot.lane.b32.xlu0 %v1939, 126
      %v1968 = vpop.permute.xlu0 %1967
      %1969 = vrot.lane.b32.xlu0 %v1940, 126
      %v1970 = vpop.permute.xlu0 %1969
      %1971 = vrot.lane.b32.xlu0 %v1941, 126
      %v1972 = vpop.permute.xlu0 %1971
      %1973 = vrot.lane.b32.xlu0 %v1942, 126
      %v1974 = vpop.permute.xlu0 %1973
      %1975 = vrot.lane.b32.xlu0 %v1943, 126
      %v1976 = vpop.permute.xlu0 %1975
      %1977 = vrot.lane.b32.xlu0 %v1944, 126
      %v1978 = vpop.permute.xlu0 %1977
      %1979 = vrot.lane.b32.xlu0 %v1945, 126
      %v1980 = vpop.permute.xlu0 %1979
      %1981 = vrot.lane.b32.xlu0 %v1946, 126
      %v1982 = vpop.permute.xlu0 %1981
      %vm1983 = vcmask 1031168
      %v1984 = vsel %vm1983, %v1960, %v1962
      %v1985 = vsel %vm1983, %v1962, %v1964
      %v1986 = vsel %vm1983, %v1966, %v1968
      %v1987 = vsel %vm1983, %v1968, %v1970
      %v1988 = vsel %vm1983, %v1972, %v1974
      %v1989 = vsel %vm1983, %v1974, %v1976
      %v1990 = vsel %vm1983, %v1978, %v1980
      %v1991 = vsel %vm1983, %v1980, %v1982
      %v2004 = vadd.f32 %v1511, %v1984
      %v2005 = vadd.f32 %v1512, %v1985
      %v2006 = vadd.f32 %v1513, %v1964
      %v2007 = vadd.f32 %v1514, %v1986
      %v2008 = vadd.f32 %v1515, %v1987
      %v2009 = vadd.f32 %v1516, %v1970
      %v2010 = vadd.f32 %v1517, %v1988
      %v2011 = vadd.f32 %v1518, %v1989
      %v2012 = vadd.f32 %v1519, %v1976
      %v2013 = vadd.f32 %v1520, %v1990
      %v2014 = vadd.f32 %v1521, %v1991
      %v2015 = vadd.f32 %v1522, %v1982
      %2016 = vset.pattern.permute.xlu0 3
      %2017 = vperm.xlu0 %2016, %v507
      %v2018 = vpop.permute.xlu0 %2017
      %2020 = vset.pattern.permute.xlu0 3
      %2021 = vperm.xlu0 %2020, %v508
      %v2022 = vpop.permute.xlu0 %2021
      %2024 = vset.pattern.permute.xlu0 3
      %2025 = vperm.xlu0 %2024, %v509
      %v2026 = vpop.permute.xlu0 %2025
      %2028 = vset.pattern.permute.xlu0 3
      %2029 = vperm.xlu0 %2028, %v510
      %v2030 = vpop.permute.xlu0 %2029
      %v2032 = vmul.f32 %v511, %v2018
      %v2033 = vmul.f32 %v512, %v2018
      %v2034 = vmul.f32 %v513, %v2018
      %v2035 = vmul.f32 %v514, %v2022
      %v2036 = vmul.f32 %v515, %v2022
      %v2037 = vmul.f32 %v516, %v2022
      %v2038 = vmul.f32 %v517, %v2026
      %v2039 = vmul.f32 %v518, %v2026
      %v2040 = vmul.f32 %v519, %v2026
      %v2041 = vmul.f32 %v520, %v2030
      %v2042 = vmul.f32 %v521, %v2030
      %v2043 = vmul.f32 %v522, %v2030
      %v2044 = vadd.f32 %v2032, 0.0
      %v2045 = vadd.f32 %v2033, 0.0
      %v2046 = vadd.f32 %v2034, 0.0
      %v2047 = vadd.f32 %v2035, 0.0
      %v2048 = vadd.f32 %v2036, 0.0
      %v2049 = vadd.f32 %v2037, 0.0
      %v2050 = vadd.f32 %v2038, 0.0
      %v2051 = vadd.f32 %v2039, 0.0
      %v2052 = vadd.f32 %v2040, 0.0
      %v2053 = vadd.f32 %v2041, 0.0
      %v2054 = vadd.f32 %v2042, 0.0
      %v2055 = vadd.f32 %v2043, 0.0
      %2056 = vset.pattern.permute.xlu0 8
      %2057 = vperm.xlu0 %2056, %v507
      %v2058 = vpop.permute.xlu0 %2057
      %2060 = vset.pattern.permute.xlu0 8
      %2061 = vperm.xlu0 %2060, %v508
      %v2062 = vpop.permute.xlu0 %2061
      %2064 = vset.pattern.permute.xlu0 8
      %2065 = vperm.xlu0 %2064, %v509
      %v2066 = vpop.permute.xlu0 %2065
      %2068 = vset.pattern.permute.xlu0 8
      %2069 = vperm.xlu0 %2068, %v510
      %v2070 = vpop.permute.xlu0 %2069
      %v2072 = vmul.f32 %v511, %v2058
      %v2073 = vmul.f32 %v512, %v2058
      %v2074 = vmul.f32 %v513, %v2058
      %v2075 = vmul.f32 %v514, %v2062
      %v2076 = vmul.f32 %v515, %v2062
      %v2077 = vmul.f32 %v516, %v2062
      %v2078 = vmul.f32 %v517, %v2066
      %v2079 = vmul.f32 %v518, %v2066
      %v2080 = vmul.f32 %v519, %v2066
      %v2081 = vmul.f32 %v520, %v2070
      %v2082 = vmul.f32 %v521, %v2070
      %v2083 = vmul.f32 %v522, %v2070
      %2096 = vrot.lane.b32.xlu0 %v2072, 112
      %v2097 = vpop.permute.xlu0 %2096
      %2098 = vrot.lane.b32.xlu0 %v2073, 112
      %v2099 = vpop.permute.xlu0 %2098
      %2100 = vrot.lane.b32.xlu0 %v2074, 112
      %v2101 = vpop.permute.xlu0 %2100
      %2102 = vrot.lane.b32.xlu0 %v2075, 112
      %v2103 = vpop.permute.xlu0 %2102
      %2104 = vrot.lane.b32.xlu0 %v2076, 112
      %v2105 = vpop.permute.xlu0 %2104
      %2106 = vrot.lane.b32.xlu0 %v2077, 112
      %v2107 = vpop.permute.xlu0 %2106
      %2108 = vrot.lane.b32.xlu0 %v2078, 112
      %v2109 = vpop.permute.xlu0 %2108
      %2110 = vrot.lane.b32.xlu0 %v2079, 112
      %v2111 = vpop.permute.xlu0 %2110
      %2112 = vrot.lane.b32.xlu0 %v2080, 112
      %v2113 = vpop.permute.xlu0 %2112
      %2114 = vrot.lane.b32.xlu0 %v2081, 112
      %v2115 = vpop.permute.xlu0 %2114
      %2116 = vrot.lane.b32.xlu0 %v2082, 112
      %v2117 = vpop.permute.xlu0 %2116
      %2118 = vrot.lane.b32.xlu0 %v2083, 112
      %v2119 = vpop.permute.xlu0 %2118
      %v2120 = vsel %vm631, %v2097, %v2099
      %v2121 = vsel %vm631, %v2099, %v2101
      %v2122 = vsel %vm631, %v2103, %v2105
      %v2123 = vsel %vm631, %v2105, %v2107
      %v2124 = vsel %vm631, %v2109, %v2111
      %v2125 = vsel %vm631, %v2111, %v2113
      %v2126 = vsel %vm631, %v2115, %v2117
      %v2127 = vsel %vm631, %v2117, %v2119
      %v2140 = vadd.f32 %v2044, %v2120
      %v2141 = vadd.f32 %v2045, %v2121
      %v2142 = vadd.f32 %v2046, %v2101
      %v2143 = vadd.f32 %v2047, %v2122
      %v2144 = vadd.f32 %v2048, %v2123
      %v2145 = vadd.f32 %v2049, %v2107
      %v2146 = vadd.f32 %v2050, %v2124
      %v2147 = vadd.f32 %v2051, %v2125
      %v2148 = vadd.f32 %v2052, %v2113
      %v2149 = vadd.f32 %v2053, %v2126
      %v2150 = vadd.f32 %v2054, %v2127
      %v2151 = vadd.f32 %v2055, %v2119
      %2152 = vset.pattern.permute.xlu0 13
      %2153 = vperm.xlu0 %2152, %v507
      %v2154 = vpop.permute.xlu0 %2153
      %2156 = vset.pattern.permute.xlu0 13
      %2157 = vperm.xlu0 %2156, %v508
      %v2158 = vpop.permute.xlu0 %2157
      %2160 = vset.pattern.permute.xlu0 13
      %2161 = vperm.xlu0 %2160, %v509
      %v2162 = vpop.permute.xlu0 %2161
      %2164 = vset.pattern.permute.xlu0 13
      %2165 = vperm.xlu0 %2164, %v510
      %v2166 = vpop.permute.xlu0 %2165
      %v2168 = vmul.f32 %v511, %v2154
      %v2169 = vmul.f32 %v512, %v2154
      %v2170 = vmul.f32 %v513, %v2154
      %v2171 = vmul.f32 %v514, %v2158
      %v2172 = vmul.f32 %v515, %v2158
      %v2173 = vmul.f32 %v516, %v2158
      %v2174 = vmul.f32 %v517, %v2162
      %v2175 = vmul.f32 %v518, %v2162
      %v2176 = vmul.f32 %v519, %v2162
      %v2177 = vmul.f32 %v520, %v2166
      %v2178 = vmul.f32 %v521, %v2166
      %v2179 = vmul.f32 %v522, %v2166
      %2192 = vrot.lane.b32.xlu0 %v2168, 96
      %v2193 = vpop.permute.xlu0 %2192
      %2194 = vrot.lane.b32.xlu0 %v2169, 96
      %v2195 = vpop.permute.xlu0 %2194
      %2196 = vrot.lane.b32.xlu0 %v2170, 96
      %v2197 = vpop.permute.xlu0 %2196
      %2198 = vrot.lane.b32.xlu0 %v2171, 96
      %v2199 = vpop.permute.xlu0 %2198
      %2200 = vrot.lane.b32.xlu0 %v2172, 96
      %v2201 = vpop.permute.xlu0 %2200
      %2202 = vrot.lane.b32.xlu0 %v2173, 96
      %v2203 = vpop.permute.xlu0 %2202
      %2204 = vrot.lane.b32.xlu0 %v2174, 96
      %v2205 = vpop.permute.xlu0 %2204
      %2206 = vrot.lane.b32.xlu0 %v2175, 96
      %v2207 = vpop.permute.xlu0 %2206
      %2208 = vrot.lane.b32.xlu0 %v2176, 96
      %v2209 = vpop.permute.xlu0 %2208
      %2210 = vrot.lane.b32.xlu0 %v2177, 96
      %v2211 = vpop.permute.xlu0 %2210
      %2212 = vrot.lane.b32.xlu0 %v2178, 96
      %v2213 = vpop.permute.xlu0 %2212
      %2214 = vrot.lane.b32.xlu0 %v2179, 96
      %v2215 = vpop.permute.xlu0 %2214
      %v2216 = vsel %vm728, %v2193, %v2195
      %v2217 = vsel %vm728, %v2195, %v2197
      %v2218 = vsel %vm728, %v2199, %v2201
      %v2219 = vsel %vm728, %v2201, %v2203
      %v2220 = vsel %vm728, %v2205, %v2207
      %v2221 = vsel %vm728, %v2207, %v2209
      %v2222 = vsel %vm728, %v2211, %v2213
      %v2223 = vsel %vm728, %v2213, %v2215
      %v2236 = vadd.f32 %v2140, %v2216
      %v2237 = vadd.f32 %v2141, %v2217
      %v2238 = vadd.f32 %v2142, %v2197
      %v2239 = vadd.f32 %v2143, %v2218
      %v2240 = vadd.f32 %v2144, %v2219
      %v2241 = vadd.f32 %v2145, %v2203
      %v2242 = vadd.f32 %v2146, %v2220
      %v2243 = vadd.f32 %v2147, %v2221
      %v2244 = vadd.f32 %v2148, %v2209
      %v2245 = vadd.f32 %v2149, %v2222
      %v2246 = vadd.f32 %v2150, %v2223
      %v2247 = vadd.f32 %v2151, %v2215
      %2248 = vset.pattern.permute.xlu0 18
      %2249 = vperm.xlu0 %2248, %v507
      %v2250 = vpop.permute.xlu0 %2249
      %2252 = vset.pattern.permute.xlu0 18
      %2253 = vperm.xlu0 %2252, %v508
      %v2254 = vpop.permute.xlu0 %2253
      %2256 = vset.pattern.permute.xlu0 18
      %2257 = vperm.xlu0 %2256, %v509
      %v2258 = vpop.permute.xlu0 %2257
      %2260 = vset.pattern.permute.xlu0 18
      %2261 = vperm.xlu0 %2260, %v510
      %v2262 = vpop.permute.xlu0 %2261
      %v2264 = vmul.f32 %v511, %v2250
      %v2265 = vmul.f32 %v512, %v2250
      %v2266 = vmul.f32 %v513, %v2250
      %v2267 = vmul.f32 %v514, %v2254
      %v2268 = vmul.f32 %v515, %v2254
      %v2269 = vmul.f32 %v516, %v2254
      %v2270 = vmul.f32 %v517, %v2258
      %v2271 = vmul.f32 %v518, %v2258
      %v2272 = vmul.f32 %v519, %v2258
      %v2273 = vmul.f32 %v520, %v2262
      %v2274 = vmul.f32 %v521, %v2262
      %v2275 = vmul.f32 %v522, %v2262
      %2288 = vrot.lane.b32.xlu0 %v2264, 80
      %v2289 = vpop.permute.xlu0 %2288
      %2290 = vrot.lane.b32.xlu0 %v2265, 80
      %v2291 = vpop.permute.xlu0 %2290
      %2292 = vrot.lane.b32.xlu0 %v2266, 80
      %v2293 = vpop.permute.xlu0 %2292
      %2294 = vrot.lane.b32.xlu0 %v2267, 80
      %v2295 = vpop.permute.xlu0 %2294
      %2296 = vrot.lane.b32.xlu0 %v2268, 80
      %v2297 = vpop.permute.xlu0 %2296
      %2298 = vrot.lane.b32.xlu0 %v2269, 80
      %v2299 = vpop.permute.xlu0 %2298
      %2300 = vrot.lane.b32.xlu0 %v2270, 80
      %v2301 = vpop.permute.xlu0 %2300
      %2302 = vrot.lane.b32.xlu0 %v2271, 80
      %v2303 = vpop.permute.xlu0 %2302
      %2304 = vrot.lane.b32.xlu0 %v2272, 80
      %v2305 = vpop.permute.xlu0 %2304
      %2306 = vrot.lane.b32.xlu0 %v2273, 80
      %v2307 = vpop.permute.xlu0 %2306
      %2308 = vrot.lane.b32.xlu0 %v2274, 80
      %v2309 = vpop.permute.xlu0 %2308
      %2310 = vrot.lane.b32.xlu0 %v2275, 80
      %v2311 = vpop.permute.xlu0 %2310
      %v2312 = vsel %vm825, %v2289, %v2291
      %v2313 = vsel %vm825, %v2291, %v2293
      %v2314 = vsel %vm825, %v2295, %v2297
      %v2315 = vsel %vm825, %v2297, %v2299
      %v2316 = vsel %vm825, %v2301, %v2303
      %v2317 = vsel %vm825, %v2303, %v2305
      %v2318 = vsel %vm825, %v2307, %v2309
      %v2319 = vsel %vm825, %v2309, %v2311
      %v2332 = vadd.f32 %v2236, %v2312
      %v2333 = vadd.f32 %v2237, %v2313
      %v2334 = vadd.f32 %v2238, %v2293
      %v2335 = vadd.f32 %v2239, %v2314
      %v2336 = vadd.f32 %v2240, %v2315
      %v2337 = vadd.f32 %v2241, %v2299
      %v2338 = vadd.f32 %v2242, %v2316
      %v2339 = vadd.f32 %v2243, %v2317
      %v2340 = vadd.f32 %v2244, %v2305
      %v2341 = vadd.f32 %v2245, %v2318
      %v2342 = vadd.f32 %v2246, %v2319
      %v2343 = vadd.f32 %v2247, %v2311
      %2344 = vset.pattern.permute.xlu0 23
      %2345 = vperm.xlu0 %2344, %v507
      %v2346 = vpop.permute.xlu0 %2345
      %2348 = vset.pattern.permute.xlu0 23
      %2349 = vperm.xlu0 %2348, %v508
      %v2350 = vpop.permute.xlu0 %2349
      %2352 = vset.pattern.permute.xlu0 23
      %2353 = vperm.xlu0 %2352, %v509
      %v2354 = vpop.permute.xlu0 %2353
      %2356 = vset.pattern.permute.xlu0 23
      %2357 = vperm.xlu0 %2356, %v510
      %v2358 = vpop.permute.xlu0 %2357
      %v2360 = vmul.f32 %v511, %v2346
      %v2361 = vmul.f32 %v512, %v2346
      %v2362 = vmul.f32 %v513, %v2346
      %v2363 = vmul.f32 %v514, %v2350
      %v2364 = vmul.f32 %v515, %v2350
      %v2365 = vmul.f32 %v516, %v2350
      %v2366 = vmul.f32 %v517, %v2354
      %v2367 = vmul.f32 %v518, %v2354
      %v2368 = vmul.f32 %v519, %v2354
      %v2369 = vmul.f32 %v520, %v2358
      %v2370 = vmul.f32 %v521, %v2358
      %v2371 = vmul.f32 %v522, %v2358
      %2384 = vrot.lane.b32.xlu0 %v2360, 64
      %v2385 = vpop.permute.xlu0 %2384
      %2386 = vrot.lane.b32.xlu0 %v2361, 64
      %v2387 = vpop.permute.xlu0 %2386
      %2388 = vrot.lane.b32.xlu0 %v2362, 64
      %v2389 = vpop.permute.xlu0 %2388
      %2390 = vrot.lane.b32.xlu0 %v2363, 64
      %v2391 = vpop.permute.xlu0 %2390
      %2392 = vrot.lane.b32.xlu0 %v2364, 64
      %v2393 = vpop.permute.xlu0 %2392
      %2394 = vrot.lane.b32.xlu0 %v2365, 64
      %v2395 = vpop.permute.xlu0 %2394
      %2396 = vrot.lane.b32.xlu0 %v2366, 64
      %v2397 = vpop.permute.xlu0 %2396
      %2398 = vrot.lane.b32.xlu0 %v2367, 64
      %v2399 = vpop.permute.xlu0 %2398
      %2400 = vrot.lane.b32.xlu0 %v2368, 64
      %v2401 = vpop.permute.xlu0 %2400
      %2402 = vrot.lane.b32.xlu0 %v2369, 64
      %v2403 = vpop.permute.xlu0 %2402
      %2404 = vrot.lane.b32.xlu0 %v2370, 64
      %v2405 = vpop.permute.xlu0 %2404
      %2406 = vrot.lane.b32.xlu0 %v2371, 64
      %v2407 = vpop.permute.xlu0 %2406
      %v2408 = vsel %vm922, %v2385, %v2387
      %v2409 = vsel %vm922, %v2387, %v2389
      %v2410 = vsel %vm922, %v2391, %v2393
      %v2411 = vsel %vm922, %v2393, %v2395
      %v2412 = vsel %vm922, %v2397, %v2399
      %v2413 = vsel %vm922, %v2399, %v2401
      %v2414 = vsel %vm922, %v2403, %v2405
      %v2415 = vsel %vm922, %v2405, %v2407
      %v2428 = vadd.f32 %v2332, %v2408
      %v2429 = vadd.f32 %v2333, %v2409
      %v2430 = vadd.f32 %v2334, %v2389
      %v2431 = vadd.f32 %v2335, %v2410
      %v2432 = vadd.f32 %v2336, %v2411
      %v2433 = vadd.f32 %v2337, %v2395
      %v2434 = vadd.f32 %v2338, %v2412
      %v2435 = vadd.f32 %v2339, %v2413
      %v2436 = vadd.f32 %v2340, %v2401
      %v2437 = vadd.f32 %v2341, %v2414
      %v2438 = vadd.f32 %v2342, %v2415
      %v2439 = vadd.f32 %v2343, %v2407
      %s2440 = scalar_lea.vmem %s1, 3
      %v2441 = vld [vmem:[%s2440] ss:$8 sm:$0x3]
      %v2443 = vlaneseq
      %v2444 = vshrl.u32 %v2443, 7
      %v2445 = vsub.s32 0, %v2444
      %v2446 = vrot.slane %v2441, %v2445
      %v2447 = vlaneseq
      %v2448 = vshrl.u32 %v2447, 7
      %v2449 = vsub.s32 1, %v2448
      %v2450 = vrot.slane %v2441, %v2449
      %2451 = vrot.lane.b32.xlu0 %v2446, 17
      %v2452 = vpop.permute.xlu0 %2451
      %2453 = vrot.lane.b32.xlu0 %v2450, 17
      %v2454 = vpop.permute.xlu0 %2453
      %vm2455 = vcmask 138240
      %v2456 = vsel %vm2455, %v2452, %v2454
      %v2460 = vmul.f32 %v2428, %v2452
      %v2461 = vmul.f32 %v2429, %v2456
      %v2462 = vmul.f32 %v2430, %v2454
      %v2463 = vmul.f32 %v2431, %v2452
      %v2464 = vmul.f32 %v2432, %v2456
      %v2465 = vmul.f32 %v2433, %v2454
      %v2466 = vmul.f32 %v2434, %v2452
      %v2467 = vmul.f32 %v2435, %v2456
      %v2468 = vmul.f32 %v2436, %v2454
      %v2469 = vmul.f32 %v2437, %v2452
      %v2470 = vmul.f32 %v2438, %v2456
      %v2471 = vmul.f32 %v2439, %v2454
      %2484 = vrot.lane.b32.xlu0 %v2460, 125
      %v2485 = vpop.permute.xlu0 %2484
      %2486 = vrot.lane.b32.xlu0 %v2461, 125
      %v2487 = vpop.permute.xlu0 %2486
      %2488 = vrot.lane.b32.xlu0 %v2462, 125
      %v2489 = vpop.permute.xlu0 %2488
      %2490 = vrot.lane.b32.xlu0 %v2463, 125
      %v2491 = vpop.permute.xlu0 %2490
      %2492 = vrot.lane.b32.xlu0 %v2464, 125
      %v2493 = vpop.permute.xlu0 %2492
      %2494 = vrot.lane.b32.xlu0 %v2465, 125
      %v2495 = vpop.permute.xlu0 %2494
      %2496 = vrot.lane.b32.xlu0 %v2466, 125
      %v2497 = vpop.permute.xlu0 %2496
      %2498 = vrot.lane.b32.xlu0 %v2467, 125
      %v2499 = vpop.permute.xlu0 %2498
      %2500 = vrot.lane.b32.xlu0 %v2468, 125
      %v2501 = vpop.permute.xlu0 %2500
      %2502 = vrot.lane.b32.xlu0 %v2469, 125
      %v2503 = vpop.permute.xlu0 %2502
      %2504 = vrot.lane.b32.xlu0 %v2470, 125
      %v2505 = vpop.permute.xlu0 %2504
      %2506 = vrot.lane.b32.xlu0 %v2471, 125
      %v2507 = vpop.permute.xlu0 %2506
      %vm2508 = vcmask 1022976
      %v2509 = vsel %vm2508, %v2485, %v2487
      %v2510 = vsel %vm2508, %v2487, %v2489
      %v2511 = vsel %vm2508, %v2491, %v2493
      %v2512 = vsel %vm2508, %v2493, %v2495
      %v2513 = vsel %vm2508, %v2497, %v2499
      %v2514 = vsel %vm2508, %v2499, %v2501
      %v2515 = vsel %vm2508, %v2503, %v2505
      %v2516 = vsel %vm2508, %v2505, %v2507
      %v2529 = vadd.f32 %v2004, %v2509
      %v2530 = vadd.f32 %v2005, %v2510
      %v2531 = vadd.f32 %v2006, %v2489
      %v2532 = vadd.f32 %v2007, %v2511
      %v2533 = vadd.f32 %v2008, %v2512
      %v2534 = vadd.f32 %v2009, %v2495
      %v2535 = vadd.f32 %v2010, %v2513
      %v2536 = vadd.f32 %v2011, %v2514
      %v2537 = vadd.f32 %v2012, %v2501
      %v2538 = vadd.f32 %v2013, %v2515
      %v2539 = vadd.f32 %v2014, %v2516
      %v2540 = vadd.f32 %v2015, %v2507
      %2541 = vset.pattern.permute.xlu0 4
      %2542 = vperm.xlu0 %2541, %v507
      %v2543 = vpop.permute.xlu0 %2542
      %2545 = vset.pattern.permute.xlu0 4
      %2546 = vperm.xlu0 %2545, %v508
      %v2547 = vpop.permute.xlu0 %2546
      %2549 = vset.pattern.permute.xlu0 4
      %2550 = vperm.xlu0 %2549, %v509
      %v2551 = vpop.permute.xlu0 %2550
      %2553 = vset.pattern.permute.xlu0 4
      %2554 = vperm.xlu0 %2553, %v510
      %v2555 = vpop.permute.xlu0 %2554
      %v2557 = vmul.f32 %v511, %v2543
      %v2558 = vmul.f32 %v512, %v2543
      %v2559 = vmul.f32 %v513, %v2543
      %v2560 = vmul.f32 %v514, %v2547
      %v2561 = vmul.f32 %v515, %v2547
      %v2562 = vmul.f32 %v516, %v2547
      %v2563 = vmul.f32 %v517, %v2551
      %v2564 = vmul.f32 %v518, %v2551
      %v2565 = vmul.f32 %v519, %v2551
      %v2566 = vmul.f32 %v520, %v2555
      %v2567 = vmul.f32 %v521, %v2555
      %v2568 = vmul.f32 %v522, %v2555
      %v2569 = vadd.f32 %v2557, 0.0
      %v2570 = vadd.f32 %v2558, 0.0
      %v2571 = vadd.f32 %v2559, 0.0
      %v2572 = vadd.f32 %v2560, 0.0
      %v2573 = vadd.f32 %v2561, 0.0
      %v2574 = vadd.f32 %v2562, 0.0
      %v2575 = vadd.f32 %v2563, 0.0
      %v2576 = vadd.f32 %v2564, 0.0
      %v2577 = vadd.f32 %v2565, 0.0
      %v2578 = vadd.f32 %v2566, 0.0
      %v2579 = vadd.f32 %v2567, 0.0
      %v2580 = vadd.f32 %v2568, 0.0
      %2581 = vset.pattern.permute.xlu0 9
      %2582 = vperm.xlu0 %2581, %v507
      %v2583 = vpop.permute.xlu0 %2582
      %2585 = vset.pattern.permute.xlu0 9
      %2586 = vperm.xlu0 %2585, %v508
      %v2587 = vpop.permute.xlu0 %2586
      %2589 = vset.pattern.permute.xlu0 9
      %2590 = vperm.xlu0 %2589, %v509
      %v2591 = vpop.permute.xlu0 %2590
      %2593 = vset.pattern.permute.xlu0 9
      %2594 = vperm.xlu0 %2593, %v510
      %v2595 = vpop.permute.xlu0 %2594
      %v2597 = vmul.f32 %v511, %v2583
      %v2598 = vmul.f32 %v512, %v2583
      %v2599 = vmul.f32 %v513, %v2583
      %v2600 = vmul.f32 %v514, %v2587
      %v2601 = vmul.f32 %v515, %v2587
      %v2602 = vmul.f32 %v516, %v2587
      %v2603 = vmul.f32 %v517, %v2591
      %v2604 = vmul.f32 %v518, %v2591
      %v2605 = vmul.f32 %v519, %v2591
      %v2606 = vmul.f32 %v520, %v2595
      %v2607 = vmul.f32 %v521, %v2595
      %v2608 = vmul.f32 %v522, %v2595
      %2621 = vrot.lane.b32.xlu0 %v2597, 112
      %v2622 = vpop.permute.xlu0 %2621
      %2623 = vrot.lane.b32.xlu0 %v2598, 112
      %v2624 = vpop.permute.xlu0 %2623
      %2625 = vrot.lane.b32.xlu0 %v2599, 112
      %v2626 = vpop.permute.xlu0 %2625
      %2627 = vrot.lane.b32.xlu0 %v2600, 112
      %v2628 = vpop.permute.xlu0 %2627
      %2629 = vrot.lane.b32.xlu0 %v2601, 112
      %v2630 = vpop.permute.xlu0 %2629
      %2631 = vrot.lane.b32.xlu0 %v2602, 112
      %v2632 = vpop.permute.xlu0 %2631
      %2633 = vrot.lane.b32.xlu0 %v2603, 112
      %v2634 = vpop.permute.xlu0 %2633
      %2635 = vrot.lane.b32.xlu0 %v2604, 112
      %v2636 = vpop.permute.xlu0 %2635
      %2637 = vrot.lane.b32.xlu0 %v2605, 112
      %v2638 = vpop.permute.xlu0 %2637
      %2639 = vrot.lane.b32.xlu0 %v2606, 112
      %v2640 = vpop.permute.xlu0 %2639
      %2641 = vrot.lane.b32.xlu0 %v2607, 112
      %v2642 = vpop.permute.xlu0 %2641
      %2643 = vrot.lane.b32.xlu0 %v2608, 112
      %v2644 = vpop.permute.xlu0 %2643
      %v2645 = vsel %vm631, %v2622, %v2624
      %v2646 = vsel %vm631, %v2624, %v2626
      %v2647 = vsel %vm631, %v2628, %v2630
      %v2648 = vsel %vm631, %v2630, %v2632
      %v2649 = vsel %vm631, %v2634, %v2636
      %v2650 = vsel %vm631, %v2636, %v2638
      %v2651 = vsel %vm631, %v2640, %v2642
      %v2652 = vsel %vm631, %v2642, %v2644
      %v2665 = vadd.f32 %v2569, %v2645
      %v2666 = vadd.f32 %v2570, %v2646
      %v2667 = vadd.f32 %v2571, %v2626
      %v2668 = vadd.f32 %v2572, %v2647
      %v2669 = vadd.f32 %v2573, %v2648
      %v2670 = vadd.f32 %v2574, %v2632
      %v2671 = vadd.f32 %v2575, %v2649
      %v2672 = vadd.f32 %v2576, %v2650
      %v2673 = vadd.f32 %v2577, %v2638
      %v2674 = vadd.f32 %v2578, %v2651
      %v2675 = vadd.f32 %v2579, %v2652
      %v2676 = vadd.f32 %v2580, %v2644
      %2677 = vset.pattern.permute.xlu0 14
      %2678 = vperm.xlu0 %2677, %v507
      %v2679 = vpop.permute.xlu0 %2678
      %2681 = vset.pattern.permute.xlu0 14
      %2682 = vperm.xlu0 %2681, %v508
      %v2683 = vpop.permute.xlu0 %2682
      %2685 = vset.pattern.permute.xlu0 14
      %2686 = vperm.xlu0 %2685, %v509
      %v2687 = vpop.permute.xlu0 %2686
      %2689 = vset.pattern.permute.xlu0 14
      %2690 = vperm.xlu0 %2689, %v510
      %v2691 = vpop.permute.xlu0 %2690
      %v2693 = vmul.f32 %v511, %v2679
      %v2694 = vmul.f32 %v512, %v2679
      %v2695 = vmul.f32 %v513, %v2679
      %v2696 = vmul.f32 %v514, %v2683
      %v2697 = vmul.f32 %v515, %v2683
      %v2698 = vmul.f32 %v516, %v2683
      %v2699 = vmul.f32 %v517, %v2687
      %v2700 = vmul.f32 %v518, %v2687
      %v2701 = vmul.f32 %v519, %v2687
      %v2702 = vmul.f32 %v520, %v2691
      %v2703 = vmul.f32 %v521, %v2691
      %v2704 = vmul.f32 %v522, %v2691
      %2717 = vrot.lane.b32.xlu0 %v2693, 96
      %v2718 = vpop.permute.xlu0 %2717
      %2719 = vrot.lane.b32.xlu0 %v2694, 96
      %v2720 = vpop.permute.xlu0 %2719
      %2721 = vrot.lane.b32.xlu0 %v2695, 96
      %v2722 = vpop.permute.xlu0 %2721
      %2723 = vrot.lane.b32.xlu0 %v2696, 96
      %v2724 = vpop.permute.xlu0 %2723
      %2725 = vrot.lane.b32.xlu0 %v2697, 96
      %v2726 = vpop.permute.xlu0 %2725
      %2727 = vrot.lane.b32.xlu0 %v2698, 96
      %v2728 = vpop.permute.xlu0 %2727
      %2729 = vrot.lane.b32.xlu0 %v2699, 96
      %v2730 = vpop.permute.xlu0 %2729
      %2731 = vrot.lane.b32.xlu0 %v2700, 96
      %v2732 = vpop.permute.xlu0 %2731
      %2733 = vrot.lane.b32.xlu0 %v2701, 96
      %v2734 = vpop.permute.xlu0 %2733
      %2735 = vrot.lane.b32.xlu0 %v2702, 96
      %v2736 = vpop.permute.xlu0 %2735
      %2737 = vrot.lane.b32.xlu0 %v2703, 96
      %v2738 = vpop.permute.xlu0 %2737
      %2739 = vrot.lane.b32.xlu0 %v2704, 96
      %v2740 = vpop.permute.xlu0 %2739
      %v2741 = vsel %vm728, %v2718, %v2720
      %v2742 = vsel %vm728, %v2720, %v2722
      %v2743 = vsel %vm728, %v2724, %v2726
      %v2744 = vsel %vm728, %v2726, %v2728
      %v2745 = vsel %vm728, %v2730, %v2732
      %v2746 = vsel %vm728, %v2732, %v2734
      %v2747 = vsel %vm728, %v2736, %v2738
      %v2748 = vsel %vm728, %v2738, %v2740
      %v2761 = vadd.f32 %v2665, %v2741
      %v2762 = vadd.f32 %v2666, %v2742
      %v2763 = vadd.f32 %v2667, %v2722
      %v2764 = vadd.f32 %v2668, %v2743
      %v2765 = vadd.f32 %v2669, %v2744
      %v2766 = vadd.f32 %v2670, %v2728
      %v2767 = vadd.f32 %v2671, %v2745
      %v2768 = vadd.f32 %v2672, %v2746
      %v2769 = vadd.f32 %v2673, %v2734
      %v2770 = vadd.f32 %v2674, %v2747
      %v2771 = vadd.f32 %v2675, %v2748
      %v2772 = vadd.f32 %v2676, %v2740
      %2773 = vset.pattern.permute.xlu0 19
      %2774 = vperm.xlu0 %2773, %v507
      %v2775 = vpop.permute.xlu0 %2774
      %2777 = vset.pattern.permute.xlu0 19
      %2778 = vperm.xlu0 %2777, %v508
      %v2779 = vpop.permute.xlu0 %2778
      %2781 = vset.pattern.permute.xlu0 19
      %2782 = vperm.xlu0 %2781, %v509
      %v2783 = vpop.permute.xlu0 %2782
      %2785 = vset.pattern.permute.xlu0 19
      %2786 = vperm.xlu0 %2785, %v510
      %v2787 = vpop.permute.xlu0 %2786
      %v2789 = vmul.f32 %v511, %v2775
      %v2790 = vmul.f32 %v512, %v2775
      %v2791 = vmul.f32 %v513, %v2775
      %v2792 = vmul.f32 %v514, %v2779
      %v2793 = vmul.f32 %v515, %v2779
      %v2794 = vmul.f32 %v516, %v2779
      %v2795 = vmul.f32 %v517, %v2783
      %v2796 = vmul.f32 %v518, %v2783
      %v2797 = vmul.f32 %v519, %v2783
      %v2798 = vmul.f32 %v520, %v2787
      %v2799 = vmul.f32 %v521, %v2787
      %v2800 = vmul.f32 %v522, %v2787
      %2813 = vrot.lane.b32.xlu0 %v2789, 80
      %v2814 = vpop.permute.xlu0 %2813
      %2815 = vrot.lane.b32.xlu0 %v2790, 80
      %v2816 = vpop.permute.xlu0 %2815
      %2817 = vrot.lane.b32.xlu0 %v2791, 80
      %v2818 = vpop.permute.xlu0 %2817
      %2819 = vrot.lane.b32.xlu0 %v2792, 80
      %v2820 = vpop.permute.xlu0 %2819
      %2821 = vrot.lane.b32.xlu0 %v2793, 80
      %v2822 = vpop.permute.xlu0 %2821
      %2823 = vrot.lane.b32.xlu0 %v2794, 80
      %v2824 = vpop.permute.xlu0 %2823
      %2825 = vrot.lane.b32.xlu0 %v2795, 80
      %v2826 = vpop.permute.xlu0 %2825
      %2827 = vrot.lane.b32.xlu0 %v2796, 80
      %v2828 = vpop.permute.xlu0 %2827
      %2829 = vrot.lane.b32.xlu0 %v2797, 80
      %v2830 = vpop.permute.xlu0 %2829
      %2831 = vrot.lane.b32.xlu0 %v2798, 80
      %v2832 = vpop.permute.xlu0 %2831
      %2833 = vrot.lane.b32.xlu0 %v2799, 80
      %v2834 = vpop.permute.xlu0 %2833
      %2835 = vrot.lane.b32.xlu0 %v2800, 80
      %v2836 = vpop.permute.xlu0 %2835
      %v2837 = vsel %vm825, %v2814, %v2816
      %v2838 = vsel %vm825, %v2816, %v2818
      %v2839 = vsel %vm825, %v2820, %v2822
      %v2840 = vsel %vm825, %v2822, %v2824
      %v2841 = vsel %vm825, %v2826, %v2828
      %v2842 = vsel %vm825, %v2828, %v2830
      %v2843 = vsel %vm825, %v2832, %v2834
      %v2844 = vsel %vm825, %v2834, %v2836
      %v2857 = vadd.f32 %v2761, %v2837
      %v2858 = vadd.f32 %v2762, %v2838
      %v2859 = vadd.f32 %v2763, %v2818
      %v2860 = vadd.f32 %v2764, %v2839
      %v2861 = vadd.f32 %v2765, %v2840
      %v2862 = vadd.f32 %v2766, %v2824
      %v2863 = vadd.f32 %v2767, %v2841
      %v2864 = vadd.f32 %v2768, %v2842
      %v2865 = vadd.f32 %v2769, %v2830
      %v2866 = vadd.f32 %v2770, %v2843
      %v2867 = vadd.f32 %v2771, %v2844
      %v2868 = vadd.f32 %v2772, %v2836
      %2869 = vset.pattern.permute.xlu0 24
      %2870 = vperm.xlu0 %2869, %v507
      %v2871 = vpop.permute.xlu0 %2870
      %2873 = vset.pattern.permute.xlu0 24
      %2874 = vperm.xlu0 %2873, %v508
      %v2875 = vpop.permute.xlu0 %2874
      %2877 = vset.pattern.permute.xlu0 24
      %2878 = vperm.xlu0 %2877, %v509
      %v2879 = vpop.permute.xlu0 %2878
      %2881 = vset.pattern.permute.xlu0 24
      %2882 = vperm.xlu0 %2881, %v510
      %v2883 = vpop.permute.xlu0 %2882
      %v2885 = vmul.f32 %v511, %v2871
      %v2886 = vmul.f32 %v512, %v2871
      %v2887 = vmul.f32 %v513, %v2871
      %v2888 = vmul.f32 %v514, %v2875
      %v2889 = vmul.f32 %v515, %v2875
      %v2890 = vmul.f32 %v516, %v2875
      %v2891 = vmul.f32 %v517, %v2879
      %v2892 = vmul.f32 %v518, %v2879
      %v2893 = vmul.f32 %v519, %v2879
      %v2894 = vmul.f32 %v520, %v2883
      %v2895 = vmul.f32 %v521, %v2883
      %v2896 = vmul.f32 %v522, %v2883
      %2909 = vrot.lane.b32.xlu0 %v2885, 64
      %v2910 = vpop.permute.xlu0 %2909
      %2911 = vrot.lane.b32.xlu0 %v2886, 64
      %v2912 = vpop.permute.xlu0 %2911
      %2913 = vrot.lane.b32.xlu0 %v2887, 64
      %v2914 = vpop.permute.xlu0 %2913
      %2915 = vrot.lane.b32.xlu0 %v2888, 64
      %v2916 = vpop.permute.xlu0 %2915
      %2917 = vrot.lane.b32.xlu0 %v2889, 64
      %v2918 = vpop.permute.xlu0 %2917
      %2919 = vrot.lane.b32.xlu0 %v2890, 64
      %v2920 = vpop.permute.xlu0 %2919
      %2921 = vrot.lane.b32.xlu0 %v2891, 64
      %v2922 = vpop.permute.xlu0 %2921
      %2923 = vrot.lane.b32.xlu0 %v2892, 64
      %v2924 = vpop.permute.xlu0 %2923
      %2925 = vrot.lane.b32.xlu0 %v2893, 64
      %v2926 = vpop.permute.xlu0 %2925
      %2927 = vrot.lane.b32.xlu0 %v2894, 64
      %v2928 = vpop.permute.xlu0 %2927
      %2929 = vrot.lane.b32.xlu0 %v2895, 64
      %v2930 = vpop.permute.xlu0 %2929
      %2931 = vrot.lane.b32.xlu0 %v2896, 64
      %v2932 = vpop.permute.xlu0 %2931
      %v2933 = vsel %vm922, %v2910, %v2912
      %v2934 = vsel %vm922, %v2912, %v2914
      %v2935 = vsel %vm922, %v2916, %v2918
      %v2936 = vsel %vm922, %v2918, %v2920
      %v2937 = vsel %vm922, %v2922, %v2924
      %v2938 = vsel %vm922, %v2924, %v2926
      %v2939 = vsel %vm922, %v2928, %v2930
      %v2940 = vsel %vm922, %v2930, %v2932
      %v2953 = vadd.f32 %v2857, %v2933
      %v2954 = vadd.f32 %v2858, %v2934
      %v2955 = vadd.f32 %v2859, %v2914
      %v2956 = vadd.f32 %v2860, %v2935
      %v2957 = vadd.f32 %v2861, %v2936
      %v2958 = vadd.f32 %v2862, %v2920
      %v2959 = vadd.f32 %v2863, %v2937
      %v2960 = vadd.f32 %v2864, %v2938
      %v2961 = vadd.f32 %v2865, %v2926
      %v2962 = vadd.f32 %v2866, %v2939
      %v2963 = vadd.f32 %v2867, %v2940
      %v2964 = vadd.f32 %v2868, %v2932
      %s2965 = scalar_lea.vmem %s1, 4
      %v2966 = vld [vmem:[%s2965] ss:$8 sm:$0x3]
      %v2968 = vlaneseq
      %v2969 = vshrl.u32 %v2968, 7
      %v2970 = vsub.s32 0, %v2969
      %v2971 = vrot.slane %v2966, %v2970
      %v2972 = vlaneseq
      %v2973 = vshrl.u32 %v2972, 7
      %v2974 = vsub.s32 1, %v2973
      %v2975 = vrot.slane %v2966, %v2974
      %2976 = vrot.lane.b32.xlu0 %v2971, 18
      %v2977 = vpop.permute.xlu0 %2976
      %2978 = vrot.lane.b32.xlu0 %v2975, 18
      %v2979 = vpop.permute.xlu0 %2978
      %vm2980 = vcmask 146432
      %v2981 = vsel %vm2980, %v2977, %v2979
      %v2985 = vmul.f32 %v2953, %v2977
      %v2986 = vmul.f32 %v2954, %v2981
      %v2987 = vmul.f32 %v2955, %v2979
      %v2988 = vmul.f32 %v2956, %v2977
      %v2989 = vmul.f32 %v2957, %v2981
      %v2990 = vmul.f32 %v2958, %v2979
      %v2991 = vmul.f32 %v2959, %v2977
      %v2992 = vmul.f32 %v2960, %v2981
      %v2993 = vmul.f32 %v2961, %v2979
      %v2994 = vmul.f32 %v2962, %v2977
      %v2995 = vmul.f32 %v2963, %v2981
      %v2996 = vmul.f32 %v2964, %v2979
      %3009 = vrot.lane.b32.xlu0 %v2985, 124
      %v3010 = vpop.permute.xlu0 %3009
      %3011 = vrot.lane.b32.xlu0 %v2986, 124
      %v3012 = vpop.permute.xlu0 %3011
      %3013 = vrot.lane.b32.xlu0 %v2987, 124
      %v3014 = vpop.permute.xlu0 %3013
      %3015 = vrot.lane.b32.xlu0 %v2988, 124
      %v3016 = vpop.permute.xlu0 %3015
      %3017 = vrot.lane.b32.xlu0 %v2989, 124
      %v3018 = vpop.permute.xlu0 %3017
      %3019 = vrot.lane.b32.xlu0 %v2990, 124
      %v3020 = vpop.permute.xlu0 %3019
      %3021 = vrot.lane.b32.xlu0 %v2991, 124
      %v3022 = vpop.permute.xlu0 %3021
      %3023 = vrot.lane.b32.xlu0 %v2992, 124
      %v3024 = vpop.permute.xlu0 %3023
      %3025 = vrot.lane.b32.xlu0 %v2993, 124
      %v3026 = vpop.permute.xlu0 %3025
      %3027 = vrot.lane.b32.xlu0 %v2994, 124
      %v3028 = vpop.permute.xlu0 %3027
      %3029 = vrot.lane.b32.xlu0 %v2995, 124
      %v3030 = vpop.permute.xlu0 %3029
      %3031 = vrot.lane.b32.xlu0 %v2996, 124
      %v3032 = vpop.permute.xlu0 %3031
      %vm3033 = vcmask 1014784
      %v3034 = vsel %vm3033, %v3010, %v3012
      %v3035 = vsel %vm3033, %v3012, %v3014
      %v3036 = vsel %vm3033, %v3016, %v3018
      %v3037 = vsel %vm3033, %v3018, %v3020
      %v3038 = vsel %vm3033, %v3022, %v3024
      %v3039 = vsel %vm3033, %v3024, %v3026
      %v3040 = vsel %vm3033, %v3028, %v3030
      %v3041 = vsel %vm3033, %v3030, %v3032
      %v3054 = vadd.f32 %v2529, %v3034
      %v3055 = vadd.f32 %v2530, %v3035
      %v3056 = vadd.f32 %v2531, %v3014
      %v3057 = vadd.f32 %v2532, %v3036
      %v3058 = vadd.f32 %v2533, %v3037
      %v3059 = vadd.f32 %v2534, %v3020
      %v3060 = vadd.f32 %v2535, %v3038
      %v3061 = vadd.f32 %v2536, %v3039
      %v3062 = vadd.f32 %v2537, %v3026
      %v3063 = vadd.f32 %v2538, %v3040
      %v3064 = vadd.f32 %v2539, %v3041
      %v3065 = vadd.f32 %v2540, %v3032
      %v3066 = vld [vmem:[%s5] sm:$0xff]
      %v3067 = vld [vmem:[%s5 + $0x8] sm:$0xff]
      %v3068 = vld [vmem:[%s5 + $0x10] sm:$0xff]
      %v3069 = vld [vmem:[%s5 + $0x18] sm:$0xff]
      %3071 = vset.pattern.permute.xlu0 0
      %3072 = vperm.xlu0 %3071, %v3066
      %v3073 = vpop.permute.xlu0 %3072
      %3076 = vset.pattern.permute.xlu0 0
      %3077 = vperm.xlu0 %3076, %v3067
      %v3078 = vpop.permute.xlu0 %3077
      %3081 = vset.pattern.permute.xlu0 0
      %3082 = vperm.xlu0 %3081, %v3068
      %v3083 = vpop.permute.xlu0 %3082
      %3086 = vset.pattern.permute.xlu0 0
      %3087 = vperm.xlu0 %3086, %v3069
      %v3088 = vpop.permute.xlu0 %3087
      %v3090 = vadd.f32 %v3054, %v3073
      %v3091 = vadd.f32 %v3055, %v3073
      %v3092 = vadd.f32 %v3056, %v3073
      %v3093 = vadd.f32 %v3057, %v3078
      %v3094 = vadd.f32 %v3058, %v3078
      %v3095 = vadd.f32 %v3059, %v3078
      %v3096 = vadd.f32 %v3060, %v3083
      %v3097 = vadd.f32 %v3061, %v3083
      %v3098 = vadd.f32 %v3062, %v3083
      %v3099 = vadd.f32 %v3063, %v3088
      %v3100 = vadd.f32 %v3064, %v3088
      %v3101 = vadd.f32 %v3065, %v3088
      %3102 = vst.msk [vmem:[#allocation3] sm:$0xff] %vm631, 0.0
      %3103 = vst.msk [vmem:[#allocation3 + $0x20] sm:$0xff] %vm631, 0.0
      %3104 = vst.msk [vmem:[#allocation3 + $0x40] sm:$0xff] %vm631, 0.0
      %3105 = vst.msk [vmem:[#allocation3 + $0x60] sm:$0xff] %vm631, 0.0
      %vm3106 = vcmask 1048448
      %3107 = vst.msk [vmem:[#allocation3 + $0x10] sm:$0xff] %vm3106, 0.0
      %3108 = vst.msk [vmem:[#allocation3 + $0x18] sm:$0xff] %vm728, 0.0
      %3109 = vst.msk [vmem:[#allocation3 + $0x30] sm:$0xff] %vm3106, 0.0
      %3110 = vst.msk [vmem:[#allocation3 + $0x38] sm:$0xff] %vm728, 0.0
      %3111 = vst.msk [vmem:[#allocation3 + $0x50] sm:$0xff] %vm3106, 0.0
      %3112 = vst.msk [vmem:[#allocation3 + $0x58] sm:$0xff] %vm728, 0.0
      %3113 = vst.msk [vmem:[#allocation3 + $0x70] sm:$0xff] %vm3106, 0.0
      %3114 = vst.msk [vmem:[#allocation3 + $0x78] sm:$0xff] %vm728, 0.0
      %3127 = vrot.lane.b32.xlu0 %v3090, 98
      %v3128 = vpop.permute.xlu0 %3127
      %3129 = vrot.lane.b32.xlu0 %v3091, 98
      %v3130 = vpop.permute.xlu0 %3129
      %3131 = vrot.lane.b32.xlu0 %v3092, 98
      %v3132 = vpop.permute.xlu0 %3131
      %3133 = vrot.lane.b32.xlu0 %v3093, 98
      %v3134 = vpop.permute.xlu0 %3133
      %3135 = vrot.lane.b32.xlu0 %v3094, 98
      %v3136 = vpop.permute.xlu0 %3135
      %3137 = vrot.lane.b32.xlu0 %v3095, 98
      %v3138 = vpop.permute.xlu0 %3137
      %3139 = vrot.lane.b32.xlu0 %v3096, 98
      %v3140 = vpop.permute.xlu0 %3139
      %3141 = vrot.lane.b32.xlu0 %v3097, 98
      %v3142 = vpop.permute.xlu0 %3141
      %3143 = vrot.lane.b32.xlu0 %v3098, 98
      %v3144 = vpop.permute.xlu0 %3143
      %3145 = vrot.lane.b32.xlu0 %v3099, 98
      %v3146 = vpop.permute.xlu0 %3145
      %3147 = vrot.lane.b32.xlu0 %v3100, 98
      %v3148 = vpop.permute.xlu0 %3147
      %3149 = vrot.lane.b32.xlu0 %v3101, 98
      %v3150 = vpop.permute.xlu0 %3149
      %vm3151 = vcmask 801792
      %v3152 = vsel %vm3151, %v3128, %v3130
      %v3153 = vsel %vm3151, %v3130, %v3132
      %v3154 = vsel %vm3151, %v3134, %v3136
      %v3155 = vsel %vm3151, %v3136, %v3138
      %v3156 = vsel %vm3151, %v3140, %v3142
      %v3157 = vsel %vm3151, %v3142, %v3144
      %v3158 = vsel %vm3151, %v3146, %v3148
      %v3159 = vsel %vm3151, %v3148, %v3150
      %3172 = vst.msk [vmem:[#allocation3] sm:$0xff] %vm3106, %v3128
      %3173 = vst [vmem:[#allocation3 + $0x8] sm:$0xff] %v3152
      %3174 = vst.msk [vmem:[#allocation3 + $0x10] sm:$0xff] %vm631, %v3153
      %3175 = vst.msk [vmem:[#allocation3 + $0x20] sm:$0xff] %vm3106, %v3134
      %3176 = vst [vmem:[#allocation3 + $0x28] sm:$0xff] %v3154
      %3177 = vst.msk [vmem:[#allocation3 + $0x30] sm:$0xff] %vm631, %v3155
      %3178 = vst.msk [vmem:[#allocation3 + $0x40] sm:$0xff] %vm3106, %v3140
      %3179 = vst [vmem:[#allocation3 + $0x48] sm:$0xff] %v3156
      %3180 = vst.msk [vmem:[#allocation3 + $0x50] sm:$0xff] %vm631, %v3157
      %3181 = vst.msk [vmem:[#allocation3 + $0x60] sm:$0xff] %vm3106, %v3146
      %3182 = vst [vmem:[#allocation3 + $0x68] sm:$0xff] %v3158
      %3183 = vst.msk [vmem:[#allocation3 + $0x70] sm:$0xff] %vm631, %v3159
      %v3184 = vld [vmem:[%s6] sm:$0xff]
      %v3185 = vld [vmem:[%s6 + $0x8] sm:$0xff]
      %v3186 = vld [vmem:[%s6 + $0x10] sm:$0xff]
      %v3187 = vld [vmem:[%s6 + $0x18] sm:$0xff]
      %v3188 = vld [vmem:[#allocation3] sm:$0xff]
      %v3189 = vld [vmem:[#allocation3 + $0x8] sm:$0xff]
      %v3190 = vld [vmem:[#allocation3 + $0x10] sm:$0xff]
      %v3191 = vld [vmem:[#allocation3 + $0x20] sm:$0xff]
      %v3192 = vld [vmem:[#allocation3 + $0x28] sm:$0xff]
      %v3193 = vld [vmem:[#allocation3 + $0x30] sm:$0xff]
      %v3194 = vld [vmem:[#allocation3 + $0x40] sm:$0xff]
      %v3195 = vld [vmem:[#allocation3 + $0x48] sm:$0xff]
      %v3196 = vld [vmem:[#allocation3 + $0x50] sm:$0xff]
      %v3197 = vld [vmem:[#allocation3 + $0x60] sm:$0xff]
      %v3198 = vld [vmem:[#allocation3 + $0x68] sm:$0xff]
      %v3199 = vld [vmem:[#allocation3 + $0x70] sm:$0xff]
      %3201 = vset.pattern.permute.xlu0 0
      %3202 = vperm.xlu0 %3201, %v3184
      %v3203 = vpop.permute.xlu0 %3202
      %3206 = vset.pattern.permute.xlu0 0
      %3207 = vperm.xlu0 %3206, %v3185
      %v3208 = vpop.permute.xlu0 %3207
      %3211 = vset.pattern.permute.xlu0 0
      %3212 = vperm.xlu0 %3211, %v3186
      %v3213 = vpop.permute.xlu0 %3212
      %3216 = vset.pattern.permute.xlu0 0
      %3217 = vperm.xlu0 %3216, %v3187
      %v3218 = vpop.permute.xlu0 %3217
      %v3220 = vmul.f32 %v3188, %v3203
      %v3221 = vmul.f32 %v3189, %v3203
      %v3222 = vmul.f32 %v3190, %v3203
      %v3223 = vmul.f32 %v3191, %v3208
      %v3224 = vmul.f32 %v3192, %v3208
      %v3225 = vmul.f32 %v3193, %v3208
      %v3226 = vmul.f32 %v3194, %v3213
      %v3227 = vmul.f32 %v3195, %v3213
      %v3228 = vmul.f32 %v3196, %v3213
      %v3229 = vmul.f32 %v3197, %v3218
      %v3230 = vmul.f32 %v3198, %v3218
      %v3231 = vmul.f32 %v3199, %v3218
      %v3232 = vadd.f32 %v3220, 0.0
      %v3233 = vadd.f32 %v3221, 0.0
      %v3234 = vadd.f32 %v3222, 0.0
      %v3235 = vadd.f32 %v3223, 0.0
      %v3236 = vadd.f32 %v3224, 0.0
      %v3237 = vadd.f32 %v3225, 0.0
      %v3238 = vadd.f32 %v3226, 0.0
      %v3239 = vadd.f32 %v3227, 0.0
      %v3240 = vadd.f32 %v3228, 0.0
      %v3241 = vadd.f32 %v3229, 0.0
      %v3242 = vadd.f32 %v3230, 0.0
      %v3243 = vadd.f32 %v3231, 0.0
      %3244 = vset.pattern.permute.xlu0 5
      %3245 = vperm.xlu0 %3244, %v3184
      %v3246 = vpop.permute.xlu0 %3245
      %3248 = vset.pattern.permute.xlu0 5
      %3249 = vperm.xlu0 %3248, %v3185
      %v3250 = vpop.permute.xlu0 %3249
      %3252 = vset.pattern.permute.xlu0 5
      %3253 = vperm.xlu0 %3252, %v3186
      %v3254 = vpop.permute.xlu0 %3253
      %3256 = vset.pattern.permute.xlu0 5
      %3257 = vperm.xlu0 %3256, %v3187
      %v3258 = vpop.permute.xlu0 %3257
      %v3260 = vmul.f32 %v3188, %v3246
      %v3261 = vmul.f32 %v3189, %v3246
      %v3262 = vmul.f32 %v3190, %v3246
      %v3263 = vmul.f32 %v3191, %v3250
      %v3264 = vmul.f32 %v3192, %v3250
      %v3265 = vmul.f32 %v3193, %v3250
      %v3266 = vmul.f32 %v3194, %v3254
      %v3267 = vmul.f32 %v3195, %v3254
      %v3268 = vmul.f32 %v3196, %v3254
      %v3269 = vmul.f32 %v3197, %v3258
      %v3270 = vmul.f32 %v3198, %v3258
      %v3271 = vmul.f32 %v3199, %v3258
      %3284 = vrot.lane.b32.xlu0 %v3260, 80
      %v3285 = vpop.permute.xlu0 %3284
      %3286 = vrot.lane.b32.xlu0 %v3261, 80
      %v3287 = vpop.permute.xlu0 %3286
      %3288 = vrot.lane.b32.xlu0 %v3262, 80
      %v3289 = vpop.permute.xlu0 %3288
      %3290 = vrot.lane.b32.xlu0 %v3263, 80
      %v3291 = vpop.permute.xlu0 %3290
      %3292 = vrot.lane.b32.xlu0 %v3264, 80
      %v3293 = vpop.permute.xlu0 %3292
      %3294 = vrot.lane.b32.xlu0 %v3265, 80
      %v3295 = vpop.permute.xlu0 %3294
      %3296 = vrot.lane.b32.xlu0 %v3266, 80
      %v3297 = vpop.permute.xlu0 %3296
      %3298 = vrot.lane.b32.xlu0 %v3267, 80
      %v3299 = vpop.permute.xlu0 %3298
      %3300 = vrot.lane.b32.xlu0 %v3268, 80
      %v3301 = vpop.permute.xlu0 %3300
      %3302 = vrot.lane.b32.xlu0 %v3269, 80
      %v3303 = vpop.permute.xlu0 %3302
      %3304 = vrot.lane.b32.xlu0 %v3270, 80
      %v3305 = vpop.permute.xlu0 %3304
      %3306 = vrot.lane.b32.xlu0 %v3271, 80
      %v3307 = vpop.permute.xlu0 %3306
      %v3308 = vsel %vm825, %v3285, %v3287
      %v3309 = vsel %vm825, %v3287, %v3289
      %v3310 = vsel %vm825, %v3291, %v3293
      %v3311 = vsel %vm825, %v3293, %v3295
      %v3312 = vsel %vm825, %v3297, %v3299
      %v3313 = vsel %vm825, %v3299, %v3301
      %v3314 = vsel %vm825, %v3303, %v3305
      %v3315 = vsel %vm825, %v3305, %v3307
      %v3328 = vadd.f32 %v3232, %v3308
      %v3329 = vadd.f32 %v3233, %v3309
      %v3330 = vadd.f32 %v3234, %v3289
      %v3331 = vadd.f32 %v3235, %v3310
      %v3332 = vadd.f32 %v3236, %v3311
      %v3333 = vadd.f32 %v3237, %v3295
      %v3334 = vadd.f32 %v3238, %v3312
      %v3335 = vadd.f32 %v3239, %v3313
      %v3336 = vadd.f32 %v3240, %v3301
      %v3337 = vadd.f32 %v3241, %v3314
      %v3338 = vadd.f32 %v3242, %v3315
      %v3339 = vadd.f32 %v3243, %v3307
      %3340 = vset.pattern.permute.xlu0 10
      %3341 = vperm.xlu0 %3340, %v3184
      %v3342 = vpop.permute.xlu0 %3341
      %3344 = vset.pattern.permute.xlu0 10
      %3345 = vperm.xlu0 %3344, %v3185
      %v3346 = vpop.permute.xlu0 %3345
      %3348 = vset.pattern.permute.xlu0 10
      %3349 = vperm.xlu0 %3348, %v3186
      %v3350 = vpop.permute.xlu0 %3349
      %3352 = vset.pattern.permute.xlu0 10
      %3353 = vperm.xlu0 %3352, %v3187
      %v3354 = vpop.permute.xlu0 %3353
      %v3356 = vmul.f32 %v3188, %v3342
      %v3357 = vmul.f32 %v3189, %v3342
      %v3358 = vmul.f32 %v3190, %v3342
      %v3359 = vmul.f32 %v3191, %v3346
      %v3360 = vmul.f32 %v3192, %v3346
      %v3361 = vmul.f32 %v3193, %v3346
      %v3362 = vmul.f32 %v3194, %v3350
      %v3363 = vmul.f32 %v3195, %v3350
      %v3364 = vmul.f32 %v3196, %v3350
      %v3365 = vmul.f32 %v3197, %v3354
      %v3366 = vmul.f32 %v3198, %v3354
      %v3367 = vmul.f32 %v3199, %v3354
      %3380 = vrot.lane.b32.xlu0 %v3356, 32
      %v3381 = vpop.permute.xlu0 %3380
      %3382 = vrot.lane.b32.xlu0 %v3357, 32
      %v3383 = vpop.permute.xlu0 %3382
      %3384 = vrot.lane.b32.xlu0 %v3358, 32
      %v3385 = vpop.permute.xlu0 %3384
      %3386 = vrot.lane.b32.xlu0 %v3359, 32
      %v3387 = vpop.permute.xlu0 %3386
      %3388 = vrot.lane.b32.xlu0 %v3360, 32
      %v3389 = vpop.permute.xlu0 %3388
      %3390 = vrot.lane.b32.xlu0 %v3361, 32
      %v3391 = vpop.permute.xlu0 %3390
      %3392 = vrot.lane.b32.xlu0 %v3362, 32
      %v3393 = vpop.permute.xlu0 %3392
      %3394 = vrot.lane.b32.xlu0 %v3363, 32
      %v3395 = vpop.permute.xlu0 %3394
      %3396 = vrot.lane.b32.xlu0 %v3364, 32
      %v3397 = vpop.permute.xlu0 %3396
      %3398 = vrot.lane.b32.xlu0 %v3365, 32
      %v3399 = vpop.permute.xlu0 %3398
      %3400 = vrot.lane.b32.xlu0 %v3366, 32
      %v3401 = vpop.permute.xlu0 %3400
      %3402 = vrot.lane.b32.xlu0 %v3367, 32
      %v3403 = vpop.permute.xlu0 %3402
      %v3404 = vsel %vm342, %v3381, %v3383
      %v3405 = vsel %vm342, %v3383, %v3385
      %v3406 = vsel %vm342, %v3387, %v3389
      %v3407 = vsel %vm342, %v3389, %v3391
      %v3408 = vsel %vm342, %v3393, %v3395
      %v3409 = vsel %vm342, %v3395, %v3397
      %v3410 = vsel %vm342, %v3399, %v3401
      %v3411 = vsel %vm342, %v3401, %v3403
      %v3424 = vadd.f32 %v3328, %v3404
      %v3425 = vadd.f32 %v3329, %v3405
      %v3426 = vadd.f32 %v3330, %v3385
      %v3427 = vadd.f32 %v3331, %v3406
      %v3428 = vadd.f32 %v3332, %v3407
      %v3429 = vadd.f32 %v3333, %v3391
      %v3430 = vadd.f32 %v3334, %v3408
      %v3431 = vadd.f32 %v3335, %v3409
      %v3432 = vadd.f32 %v3336, %v3397
      %v3433 = vadd.f32 %v3337, %v3410
      %v3434 = vadd.f32 %v3338, %v3411
      %v3435 = vadd.f32 %v3339, %v3403
      %v3436 = vld [vmem:[#allocation3 + $0x8] sm:$0xff]
      %v3437 = vld [vmem:[#allocation3 + $0x10] sm:$0xff]
      %v3438 = vld [vmem:[#allocation3 + $0x18] sm:$0xff]
      %v3439 = vld [vmem:[#allocation3 + $0x28] sm:$0xff]
      %v3440 = vld [vmem:[#allocation3 + $0x30] sm:$0xff]
      %v3441 = vld [vmem:[#allocation3 + $0x38] sm:$0xff]
      %v3442 = vld [vmem:[#allocation3 + $0x48] sm:$0xff]
      %v3443 = vld [vmem:[#allocation3 + $0x50] sm:$0xff]
      %v3444 = vld [vmem:[#allocation3 + $0x58] sm:$0xff]
      %v3445 = vld [vmem:[#allocation3 + $0x68] sm:$0xff]
      %v3446 = vld [vmem:[#allocation3 + $0x70] sm:$0xff]
      %v3447 = vld [vmem:[#allocation3 + $0x78] sm:$0xff]
      %3448 = vset.pattern.permute.xlu0 15
      %3449 = vperm.xlu0 %3448, %v3184
      %v3450 = vpop.permute.xlu0 %3449
      %3452 = vset.pattern.permute.xlu0 15
      %3453 = vperm.xlu0 %3452, %v3185
      %v3454 = vpop.permute.xlu0 %3453
      %3456 = vset.pattern.permute.xlu0 15
      %3457 = vperm.xlu0 %3456, %v3186
      %v3458 = vpop.permute.xlu0 %3457
      %3460 = vset.pattern.permute.xlu0 15
      %3461 = vperm.xlu0 %3460, %v3187
      %v3462 = vpop.permute.xlu0 %3461
      %v3464 = vmul.f32 %v3436, %v3450
      %v3465 = vmul.f32 %v3437, %v3450
      %v3466 = vmul.f32 %v3438, %v3450
      %v3467 = vmul.f32 %v3439, %v3454
      %v3468 = vmul.f32 %v3440, %v3454
      %v3469 = vmul.f32 %v3441, %v3454
      %v3470 = vmul.f32 %v3442, %v3458
      %v3471 = vmul.f32 %v3443, %v3458
      %v3472 = vmul.f32 %v3444, %v3458
      %v3473 = vmul.f32 %v3445, %v3462
      %v3474 = vmul.f32 %v3446, %v3462
      %v3475 = vmul.f32 %v3447, %v3462
      %3488 = vrot.lane.b32.xlu0 %v3464, 112
      %v3489 = vpop.permute.xlu0 %3488
      %3490 = vrot.lane.b32.xlu0 %v3465, 112
      %v3491 = vpop.permute.xlu0 %3490
      %3492 = vrot.lane.b32.xlu0 %v3466, 112
      %v3493 = vpop.permute.xlu0 %3492
      %3494 = vrot.lane.b32.xlu0 %v3467, 112
      %v3495 = vpop.permute.xlu0 %3494
      %3496 = vrot.lane.b32.xlu0 %v3468, 112
      %v3497 = vpop.permute.xlu0 %3496
      %3498 = vrot.lane.b32.xlu0 %v3469, 112
      %v3499 = vpop.permute.xlu0 %3498
      %3500 = vrot.lane.b32.xlu0 %v3470, 112
      %v3501 = vpop.permute.xlu0 %3500
      %3502 = vrot.lane.b32.xlu0 %v3471, 112
      %v3503 = vpop.permute.xlu0 %3502
      %3504 = vrot.lane.b32.xlu0 %v3472, 112
      %v3505 = vpop.permute.xlu0 %3504
      %3506 = vrot.lane.b32.xlu0 %v3473, 112
      %v3507 = vpop.permute.xlu0 %3506
      %3508 = vrot.lane.b32.xlu0 %v3474, 112
      %v3509 = vpop.permute.xlu0 %3508
      %3510 = vrot.lane.b32.xlu0 %v3475, 112
      %v3511 = vpop.permute.xlu0 %3510
      %v3512 = vsel %vm631, %v3489, %v3491
      %v3513 = vsel %vm631, %v3491, %v3493
      %v3514 = vsel %vm631, %v3495, %v3497
      %v3515 = vsel %vm631, %v3497, %v3499
      %v3516 = vsel %vm631, %v3501, %v3503
      %v3517 = vsel %vm631, %v3503, %v3505
      %v3518 = vsel %vm631, %v3507, %v3509
      %v3519 = vsel %vm631, %v3509, %v3511
      %v3532 = vadd.f32 %v3424, %v3512
      %v3533 = vadd.f32 %v3425, %v3513
      %v3534 = vadd.f32 %v3426, %v3493
      %v3535 = vadd.f32 %v3427, %v3514
      %v3536 = vadd.f32 %v3428, %v3515
      %v3537 = vadd.f32 %v3429, %v3499
      %v3538 = vadd.f32 %v3430, %v3516
      %v3539 = vadd.f32 %v3431, %v3517
      %v3540 = vadd.f32 %v3432, %v3505
      %v3541 = vadd.f32 %v3433, %v3518
      %v3542 = vadd.f32 %v3434, %v3519
      %v3543 = vadd.f32 %v3435, %v3511
      %3544 = vset.pattern.permute.xlu0 20
      %3545 = vperm.xlu0 %3544, %v3184
      %v3546 = vpop.permute.xlu0 %3545
      %3548 = vset.pattern.permute.xlu0 20
      %3549 = vperm.xlu0 %3548, %v3185
      %v3550 = vpop.permute.xlu0 %3549
      %3552 = vset.pattern.permute.xlu0 20
      %3553 = vperm.xlu0 %3552, %v3186
      %v3554 = vpop.permute.xlu0 %3553
      %3556 = vset.pattern.permute.xlu0 20
      %3557 = vperm.xlu0 %3556, %v3187
      %v3558 = vpop.permute.xlu0 %3557
      %v3560 = vmul.f32 %v3436, %v3546
      %v3561 = vmul.f32 %v3437, %v3546
      %v3562 = vmul.f32 %v3438, %v3546
      %v3563 = vmul.f32 %v3439, %v3550
      %v3564 = vmul.f32 %v3440, %v3550
      %v3565 = vmul.f32 %v3441, %v3550
      %v3566 = vmul.f32 %v3442, %v3554
      %v3567 = vmul.f32 %v3443, %v3554
      %v3568 = vmul.f32 %v3444, %v3554
      %v3569 = vmul.f32 %v3445, %v3558
      %v3570 = vmul.f32 %v3446, %v3558
      %v3571 = vmul.f32 %v3447, %v3558
      %3584 = vrot.lane.b32.xlu0 %v3560, 64
      %v3585 = vpop.permute.xlu0 %3584
      %3586 = vrot.lane.b32.xlu0 %v3561, 64
      %v3587 = vpop.permute.xlu0 %3586
      %3588 = vrot.lane.b32.xlu0 %v3562, 64
      %v3589 = vpop.permute.xlu0 %3588
      %3590 = vrot.lane.b32.xlu0 %v3563, 64
      %v3591 = vpop.permute.xlu0 %3590
      %3592 = vrot.lane.b32.xlu0 %v3564, 64
      %v3593 = vpop.permute.xlu0 %3592
      %3594 = vrot.lane.b32.xlu0 %v3565, 64
      %v3595 = vpop.permute.xlu0 %3594
      %3596 = vrot.lane.b32.xlu0 %v3566, 64
      %v3597 = vpop.permute.xlu0 %3596
      %3598 = vrot.lane.b32.xlu0 %v3567, 64
      %v3599 = vpop.permute.xlu0 %3598
      %3600 = vrot.lane.b32.xlu0 %v3568, 64
      %v3601 = vpop.permute.xlu0 %3600
      %3602 = vrot.lane.b32.xlu0 %v3569, 64
      %v3603 = vpop.permute.xlu0 %3602
      %3604 = vrot.lane.b32.xlu0 %v3570, 64
      %v3605 = vpop.permute.xlu0 %3604
      %3606 = vrot.lane.b32.xlu0 %v3571, 64
      %v3607 = vpop.permute.xlu0 %3606
      %v3608 = vsel %vm922, %v3585, %v3587
      %v3609 = vsel %vm922, %v3587, %v3589
      %v3610 = vsel %vm922, %v3591, %v3593
      %v3611 = vsel %vm922, %v3593, %v3595
      %v3612 = vsel %vm922, %v3597, %v3599
      %v3613 = vsel %vm922, %v3599, %v3601
      %v3614 = vsel %vm922, %v3603, %v3605
      %v3615 = vsel %vm922, %v3605, %v3607
      %v3628 = vadd.f32 %v3532, %v3608
      %v3629 = vadd.f32 %v3533, %v3609
      %v3630 = vadd.f32 %v3534, %v3589
      %v3631 = vadd.f32 %v3535, %v3610
      %v3632 = vadd.f32 %v3536, %v3611
      %v3633 = vadd.f32 %v3537, %v3595
      %v3634 = vadd.f32 %v3538, %v3612
      %v3635 = vadd.f32 %v3539, %v3613
      %v3636 = vadd.f32 %v3540, %v3601
      %v3637 = vadd.f32 %v3541, %v3614
      %v3638 = vadd.f32 %v3542, %v3615
      %v3639 = vadd.f32 %v3543, %v3607
      %s3640 = scalar_lea.vmem %s1, 5
      %v3641 = vld [vmem:[%s3640] ss:$8 sm:$0x3]
      %v3643 = vlaneseq
      %v3644 = vshrl.u32 %v3643, 7
      %v3645 = vsub.s32 0, %v3644
      %v3646 = vrot.slane %v3641, %v3645
      %v3647 = vlaneseq
      %v3648 = vshrl.u32 %v3647, 7
      %v3649 = vsub.s32 1, %v3648
      %v3650 = vrot.slane %v3641, %v3649
      %3651 = vrot.lane.b32.xlu0 %v3646, 10
      %v3652 = vpop.permute.xlu0 %3651
      %3653 = vrot.lane.b32.xlu0 %v3650, 10
      %v3654 = vpop.permute.xlu0 %3653
      %vm3655 = vcmask 80896
      %v3656 = vsel %vm3655, %v3652, %v3654
      %v3660 = vmul.f32 %v3628, %v3652
      %v3661 = vmul.f32 %v3629, %v3656
      %v3662 = vmul.f32 %v3630, %v3654
      %v3663 = vmul.f32 %v3631, %v3652
      %v3664 = vmul.f32 %v3632, %v3656
      %v3665 = vmul.f32 %v3633, %v3654
      %v3666 = vmul.f32 %v3634, %v3652
      %v3667 = vmul.f32 %v3635, %v3656
      %v3668 = vmul.f32 %v3636, %v3654
      %v3669 = vmul.f32 %v3637, %v3652
      %v3670 = vmul.f32 %v3638, %v3656
      %v3671 = vmul.f32 %v3639, %v3654
      %v3672 = vadd.f32 %v3660, 0.0
      %v3673 = vadd.f32 %v3661, 0.0
      %v3674 = vadd.f32 %v3662, 0.0
      %v3675 = vadd.f32 %v3663, 0.0
      %v3676 = vadd.f32 %v3664, 0.0
      %v3677 = vadd.f32 %v3665, 0.0
      %v3678 = vadd.f32 %v3666, 0.0
      %v3679 = vadd.f32 %v3667, 0.0
      %v3680 = vadd.f32 %v3668, 0.0
      %v3681 = vadd.f32 %v3669, 0.0
      %v3682 = vadd.f32 %v3670, 0.0
      %v3683 = vadd.f32 %v3671, 0.0
      %3684 = vset.pattern.permute.xlu0 1
      %3685 = vperm.xlu0 %3684, %v3184
      %v3686 = vpop.permute.xlu0 %3685
      %3688 = vset.pattern.permute.xlu0 1
      %3689 = vperm.xlu0 %3688, %v3185
      %v3690 = vpop.permute.xlu0 %3689
      %3692 = vset.pattern.permute.xlu0 1
      %3693 = vperm.xlu0 %3692, %v3186
      %v3694 = vpop.permute.xlu0 %3693
      %3696 = vset.pattern.permute.xlu0 1
      %3697 = vperm.xlu0 %3696, %v3187
      %v3698 = vpop.permute.xlu0 %3697
      %v3700 = vmul.f32 %v3188, %v3686
      %v3701 = vmul.f32 %v3189, %v3686
      %v3702 = vmul.f32 %v3190, %v3686
      %v3703 = vmul.f32 %v3191, %v3690
      %v3704 = vmul.f32 %v3192, %v3690
      %v3705 = vmul.f32 %v3193, %v3690
      %v3706 = vmul.f32 %v3194, %v3694
      %v3707 = vmul.f32 %v3195, %v3694
      %v3708 = vmul.f32 %v3196, %v3694
      %v3709 = vmul.f32 %v3197, %v3698
      %v3710 = vmul.f32 %v3198, %v3698
      %v3711 = vmul.f32 %v3199, %v3698
      %v3712 = vadd.f32 %v3700, 0.0
      %v3713 = vadd.f32 %v3701, 0.0
      %v3714 = vadd.f32 %v3702, 0.0
      %v3715 = vadd.f32 %v3703, 0.0
      %v3716 = vadd.f32 %v3704, 0.0
      %v3717 = vadd.f32 %v3705, 0.0
      %v3718 = vadd.f32 %v3706, 0.0
      %v3719 = vadd.f32 %v3707, 0.0
      %v3720 = vadd.f32 %v3708, 0.0
      %v3721 = vadd.f32 %v3709, 0.0
      %v3722 = vadd.f32 %v3710, 0.0
      %v3723 = vadd.f32 %v3711, 0.0
      %3724 = vset.pattern.permute.xlu0 6
      %3725 = vperm.xlu0 %3724, %v3184
      %v3726 = vpop.permute.xlu0 %3725
      %3728 = vset.pattern.permute.xlu0 6
      %3729 = vperm.xlu0 %3728, %v3185
      %v3730 = vpop.permute.xlu0 %3729
      %3732 = vset.pattern.permute.xlu0 6
      %3733 = vperm.xlu0 %3732, %v3186
      %v3734 = vpop.permute.xlu0 %3733
      %3736 = vset.pattern.permute.xlu0 6
      %3737 = vperm.xlu0 %3736, %v3187
      %v3738 = vpop.permute.xlu0 %3737
      %v3740 = vmul.f32 %v3188, %v3726
      %v3741 = vmul.f32 %v3189, %v3726
      %v3742 = vmul.f32 %v3190, %v3726
      %v3743 = vmul.f32 %v3191, %v3730
      %v3744 = vmul.f32 %v3192, %v3730
      %v3745 = vmul.f32 %v3193, %v3730
      %v3746 = vmul.f32 %v3194, %v3734
      %v3747 = vmul.f32 %v3195, %v3734
      %v3748 = vmul.f32 %v3196, %v3734
      %v3749 = vmul.f32 %v3197, %v3738
      %v3750 = vmul.f32 %v3198, %v3738
      %v3751 = vmul.f32 %v3199, %v3738
      %3764 = vrot.lane.b32.xlu0 %v3740, 80
      %v3765 = vpop.permute.xlu0 %3764
      %3766 = vrot.lane.b32.xlu0 %v3741, 80
      %v3767 = vpop.permute.xlu0 %3766
      %3768 = vrot.lane.b32.xlu0 %v3742, 80
      %v3769 = vpop.permute.xlu0 %3768
      %3770 = vrot.lane.b32.xlu0 %v3743, 80
      %v3771 = vpop.permute.xlu0 %3770
      %3772 = vrot.lane.b32.xlu0 %v3744, 80
      %v3773 = vpop.permute.xlu0 %3772
      %3774 = vrot.lane.b32.xlu0 %v3745, 80
      %v3775 = vpop.permute.xlu0 %3774
      %3776 = vrot.lane.b32.xlu0 %v3746, 80
      %v3777 = vpop.permute.xlu0 %3776
      %3778 = vrot.lane.b32.xlu0 %v3747, 80
      %v3779 = vpop.permute.xlu0 %3778
      %3780 = vrot.lane.b32.xlu0 %v3748, 80
      %v3781 = vpop.permute.xlu0 %3780
      %3782 = vrot.lane.b32.xlu0 %v3749, 80
      %v3783 = vpop.permute.xlu0 %3782
      %3784 = vrot.lane.b32.xlu0 %v3750, 80
      %v3785 = vpop.permute.xlu0 %3784
      %3786 = vrot.lane.b32.xlu0 %v3751, 80
      %v3787 = vpop.permute.xlu0 %3786
      %v3788 = vsel %vm825, %v3765, %v3767
      %v3789 = vsel %vm825, %v3767, %v3769
      %v3790 = vsel %vm825, %v3771, %v3773
      %v3791 = vsel %vm825, %v3773, %v3775
      %v3792 = vsel %vm825, %v3777, %v3779
      %v3793 = vsel %vm825, %v3779, %v3781
      %v3794 = vsel %vm825, %v3783, %v3785
      %v3795 = vsel %vm825, %v3785, %v3787
      %v3808 = vadd.f32 %v3712, %v3788
      %v3809 = vadd.f32 %v3713, %v3789
      %v3810 = vadd.f32 %v3714, %v3769
      %v3811 = vadd.f32 %v3715, %v3790
      %v3812 = vadd.f32 %v3716, %v3791
      %v3813 = vadd.f32 %v3717, %v3775
      %v3814 = vadd.f32 %v3718, %v3792
      %v3815 = vadd.f32 %v3719, %v3793
      %v3816 = vadd.f32 %v3720, %v3781
      %v3817 = vadd.f32 %v3721, %v3794
      %v3818 = vadd.f32 %v3722, %v3795
      %v3819 = vadd.f32 %v3723, %v3787
      %3820 = vset.pattern.permute.xlu0 11
      %3821 = vperm.xlu0 %3820, %v3184
      %v3822 = vpop.permute.xlu0 %3821
      %3824 = vset.pattern.permute.xlu0 11
      %3825 = vperm.xlu0 %3824, %v3185
      %v3826 = vpop.permute.xlu0 %3825
      %3828 = vset.pattern.permute.xlu0 11
      %3829 = vperm.xlu0 %3828, %v3186
      %v3830 = vpop.permute.xlu0 %3829
      %3832 = vset.pattern.permute.xlu0 11
      %3833 = vperm.xlu0 %3832, %v3187
      %v3834 = vpop.permute.xlu0 %3833
      %v3836 = vmul.f32 %v3188, %v3822
      %v3837 = vmul.f32 %v3189, %v3822
      %v3838 = vmul.f32 %v3190, %v3822
      %v3839 = vmul.f32 %v3191, %v3826
      %v3840 = vmul.f32 %v3192, %v3826
      %v3841 = vmul.f32 %v3193, %v3826
      %v3842 = vmul.f32 %v3194, %v3830
      %v3843 = vmul.f32 %v3195, %v3830
      %v3844 = vmul.f32 %v3196, %v3830
      %v3845 = vmul.f32 %v3197, %v3834
      %v3846 = vmul.f32 %v3198, %v3834
      %v3847 = vmul.f32 %v3199, %v3834
      %3860 = vrot.lane.b32.xlu0 %v3836, 32
      %v3861 = vpop.permute.xlu0 %3860
      %3862 = vrot.lane.b32.xlu0 %v3837, 32
      %v3863 = vpop.permute.xlu0 %3862
      %3864 = vrot.lane.b32.xlu0 %v3838, 32
      %v3865 = vpop.permute.xlu0 %3864
      %3866 = vrot.lane.b32.xlu0 %v3839, 32
      %v3867 = vpop.permute.xlu0 %3866
      %3868 = vrot.lane.b32.xlu0 %v3840, 32
      %v3869 = vpop.permute.xlu0 %3868
      %3870 = vrot.lane.b32.xlu0 %v3841, 32
      %v3871 = vpop.permute.xlu0 %3870
      %3872 = vrot.lane.b32.xlu0 %v3842, 32
      %v3873 = vpop.permute.xlu0 %3872
      %3874 = vrot.lane.b32.xlu0 %v3843, 32
      %v3875 = vpop.permute.xlu0 %3874
      %3876 = vrot.lane.b32.xlu0 %v3844, 32
      %v3877 = vpop.permute.xlu0 %3876
      %3878 = vrot.lane.b32.xlu0 %v3845, 32
      %v3879 = vpop.permute.xlu0 %3878
      %3880 = vrot.lane.b32.xlu0 %v3846, 32
      %v3881 = vpop.permute.xlu0 %3880
      %3882 = vrot.lane.b32.xlu0 %v3847, 32
      %v3883 = vpop.permute.xlu0 %3882
      %v3884 = vsel %vm342, %v3861, %v3863
      %v3885 = vsel %vm342, %v3863, %v3865
      %v3886 = vsel %vm342, %v3867, %v3869
      %v3887 = vsel %vm342, %v3869, %v3871
      %v3888 = vsel %vm342, %v3873, %v3875
      %v3889 = vsel %vm342, %v3875, %v3877
      %v3890 = vsel %vm342, %v3879, %v3881
      %v3891 = vsel %vm342, %v3881, %v3883
      %v3904 = vadd.f32 %v3808, %v3884
      %v3905 = vadd.f32 %v3809, %v3885
      %v3906 = vadd.f32 %v3810, %v3865
      %v3907 = vadd.f32 %v3811, %v3886
      %v3908 = vadd.f32 %v3812, %v3887
      %v3909 = vadd.f32 %v3813, %v3871
      %v3910 = vadd.f32 %v3814, %v3888
      %v3911 = vadd.f32 %v3815, %v3889
      %v3912 = vadd.f32 %v3816, %v3877
      %v3913 = vadd.f32 %v3817, %v3890
      %v3914 = vadd.f32 %v3818, %v3891
      %v3915 = vadd.f32 %v3819, %v3883
      %3916 = vset.pattern.permute.xlu0 16
      %3917 = vperm.xlu0 %3916, %v3184
      %v3918 = vpop.permute.xlu0 %3917
      %3920 = vset.pattern.permute.xlu0 16
      %3921 = vperm.xlu0 %3920, %v3185
      %v3922 = vpop.permute.xlu0 %3921
      %3924 = vset.pattern.permute.xlu0 16
      %3925 = vperm.xlu0 %3924, %v3186
      %v3926 = vpop.permute.xlu0 %3925
      %3928 = vset.pattern.permute.xlu0 16
      %3929 = vperm.xlu0 %3928, %v3187
      %v3930 = vpop.permute.xlu0 %3929
      %v3932 = vmul.f32 %v3436, %v3918
      %v3933 = vmul.f32 %v3437, %v3918
      %v3934 = vmul.f32 %v3438, %v3918
      %v3935 = vmul.f32 %v3439, %v3922
      %v3936 = vmul.f32 %v3440, %v3922
      %v3937 = vmul.f32 %v3441, %v3922
      %v3938 = vmul.f32 %v3442, %v3926
      %v3939 = vmul.f32 %v3443, %v3926
      %v3940 = vmul.f32 %v3444, %v3926
      %v3941 = vmul.f32 %v3445, %v3930
      %v3942 = vmul.f32 %v3446, %v3930
      %v3943 = vmul.f32 %v3447, %v3930
      %3956 = vrot.lane.b32.xlu0 %v3932, 112
      %v3957 = vpop.permute.xlu0 %3956
      %3958 = vrot.lane.b32.xlu0 %v3933, 112
      %v3959 = vpop.permute.xlu0 %3958
      %3960 = vrot.lane.b32.xlu0 %v3934, 112
      %v3961 = vpop.permute.xlu0 %3960
      %3962 = vrot.lane.b32.xlu0 %v3935, 112
      %v3963 = vpop.permute.xlu0 %3962
      %3964 = vrot.lane.b32.xlu0 %v3936, 112
      %v3965 = vpop.permute.xlu0 %3964
      %3966 = vrot.lane.b32.xlu0 %v3937, 112
      %v3967 = vpop.permute.xlu0 %3966
      %3968 = vrot.lane.b32.xlu0 %v3938, 112
      %v3969 = vpop.permute.xlu0 %3968
      %3970 = vrot.lane.b32.xlu0 %v3939, 112
      %v3971 = vpop.permute.xlu0 %3970
      %3972 = vrot.lane.b32.xlu0 %v3940, 112
      %v3973 = vpop.permute.xlu0 %3972
      %3974 = vrot.lane.b32.xlu0 %v3941, 112
      %v3975 = vpop.permute.xlu0 %3974
      %3976 = vrot.lane.b32.xlu0 %v3942, 112
      %v3977 = vpop.permute.xlu0 %3976
      %3978 = vrot.lane.b32.xlu0 %v3943, 112
      %v3979 = vpop.permute.xlu0 %3978
      %v3980 = vsel %vm631, %v3957, %v3959
      %v3981 = vsel %vm631, %v3959, %v3961
      %v3982 = vsel %vm631, %v3963, %v3965
      %v3983 = vsel %vm631, %v3965, %v3967
      %v3984 = vsel %vm631, %v3969, %v3971
      %v3985 = vsel %vm631, %v3971, %v3973
      %v3986 = vsel %vm631, %v3975, %v3977
      %v3987 = vsel %vm631, %v3977, %v3979
      %v4000 = vadd.f32 %v3904, %v3980
      %v4001 = vadd.f32 %v3905, %v3981
      %v4002 = vadd.f32 %v3906, %v3961
      %v4003 = vadd.f32 %v3907, %v3982
      %v4004 = vadd.f32 %v3908, %v3983
      %v4005 = vadd.f32 %v3909, %v3967
      %v4006 = vadd.f32 %v3910, %v3984
      %v4007 = vadd.f32 %v3911, %v3985
      %v4008 = vadd.f32 %v3912, %v3973
      %v4009 = vadd.f32 %v3913, %v3986
      %v4010 = vadd.f32 %v3914, %v3987
      %v4011 = vadd.f32 %v3915, %v3979
      %4012 = vset.pattern.permute.xlu0 21
      %4013 = vperm.xlu0 %4012, %v3184
      %v4014 = vpop.permute.xlu0 %4013
      %4016 = vset.pattern.permute.xlu0 21
      %4017 = vperm.xlu0 %4016, %v3185
      %v4018 = vpop.permute.xlu0 %4017
      %4020 = vset.pattern.permute.xlu0 21
      %4021 = vperm.xlu0 %4020, %v3186
      %v4022 = vpop.permute.xlu0 %4021
      %4024 = vset.pattern.permute.xlu0 21
      %4025 = vperm.xlu0 %4024, %v3187
      %v4026 = vpop.permute.xlu0 %4025
      %v4028 = vmul.f32 %v3436, %v4014
      %v4029 = vmul.f32 %v3437, %v4014
      %v4030 = vmul.f32 %v3438, %v4014
      %v4031 = vmul.f32 %v3439, %v4018
      %v4032 = vmul.f32 %v3440, %v4018
      %v4033 = vmul.f32 %v3441, %v4018
      %v4034 = vmul.f32 %v3442, %v4022
      %v4035 = vmul.f32 %v3443, %v4022
      %v4036 = vmul.f32 %v3444, %v4022
      %v4037 = vmul.f32 %v3445, %v4026
      %v4038 = vmul.f32 %v3446, %v4026
      %v4039 = vmul.f32 %v3447, %v4026
      %4052 = vrot.lane.b32.xlu0 %v4028, 64
      %v4053 = vpop.permute.xlu0 %4052
      %4054 = vrot.lane.b32.xlu0 %v4029, 64
      %v4055 = vpop.permute.xlu0 %4054
      %4056 = vrot.lane.b32.xlu0 %v4030, 64
      %v4057 = vpop.permute.xlu0 %4056
      %4058 = vrot.lane.b32.xlu0 %v4031, 64
      %v4059 = vpop.permute.xlu0 %4058
      %4060 = vrot.lane.b32.xlu0 %v4032, 64
      %v4061 = vpop.permute.xlu0 %4060
      %4062 = vrot.lane.b32.xlu0 %v4033, 64
      %v4063 = vpop.permute.xlu0 %4062
      %4064 = vrot.lane.b32.xlu0 %v4034, 64
      %v4065 = vpop.permute.xlu0 %4064
      %4066 = vrot.lane.b32.xlu0 %v4035, 64
      %v4067 = vpop.permute.xlu0 %4066
      %4068 = vrot.lane.b32.xlu0 %v4036, 64
      %v4069 = vpop.permute.xlu0 %4068
      %4070 = vrot.lane.b32.xlu0 %v4037, 64
      %v4071 = vpop.permute.xlu0 %4070
      %4072 = vrot.lane.b32.xlu0 %v4038, 64
      %v4073 = vpop.permute.xlu0 %4072
      %4074 = vrot.lane.b32.xlu0 %v4039, 64
      %v4075 = vpop.permute.xlu0 %4074
      %v4076 = vsel %vm922, %v4053, %v4055
      %v4077 = vsel %vm922, %v4055, %v4057
      %v4078 = vsel %vm922, %v4059, %v4061
      %v4079 = vsel %vm922, %v4061, %v4063
      %v4080 = vsel %vm922, %v4065, %v4067
      %v4081 = vsel %vm922, %v4067, %v4069
      %v4082 = vsel %vm922, %v4071, %v4073
      %v4083 = vsel %vm922, %v4073, %v4075
      %v4096 = vadd.f32 %v4000, %v4076
      %v4097 = vadd.f32 %v4001, %v4077
      %v4098 = vadd.f32 %v4002, %v4057
      %v4099 = vadd.f32 %v4003, %v4078
      %v4100 = vadd.f32 %v4004, %v4079
      %v4101 = vadd.f32 %v4005, %v4063
      %v4102 = vadd.f32 %v4006, %v4080
      %v4103 = vadd.f32 %v4007, %v4081
      %v4104 = vadd.f32 %v4008, %v4069
      %v4105 = vadd.f32 %v4009, %v4082
      %v4106 = vadd.f32 %v4010, %v4083
      %v4107 = vadd.f32 %v4011, %v4075
      %s4108 = scalar_lea.vmem %s1, 6
      %v4109 = vld [vmem:[%s4108] ss:$8 sm:$0x3]
      %v4111 = vlaneseq
      %v4112 = vshrl.u32 %v4111, 7
      %v4113 = vsub.s32 0, %v4112
      %v4114 = vrot.slane %v4109, %v4113
      %v4115 = vlaneseq
      %v4116 = vshrl.u32 %v4115, 7
      %v4117 = vsub.s32 1, %v4116
      %v4118 = vrot.slane %v4109, %v4117
      %4119 = vrot.lane.b32.xlu0 %v4114, 13
      %v4120 = vpop.permute.xlu0 %4119
      %4121 = vrot.lane.b32.xlu0 %v4118, 13
      %v4122 = vpop.permute.xlu0 %4121
      %vm4123 = vcmask 105472
      %v4124 = vsel %vm4123, %v4120, %v4122
      %v4128 = vmul.f32 %v4096, %v4120
      %v4129 = vmul.f32 %v4097, %v4124
      %v4130 = vmul.f32 %v4098, %v4122
      %v4131 = vmul.f32 %v4099, %v4120
      %v4132 = vmul.f32 %v4100, %v4124
      %v4133 = vmul.f32 %v4101, %v4122
      %v4134 = vmul.f32 %v4102, %v4120
      %v4135 = vmul.f32 %v4103, %v4124
      %v4136 = vmul.f32 %v4104, %v4122
      %v4137 = vmul.f32 %v4105, %v4120
      %v4138 = vmul.f32 %v4106, %v4124
      %v4139 = vmul.f32 %v4107, %v4122
      %4152 = vrot.lane.b32.xlu0 %v4128, 125
      %v4153 = vpop.permute.xlu0 %4152
      %4154 = vrot.lane.b32.xlu0 %v4129, 125
      %v4155 = vpop.permute.xlu0 %4154
      %4156 = vrot.lane.b32.xlu0 %v4130, 125
      %v4157 = vpop.permute.xlu0 %4156
      %4158 = vrot.lane.b32.xlu0 %v4131, 125
      %v4159 = vpop.permute.xlu0 %4158
      %4160 = vrot.lane.b32.xlu0 %v4132, 125
      %v4161 = vpop.permute.xlu0 %4160
      %4162 = vrot.lane.b32.xlu0 %v4133, 125
      %v4163 = vpop.permute.xlu0 %4162
      %4164 = vrot.lane.b32.xlu0 %v4134, 125
      %v4165 = vpop.permute.xlu0 %4164
      %4166 = vrot.lane.b32.xlu0 %v4135, 125
      %v4167 = vpop.permute.xlu0 %4166
      %4168 = vrot.lane.b32.xlu0 %v4136, 125
      %v4169 = vpop.permute.xlu0 %4168
      %4170 = vrot.lane.b32.xlu0 %v4137, 125
      %v4171 = vpop.permute.xlu0 %4170
      %4172 = vrot.lane.b32.xlu0 %v4138, 125
      %v4173 = vpop.permute.xlu0 %4172
      %4174 = vrot.lane.b32.xlu0 %v4139, 125
      %v4175 = vpop.permute.xlu0 %4174
      %v4176 = vsel %vm2508, %v4153, %v4155
      %v4177 = vsel %vm2508, %v4155, %v4157
      %v4178 = vsel %vm2508, %v4159, %v4161
      %v4179 = vsel %vm2508, %v4161, %v4163
      %v4180 = vsel %vm2508, %v4165, %v4167
      %v4181 = vsel %vm2508, %v4167, %v4169
      %v4182 = vsel %vm2508, %v4171, %v4173
      %v4183 = vsel %vm2508, %v4173, %v4175
      %v4196 = vadd.f32 %v3672, %v4176
      %v4197 = vadd.f32 %v3673, %v4177
      %v4198 = vadd.f32 %v3674, %v4157
      %v4199 = vadd.f32 %v3675, %v4178
      %v4200 = vadd.f32 %v3676, %v4179
      %v4201 = vadd.f32 %v3677, %v4163
      %v4202 = vadd.f32 %v3678, %v4180
      %v4203 = vadd.f32 %v3679, %v4181
      %v4204 = vadd.f32 %v3680, %v4169
      %v4205 = vadd.f32 %v3681, %v4182
      %v4206 = vadd.f32 %v3682, %v4183
      %v4207 = vadd.f32 %v3683, %v4175
      %4208 = vset.pattern.permute.xlu0 2
      %4209 = vperm.xlu0 %4208, %v3184
      %v4210 = vpop.permute.xlu0 %4209
      %4212 = vset.pattern.permute.xlu0 2
      %4213 = vperm.xlu0 %4212, %v3185
      %v4214 = vpop.permute.xlu0 %4213
      %4216 = vset.pattern.permute.xlu0 2
      %4217 = vperm.xlu0 %4216, %v3186
      %v4218 = vpop.permute.xlu0 %4217
      %4220 = vset.pattern.permute.xlu0 2
      %4221 = vperm.xlu0 %4220, %v3187
      %v4222 = vpop.permute.xlu0 %4221
      %v4224 = vmul.f32 %v3188, %v4210
      %v4225 = vmul.f32 %v3189, %v4210
      %v4226 = vmul.f32 %v3190, %v4210
      %v4227 = vmul.f32 %v3191, %v4214
      %v4228 = vmul.f32 %v3192, %v4214
      %v4229 = vmul.f32 %v3193, %v4214
      %v4230 = vmul.f32 %v3194, %v4218
      %v4231 = vmul.f32 %v3195, %v4218
      %v4232 = vmul.f32 %v3196, %v4218
      %v4233 = vmul.f32 %v3197, %v4222
      %v4234 = vmul.f32 %v3198, %v4222
      %v4235 = vmul.f32 %v3199, %v4222
      %v4236 = vadd.f32 %v4224, 0.0
      %v4237 = vadd.f32 %v4225, 0.0
      %v4238 = vadd.f32 %v4226, 0.0
      %v4239 = vadd.f32 %v4227, 0.0
      %v4240 = vadd.f32 %v4228, 0.0
      %v4241 = vadd.f32 %v4229, 0.0
      %v4242 = vadd.f32 %v4230, 0.0
      %v4243 = vadd.f32 %v4231, 0.0
      %v4244 = vadd.f32 %v4232, 0.0
      %v4245 = vadd.f32 %v4233, 0.0
      %v4246 = vadd.f32 %v4234, 0.0
      %v4247 = vadd.f32 %v4235, 0.0
      %4248 = vset.pattern.permute.xlu0 7
      %4249 = vperm.xlu0 %4248, %v3184
      %v4250 = vpop.permute.xlu0 %4249
      %4252 = vset.pattern.permute.xlu0 7
      %4253 = vperm.xlu0 %4252, %v3185
      %v4254 = vpop.permute.xlu0 %4253
      %4256 = vset.pattern.permute.xlu0 7
      %4257 = vperm.xlu0 %4256, %v3186
      %v4258 = vpop.permute.xlu0 %4257
      %4260 = vset.pattern.permute.xlu0 7
      %4261 = vperm.xlu0 %4260, %v3187
      %v4262 = vpop.permute.xlu0 %4261
      %v4264 = vmul.f32 %v3188, %v4250
      %v4265 = vmul.f32 %v3189, %v4250
      %v4266 = vmul.f32 %v3190, %v4250
      %v4267 = vmul.f32 %v3191, %v4254
      %v4268 = vmul.f32 %v3192, %v4254
      %v4269 = vmul.f32 %v3193, %v4254
      %v4270 = vmul.f32 %v3194, %v4258
      %v4271 = vmul.f32 %v3195, %v4258
      %v4272 = vmul.f32 %v3196, %v4258
      %v4273 = vmul.f32 %v3197, %v4262
      %v4274 = vmul.f32 %v3198, %v4262
      %v4275 = vmul.f32 %v3199, %v4262
      %4288 = vrot.lane.b32.xlu0 %v4264, 80
      %v4289 = vpop.permute.xlu0 %4288
      %4290 = vrot.lane.b32.xlu0 %v4265, 80
      %v4291 = vpop.permute.xlu0 %4290
      %4292 = vrot.lane.b32.xlu0 %v4266, 80
      %v4293 = vpop.permute.xlu0 %4292
      %4294 = vrot.lane.b32.xlu0 %v4267, 80
      %v4295 = vpop.permute.xlu0 %4294
      %4296 = vrot.lane.b32.xlu0 %v4268, 80
      %v4297 = vpop.permute.xlu0 %4296
      %4298 = vrot.lane.b32.xlu0 %v4269, 80
      %v4299 = vpop.permute.xlu0 %4298
      %4300 = vrot.lane.b32.xlu0 %v4270, 80
      %v4301 = vpop.permute.xlu0 %4300
      %4302 = vrot.lane.b32.xlu0 %v4271, 80
      %v4303 = vpop.permute.xlu0 %4302
      %4304 = vrot.lane.b32.xlu0 %v4272, 80
      %v4305 = vpop.permute.xlu0 %4304
      %4306 = vrot.lane.b32.xlu0 %v4273, 80
      %v4307 = vpop.permute.xlu0 %4306
      %4308 = vrot.lane.b32.xlu0 %v4274, 80
      %v4309 = vpop.permute.xlu0 %4308
      %4310 = vrot.lane.b32.xlu0 %v4275, 80
      %v4311 = vpop.permute.xlu0 %4310
      %v4312 = vsel %vm825, %v4289, %v4291
      %v4313 = vsel %vm825, %v4291, %v4293
      %v4314 = vsel %vm825, %v4295, %v4297
      %v4315 = vsel %vm825, %v4297, %v4299
      %v4316 = vsel %vm825, %v4301, %v4303
      %v4317 = vsel %vm825, %v4303, %v4305
      %v4318 = vsel %vm825, %v4307, %v4309
      %v4319 = vsel %vm825, %v4309, %v4311
      %v4332 = vadd.f32 %v4236, %v4312
      %v4333 = vadd.f32 %v4237, %v4313
      %v4334 = vadd.f32 %v4238, %v4293
      %v4335 = vadd.f32 %v4239, %v4314
      %v4336 = vadd.f32 %v4240, %v4315
      %v4337 = vadd.f32 %v4241, %v4299
      %v4338 = vadd.f32 %v4242, %v4316
      %v4339 = vadd.f32 %v4243, %v4317
      %v4340 = vadd.f32 %v4244, %v4305
      %v4341 = vadd.f32 %v4245, %v4318
      %v4342 = vadd.f32 %v4246, %v4319
      %v4343 = vadd.f32 %v4247, %v4311
      %4344 = vset.pattern.permute.xlu0 12
      %4345 = vperm.xlu0 %4344, %v3184
      %v4346 = vpop.permute.xlu0 %4345
      %4348 = vset.pattern.permute.xlu0 12
      %4349 = vperm.xlu0 %4348, %v3185
      %v4350 = vpop.permute.xlu0 %4349
      %4352 = vset.pattern.permute.xlu0 12
      %4353 = vperm.xlu0 %4352, %v3186
      %v4354 = vpop.permute.xlu0 %4353
      %4356 = vset.pattern.permute.xlu0 12
      %4357 = vperm.xlu0 %4356, %v3187
      %v4358 = vpop.permute.xlu0 %4357
      %v4360 = vmul.f32 %v3188, %v4346
      %v4361 = vmul.f32 %v3189, %v4346
      %v4362 = vmul.f32 %v3190, %v4346
      %v4363 = vmul.f32 %v3191, %v4350
      %v4364 = vmul.f32 %v3192, %v4350
      %v4365 = vmul.f32 %v3193, %v4350
      %v4366 = vmul.f32 %v3194, %v4354
      %v4367 = vmul.f32 %v3195, %v4354
      %v4368 = vmul.f32 %v3196, %v4354
      %v4369 = vmul.f32 %v3197, %v4358
      %v4370 = vmul.f32 %v3198, %v4358
      %v4371 = vmul.f32 %v3199, %v4358
      %4384 = vrot.lane.b32.xlu0 %v4360, 32
      %v4385 = vpop.permute.xlu0 %4384
      %4386 = vrot.lane.b32.xlu0 %v4361, 32
      %v4387 = vpop.permute.xlu0 %4386
      %4388 = vrot.lane.b32.xlu0 %v4362, 32
      %v4389 = vpop.permute.xlu0 %4388
      %4390 = vrot.lane.b32.xlu0 %v4363, 32
      %v4391 = vpop.permute.xlu0 %4390
      %4392 = vrot.lane.b32.xlu0 %v4364, 32
      %v4393 = vpop.permute.xlu0 %4392
      %4394 = vrot.lane.b32.xlu0 %v4365, 32
      %v4395 = vpop.permute.xlu0 %4394
      %4396 = vrot.lane.b32.xlu0 %v4366, 32
      %v4397 = vpop.permute.xlu0 %4396
      %4398 = vrot.lane.b32.xlu0 %v4367, 32
      %v4399 = vpop.permute.xlu0 %4398
      %4400 = vrot.lane.b32.xlu0 %v4368, 32
      %v4401 = vpop.permute.xlu0 %4400
      %4402 = vrot.lane.b32.xlu0 %v4369, 32
      %v4403 = vpop.permute.xlu0 %4402
      %4404 = vrot.lane.b32.xlu0 %v4370, 32
      %v4405 = vpop.permute.xlu0 %4404
      %4406 = vrot.lane.b32.xlu0 %v4371, 32
      %v4407 = vpop.permute.xlu0 %4406
      %v4408 = vsel %vm342, %v4385, %v4387
      %v4409 = vsel %vm342, %v4387, %v4389
      %v4410 = vsel %vm342, %v4391, %v4393
      %v4411 = vsel %vm342, %v4393, %v4395
      %v4412 = vsel %vm342, %v4397, %v4399
      %v4413 = vsel %vm342, %v4399, %v4401
      %v4414 = vsel %vm342, %v4403, %v4405
      %v4415 = vsel %vm342, %v4405, %v4407
      %v4428 = vadd.f32 %v4332, %v4408
      %v4429 = vadd.f32 %v4333, %v4409
      %v4430 = vadd.f32 %v4334, %v4389
      %v4431 = vadd.f32 %v4335, %v4410
      %v4432 = vadd.f32 %v4336, %v4411
      %v4433 = vadd.f32 %v4337, %v4395
      %v4434 = vadd.f32 %v4338, %v4412
      %v4435 = vadd.f32 %v4339, %v4413
      %v4436 = vadd.f32 %v4340, %v4401
      %v4437 = vadd.f32 %v4341, %v4414
      %v4438 = vadd.f32 %v4342, %v4415
      %v4439 = vadd.f32 %v4343, %v4407
      %4440 = vset.pattern.permute.xlu0 17
      %4441 = vperm.xlu0 %4440, %v3184
      %v4442 = vpop.permute.xlu0 %4441
      %4444 = vset.pattern.permute.xlu0 17
      %4445 = vperm.xlu0 %4444, %v3185
      %v4446 = vpop.permute.xlu0 %4445
      %4448 = vset.pattern.permute.xlu0 17
      %4449 = vperm.xlu0 %4448, %v3186
      %v4450 = vpop.permute.xlu0 %4449
      %4452 = vset.pattern.permute.xlu0 17
      %4453 = vperm.xlu0 %4452, %v3187
      %v4454 = vpop.permute.xlu0 %4453
      %v4456 = vmul.f32 %v3436, %v4442
      %v4457 = vmul.f32 %v3437, %v4442
      %v4458 = vmul.f32 %v3438, %v4442
      %v4459 = vmul.f32 %v3439, %v4446
      %v4460 = vmul.f32 %v3440, %v4446
      %v4461 = vmul.f32 %v3441, %v4446
      %v4462 = vmul.f32 %v3442, %v4450
      %v4463 = vmul.f32 %v3443, %v4450
      %v4464 = vmul.f32 %v3444, %v4450
      %v4465 = vmul.f32 %v3445, %v4454
      %v4466 = vmul.f32 %v3446, %v4454
      %v4467 = vmul.f32 %v3447, %v4454
      %4480 = vrot.lane.b32.xlu0 %v4456, 112
      %v4481 = vpop.permute.xlu0 %4480
      %4482 = vrot.lane.b32.xlu0 %v4457, 112
      %v4483 = vpop.permute.xlu0 %4482
      %4484 = vrot.lane.b32.xlu0 %v4458, 112
      %v4485 = vpop.permute.xlu0 %4484
      %4486 = vrot.lane.b32.xlu0 %v4459, 112
      %v4487 = vpop.permute.xlu0 %4486
      %4488 = vrot.lane.b32.xlu0 %v4460, 112
      %v4489 = vpop.permute.xlu0 %4488
      %4490 = vrot.lane.b32.xlu0 %v4461, 112
      %v4491 = vpop.permute.xlu0 %4490
      %4492 = vrot.lane.b32.xlu0 %v4462, 112
      %v4493 = vpop.permute.xlu0 %4492
      %4494 = vrot.lane.b32.xlu0 %v4463, 112
      %v4495 = vpop.permute.xlu0 %4494
      %4496 = vrot.lane.b32.xlu0 %v4464, 112
      %v4497 = vpop.permute.xlu0 %4496
      %4498 = vrot.lane.b32.xlu0 %v4465, 112
      %v4499 = vpop.permute.xlu0 %4498
      %4500 = vrot.lane.b32.xlu0 %v4466, 112
      %v4501 = vpop.permute.xlu0 %4500
      %4502 = vrot.lane.b32.xlu0 %v4467, 112
      %v4503 = vpop.permute.xlu0 %4502
      %v4504 = vsel %vm631, %v4481, %v4483
      %v4505 = vsel %vm631, %v4483, %v4485
      %v4506 = vsel %vm631, %v4487, %v4489
      %v4507 = vsel %vm631, %v4489, %v4491
      %v4508 = vsel %vm631, %v4493, %v4495
      %v4509 = vsel %vm631, %v4495, %v4497
      %v4510 = vsel %vm631, %v4499, %v4501
      %v4511 = vsel %vm631, %v4501, %v4503
      %v4524 = vadd.f32 %v4428, %v4504
      %v4525 = vadd.f32 %v4429, %v4505
      %v4526 = vadd.f32 %v4430, %v4485
      %v4527 = vadd.f32 %v4431, %v4506
      %v4528 = vadd.f32 %v4432, %v4507
      %v4529 = vadd.f32 %v4433, %v4491
      %v4530 = vadd.f32 %v4434, %v4508
      %v4531 = vadd.f32 %v4435, %v4509
      %v4532 = vadd.f32 %v4436, %v4497
      %v4533 = vadd.f32 %v4437, %v4510
      %v4534 = vadd.f32 %v4438, %v4511
      %v4535 = vadd.f32 %v4439, %v4503
      %4536 = vset.pattern.permute.xlu0 22
      %4537 = vperm.xlu0 %4536, %v3184
      %v4538 = vpop.permute.xlu0 %4537
      %4540 = vset.pattern.permute.xlu0 22
      %4541 = vperm.xlu0 %4540, %v3185
      %v4542 = vpop.permute.xlu0 %4541
      %4544 = vset.pattern.permute.xlu0 22
      %4545 = vperm.xlu0 %4544, %v3186
      %v4546 = vpop.permute.xlu0 %4545
      %4548 = vset.pattern.permute.xlu0 22
      %4549 = vperm.xlu0 %4548, %v3187
      %v4550 = vpop.permute.xlu0 %4549
      %v4552 = vmul.f32 %v3436, %v4538
      %v4553 = vmul.f32 %v3437, %v4538
      %v4554 = vmul.f32 %v3438, %v4538
      %v4555 = vmul.f32 %v3439, %v4542
      %v4556 = vmul.f32 %v3440, %v4542
      %v4557 = vmul.f32 %v3441, %v4542
      %v4558 = vmul.f32 %v3442, %v4546
      %v4559 = vmul.f32 %v3443, %v4546
      %v4560 = vmul.f32 %v3444, %v4546
      %v4561 = vmul.f32 %v3445, %v4550
      %v4562 = vmul.f32 %v3446, %v4550
      %v4563 = vmul.f32 %v3447, %v4550
      %4576 = vrot.lane.b32.xlu0 %v4552, 64
      %v4577 = vpop.permute.xlu0 %4576
      %4578 = vrot.lane.b32.xlu0 %v4553, 64
      %v4579 = vpop.permute.xlu0 %4578
      %4580 = vrot.lane.b32.xlu0 %v4554, 64
      %v4581 = vpop.permute.xlu0 %4580
      %4582 = vrot.lane.b32.xlu0 %v4555, 64
      %v4583 = vpop.permute.xlu0 %4582
      %4584 = vrot.lane.b32.xlu0 %v4556, 64
      %v4585 = vpop.permute.xlu0 %4584
      %4586 = vrot.lane.b32.xlu0 %v4557, 64
      %v4587 = vpop.permute.xlu0 %4586
      %4588 = vrot.lane.b32.xlu0 %v4558, 64
      %v4589 = vpop.permute.xlu0 %4588
      %4590 = vrot.lane.b32.xlu0 %v4559, 64
      %v4591 = vpop.permute.xlu0 %4590
      %4592 = vrot.lane.b32.xlu0 %v4560, 64
      %v4593 = vpop.permute.xlu0 %4592
      %4594 = vrot.lane.b32.xlu0 %v4561, 64
      %v4595 = vpop.permute.xlu0 %4594
      %4596 = vrot.lane.b32.xlu0 %v4562, 64
      %v4597 = vpop.permute.xlu0 %4596
      %4598 = vrot.lane.b32.xlu0 %v4563, 64
      %v4599 = vpop.permute.xlu0 %4598
      %v4600 = vsel %vm922, %v4577, %v4579
      %v4601 = vsel %vm922, %v4579, %v4581
      %v4602 = vsel %vm922, %v4583, %v4585
      %v4603 = vsel %vm922, %v4585, %v4587
      %v4604 = vsel %vm922, %v4589, %v4591
      %v4605 = vsel %vm922, %v4591, %v4593
      %v4606 = vsel %vm922, %v4595, %v4597
      %v4607 = vsel %vm922, %v4597, %v4599
      %v4620 = vadd.f32 %v4524, %v4600
      %v4621 = vadd.f32 %v4525, %v4601
      %v4622 = vadd.f32 %v4526, %v4581
      %v4623 = vadd.f32 %v4527, %v4602
      %v4624 = vadd.f32 %v4528, %v4603
      %v4625 = vadd.f32 %v4529, %v4587
      %v4626 = vadd.f32 %v4530, %v4604
      %v4627 = vadd.f32 %v4531, %v4605
      %v4628 = vadd.f32 %v4532, %v4593
      %v4629 = vadd.f32 %v4533, %v4606
      %v4630 = vadd.f32 %v4534, %v4607
      %v4631 = vadd.f32 %v4535, %v4599
      %4644 = vrot.lane.b32.xlu0 %v4620, 122
      %v4645 = vpop.permute.xlu0 %4644
      %4646 = vrot.lane.b32.xlu0 %v4621, 122
      %v4647 = vpop.permute.xlu0 %4646
      %4648 = vrot.lane.b32.xlu0 %v4622, 122
      %v4649 = vpop.permute.xlu0 %4648
      %4650 = vrot.lane.b32.xlu0 %v4623, 122
      %v4651 = vpop.permute.xlu0 %4650
      %4652 = vrot.lane.b32.xlu0 %v4624, 122
      %v4653 = vpop.permute.xlu0 %4652
      %4654 = vrot.lane.b32.xlu0 %v4625, 122
      %v4655 = vpop.permute.xlu0 %4654
      %4656 = vrot.lane.b32.xlu0 %v4626, 122
      %v4657 = vpop.permute.xlu0 %4656
      %4658 = vrot.lane.b32.xlu0 %v4627, 122
      %v4659 = vpop.permute.xlu0 %4658
      %4660 = vrot.lane.b32.xlu0 %v4628, 122
      %v4661 = vpop.permute.xlu0 %4660
      %4662 = vrot.lane.b32.xlu0 %v4629, 122
      %v4663 = vpop.permute.xlu0 %4662
      %4664 = vrot.lane.b32.xlu0 %v4630, 122
      %v4665 = vpop.permute.xlu0 %4664
      %4666 = vrot.lane.b32.xlu0 %v4631, 122
      %v4667 = vpop.permute.xlu0 %4666
      %vm4668 = vcmask 998400
      %v4669 = vsel %vm4668, %v4645, %v4647
      %v4670 = vsel %vm4668, %v4647, %v4649
      %v4671 = vsel %vm4668, %v4651, %v4653
      %v4672 = vsel %vm4668, %v4653, %v4655
      %v4673 = vsel %vm4668, %v4657, %v4659
      %v4674 = vsel %vm4668, %v4659, %v4661
      %v4675 = vsel %vm4668, %v4663, %v4665
      %v4676 = vsel %vm4668, %v4665, %v4667
      %v4689 = vadd.f32 %v4196, %v4669
      %v4690 = vadd.f32 %v4197, %v4670
      %v4691 = vadd.f32 %v4198, %v4649
      %v4692 = vadd.f32 %v4199, %v4671
      %v4693 = vadd.f32 %v4200, %v4672
      %v4694 = vadd.f32 %v4201, %v4655
      %v4695 = vadd.f32 %v4202, %v4673
      %v4696 = vadd.f32 %v4203, %v4674
      %v4697 = vadd.f32 %v4204, %v4661
      %v4698 = vadd.f32 %v4205, %v4675
      %v4699 = vadd.f32 %v4206, %v4676
      %v4700 = vadd.f32 %v4207, %v4667
      %4701 = vset.pattern.permute.xlu0 3
      %4702 = vperm.xlu0 %4701, %v3184
      %v4703 = vpop.permute.xlu0 %4702
      %4705 = vset.pattern.permute.xlu0 3
      %4706 = vperm.xlu0 %4705, %v3185
      %v4707 = vpop.permute.xlu0 %4706
      %4709 = vset.pattern.permute.xlu0 3
      %4710 = vperm.xlu0 %4709, %v3186
      %v4711 = vpop.permute.xlu0 %4710
      %4713 = vset.pattern.permute.xlu0 3
      %4714 = vperm.xlu0 %4713, %v3187
      %v4715 = vpop.permute.xlu0 %4714
      %v4717 = vmul.f32 %v3188, %v4703
      %v4718 = vmul.f32 %v3189, %v4703
      %v4719 = vmul.f32 %v3190, %v4703
      %v4720 = vmul.f32 %v3191, %v4707
      %v4721 = vmul.f32 %v3192, %v4707
      %v4722 = vmul.f32 %v3193, %v4707
      %v4723 = vmul.f32 %v3194, %v4711
      %v4724 = vmul.f32 %v3195, %v4711
      %v4725 = vmul.f32 %v3196, %v4711
      %v4726 = vmul.f32 %v3197, %v4715
      %v4727 = vmul.f32 %v3198, %v4715
      %v4728 = vmul.f32 %v3199, %v4715
      %v4729 = vadd.f32 %v4717, 0.0
      %v4730 = vadd.f32 %v4718, 0.0
      %v4731 = vadd.f32 %v4719, 0.0
      %v4732 = vadd.f32 %v4720, 0.0
      %v4733 = vadd.f32 %v4721, 0.0
      %v4734 = vadd.f32 %v4722, 0.0
      %v4735 = vadd.f32 %v4723, 0.0
      %v4736 = vadd.f32 %v4724, 0.0
      %v4737 = vadd.f32 %v4725, 0.0
      %v4738 = vadd.f32 %v4726, 0.0
      %v4739 = vadd.f32 %v4727, 0.0
      %v4740 = vadd.f32 %v4728, 0.0
      %4741 = vset.pattern.permute.xlu0 8
      %4742 = vperm.xlu0 %4741, %v3184
      %v4743 = vpop.permute.xlu0 %4742
      %4745 = vset.pattern.permute.xlu0 8
      %4746 = vperm.xlu0 %4745, %v3185
      %v4747 = vpop.permute.xlu0 %4746
      %4749 = vset.pattern.permute.xlu0 8
      %4750 = vperm.xlu0 %4749, %v3186
      %v4751 = vpop.permute.xlu0 %4750
      %4753 = vset.pattern.permute.xlu0 8
      %4754 = vperm.xlu0 %4753, %v3187
      %v4755 = vpop.permute.xlu0 %4754
      %v4757 = vmul.f32 %v3188, %v4743
      %v4758 = vmul.f32 %v3189, %v4743
      %v4759 = vmul.f32 %v3190, %v4743
      %v4760 = vmul.f32 %v3191, %v4747
      %v4761 = vmul.f32 %v3192, %v4747
      %v4762 = vmul.f32 %v3193, %v4747
      %v4763 = vmul.f32 %v3194, %v4751
      %v4764 = vmul.f32 %v3195, %v4751
      %v4765 = vmul.f32 %v3196, %v4751
      %v4766 = vmul.f32 %v3197, %v4755
      %v4767 = vmul.f32 %v3198, %v4755
      %v4768 = vmul.f32 %v3199, %v4755
      %4781 = vrot.lane.b32.xlu0 %v4757, 80
      %v4782 = vpop.permute.xlu0 %4781
      %4783 = vrot.lane.b32.xlu0 %v4758, 80
      %v4784 = vpop.permute.xlu0 %4783
      %4785 = vrot.lane.b32.xlu0 %v4759, 80
      %v4786 = vpop.permute.xlu0 %4785
      %4787 = vrot.lane.b32.xlu0 %v4760, 80
      %v4788 = vpop.permute.xlu0 %4787
      %4789 = vrot.lane.b32.xlu0 %v4761, 80
      %v4790 = vpop.permute.xlu0 %4789
      %4791 = vrot.lane.b32.xlu0 %v4762, 80
      %v4792 = vpop.permute.xlu0 %4791
      %4793 = vrot.lane.b32.xlu0 %v4763, 80
      %v4794 = vpop.permute.xlu0 %4793
      %4795 = vrot.lane.b32.xlu0 %v4764, 80
      %v4796 = vpop.permute.xlu0 %4795
      %4797 = vrot.lane.b32.xlu0 %v4765, 80
      %v4798 = vpop.permute.xlu0 %4797
      %4799 = vrot.lane.b32.xlu0 %v4766, 80
      %v4800 = vpop.permute.xlu0 %4799
      %4801 = vrot.lane.b32.xlu0 %v4767, 80
      %v4802 = vpop.permute.xlu0 %4801
      %4803 = vrot.lane.b32.xlu0 %v4768, 80
      %v4804 = vpop.permute.xlu0 %4803
      %v4805 = vsel %vm825, %v4782, %v4784
      %v4806 = vsel %vm825, %v4784, %v4786
      %v4807 = vsel %vm825, %v4788, %v4790
      %v4808 = vsel %vm825, %v4790, %v4792
      %v4809 = vsel %vm825, %v4794, %v4796
      %v4810 = vsel %vm825, %v4796, %v4798
      %v4811 = vsel %vm825, %v4800, %v4802
      %v4812 = vsel %vm825, %v4802, %v4804
      %v4825 = vadd.f32 %v4729, %v4805
      %v4826 = vadd.f32 %v4730, %v4806
      %v4827 = vadd.f32 %v4731, %v4786
      %v4828 = vadd.f32 %v4732, %v4807
      %v4829 = vadd.f32 %v4733, %v4808
      %v4830 = vadd.f32 %v4734, %v4792
      %v4831 = vadd.f32 %v4735, %v4809
      %v4832 = vadd.f32 %v4736, %v4810
      %v4833 = vadd.f32 %v4737, %v4798
      %v4834 = vadd.f32 %v4738, %v4811
      %v4835 = vadd.f32 %v4739, %v4812
      %v4836 = vadd.f32 %v4740, %v4804
      %4837 = vset.pattern.permute.xlu0 13
      %4838 = vperm.xlu0 %4837, %v3184
      %v4839 = vpop.permute.xlu0 %4838
      %4841 = vset.pattern.permute.xlu0 13
      %4842 = vperm.xlu0 %4841, %v3185
      %v4843 = vpop.permute.xlu0 %4842
      %4845 = vset.pattern.permute.xlu0 13
      %4846 = vperm.xlu0 %4845, %v3186
      %v4847 = vpop.permute.xlu0 %4846
      %4849 = vset.pattern.permute.xlu0 13
      %4850 = vperm.xlu0 %4849, %v3187
      %v4851 = vpop.permute.xlu0 %4850
      %v4853 = vmul.f32 %v3188, %v4839
      %v4854 = vmul.f32 %v3189, %v4839
      %v4855 = vmul.f32 %v3190, %v4839
      %v4856 = vmul.f32 %v3191, %v4843
      %v4857 = vmul.f32 %v3192, %v4843
      %v4858 = vmul.f32 %v3193, %v4843
      %v4859 = vmul.f32 %v3194, %v4847
      %v4860 = vmul.f32 %v3195, %v4847
      %v4861 = vmul.f32 %v3196, %v4847
      %v4862 = vmul.f32 %v3197, %v4851
      %v4863 = vmul.f32 %v3198, %v4851
      %v4864 = vmul.f32 %v3199, %v4851
      %4877 = vrot.lane.b32.xlu0 %v4853, 32
      %v4878 = vpop.permute.xlu0 %4877
      %4879 = vrot.lane.b32.xlu0 %v4854, 32
      %v4880 = vpop.permute.xlu0 %4879
      %4881 = vrot.lane.b32.xlu0 %v4855, 32
      %v4882 = vpop.permute.xlu0 %4881
      %4883 = vrot.lane.b32.xlu0 %v4856, 32
      %v4884 = vpop.permute.xlu0 %4883
      %4885 = vrot.lane.b32.xlu0 %v4857, 32
      %v4886 = vpop.permute.xlu0 %4885
      %4887 = vrot.lane.b32.xlu0 %v4858, 32
      %v4888 = vpop.permute.xlu0 %4887
      %4889 = vrot.lane.b32.xlu0 %v4859, 32
      %v4890 = vpop.permute.xlu0 %4889
      %4891 = vrot.lane.b32.xlu0 %v4860, 32
      %v4892 = vpop.permute.xlu0 %4891
      %4893 = vrot.lane.b32.xlu0 %v4861, 32
      %v4894 = vpop.permute.xlu0 %4893
      %4895 = vrot.lane.b32.xlu0 %v4862, 32
      %v4896 = vpop.permute.xlu0 %4895
      %4897 = vrot.lane.b32.xlu0 %v4863, 32
      %v4898 = vpop.permute.xlu0 %4897
      %4899 = vrot.lane.b32.xlu0 %v4864, 32
      %v4900 = vpop.permute.xlu0 %4899
      %v4901 = vsel %vm342, %v4878, %v4880
      %v4902 = vsel %vm342, %v4880, %v4882
      %v4903 = vsel %vm342, %v4884, %v4886
      %v4904 = vsel %vm342, %v4886, %v4888
      %v4905 = vsel %vm342, %v4890, %v4892
      %v4906 = vsel %vm342, %v4892, %v4894
      %v4907 = vsel %vm342, %v4896, %v4898
      %v4908 = vsel %vm342, %v4898, %v4900
      %v4921 = vadd.f32 %v4825, %v4901
      %v4922 = vadd.f32 %v4826, %v4902
      %v4923 = vadd.f32 %v4827, %v4882
      %v4924 = vadd.f32 %v4828, %v4903
      %v4925 = vadd.f32 %v4829, %v4904
      %v4926 = vadd.f32 %v4830, %v4888
      %v4927 = vadd.f32 %v4831, %v4905
      %v4928 = vadd.f32 %v4832, %v4906
      %v4929 = vadd.f32 %v4833, %v4894
      %v4930 = vadd.f32 %v4834, %v4907
      %v4931 = vadd.f32 %v4835, %v4908
      %v4932 = vadd.f32 %v4836, %v4900
      %4933 = vset.pattern.permute.xlu0 18
      %4934 = vperm.xlu0 %4933, %v3184
      %v4935 = vpop.permute.xlu0 %4934
      %4937 = vset.pattern.permute.xlu0 18
      %4938 = vperm.xlu0 %4937, %v3185
      %v4939 = vpop.permute.xlu0 %4938
      %4941 = vset.pattern.permute.xlu0 18
      %4942 = vperm.xlu0 %4941, %v3186
      %v4943 = vpop.permute.xlu0 %4942
      %4945 = vset.pattern.permute.xlu0 18
      %4946 = vperm.xlu0 %4945, %v3187
      %v4947 = vpop.permute.xlu0 %4946
      %v4949 = vmul.f32 %v3436, %v4935
      %v4950 = vmul.f32 %v3437, %v4935
      %v4951 = vmul.f32 %v3438, %v4935
      %v4952 = vmul.f32 %v3439, %v4939
      %v4953 = vmul.f32 %v3440, %v4939
      %v4954 = vmul.f32 %v3441, %v4939
      %v4955 = vmul.f32 %v3442, %v4943
      %v4956 = vmul.f32 %v3443, %v4943
      %v4957 = vmul.f32 %v3444, %v4943
      %v4958 = vmul.f32 %v3445, %v4947
      %v4959 = vmul.f32 %v3446, %v4947
      %v4960 = vmul.f32 %v3447, %v4947
      %4973 = vrot.lane.b32.xlu0 %v4949, 112
      %v4974 = vpop.permute.xlu0 %4973
      %4975 = vrot.lane.b32.xlu0 %v4950, 112
      %v4976 = vpop.permute.xlu0 %4975
      %4977 = vrot.lane.b32.xlu0 %v4951, 112
      %v4978 = vpop.permute.xlu0 %4977
      %4979 = vrot.lane.b32.xlu0 %v4952, 112
      %v4980 = vpop.permute.xlu0 %4979
      %4981 = vrot.lane.b32.xlu0 %v4953, 112
      %v4982 = vpop.permute.xlu0 %4981
      %4983 = vrot.lane.b32.xlu0 %v4954, 112
      %v4984 = vpop.permute.xlu0 %4983
      %4985 = vrot.lane.b32.xlu0 %v4955, 112
      %v4986 = vpop.permute.xlu0 %4985
      %4987 = vrot.lane.b32.xlu0 %v4956, 112
      %v4988 = vpop.permute.xlu0 %4987
      %4989 = vrot.lane.b32.xlu0 %v4957, 112
      %v4990 = vpop.permute.xlu0 %4989
      %4991 = vrot.lane.b32.xlu0 %v4958, 112
      %v4992 = vpop.permute.xlu0 %4991
      %4993 = vrot.lane.b32.xlu0 %v4959, 112
      %v4994 = vpop.permute.xlu0 %4993
      %4995 = vrot.lane.b32.xlu0 %v4960, 112
      %v4996 = vpop.permute.xlu0 %4995
      %v4997 = vsel %vm631, %v4974, %v4976
      %v4998 = vsel %vm631, %v4976, %v4978
      %v4999 = vsel %vm631, %v4980, %v4982
      %v5000 = vsel %vm631, %v4982, %v4984
      %v5001 = vsel %vm631, %v4986, %v4988
      %v5002 = vsel %vm631, %v4988, %v4990
      %v5003 = vsel %vm631, %v4992, %v4994
      %v5004 = vsel %vm631, %v4994, %v4996
      %v5017 = vadd.f32 %v4921, %v4997
      %v5018 = vadd.f32 %v4922, %v4998
      %v5019 = vadd.f32 %v4923, %v4978
      %v5020 = vadd.f32 %v4924, %v4999
      %v5021 = vadd.f32 %v4925, %v5000
      %v5022 = vadd.f32 %v4926, %v4984
      %v5023 = vadd.f32 %v4927, %v5001
      %v5024 = vadd.f32 %v4928, %v5002
      %v5025 = vadd.f32 %v4929, %v4990
      %v5026 = vadd.f32 %v4930, %v5003
      %v5027 = vadd.f32 %v4931, %v5004
      %v5028 = vadd.f32 %v4932, %v4996
      %5029 = vset.pattern.permute.xlu0 23
      %5030 = vperm.xlu0 %5029, %v3184
      %v5031 = vpop.permute.xlu0 %5030
      %5033 = vset.pattern.permute.xlu0 23
      %5034 = vperm.xlu0 %5033, %v3185
      %v5035 = vpop.permute.xlu0 %5034
      %5037 = vset.pattern.permute.xlu0 23
      %5038 = vperm.xlu0 %5037, %v3186
      %v5039 = vpop.permute.xlu0 %5038
      %5041 = vset.pattern.permute.xlu0 23
      %5042 = vperm.xlu0 %5041, %v3187
      %v5043 = vpop.permute.xlu0 %5042
      %v5045 = vmul.f32 %v3436, %v5031
      %v5046 = vmul.f32 %v3437, %v5031
      %v5047 = vmul.f32 %v3438, %v5031
      %v5048 = vmul.f32 %v3439, %v5035
      %v5049 = vmul.f32 %v3440, %v5035
      %v5050 = vmul.f32 %v3441, %v5035
      %v5051 = vmul.f32 %v3442, %v5039
      %v5052 = vmul.f32 %v3443, %v5039
      %v5053 = vmul.f32 %v3444, %v5039
      %v5054 = vmul.f32 %v3445, %v5043
      %v5055 = vmul.f32 %v3446, %v5043
      %v5056 = vmul.f32 %v3447, %v5043
      %5069 = vrot.lane.b32.xlu0 %v5045, 64
      %v5070 = vpop.permute.xlu0 %5069
      %5071 = vrot.lane.b32.xlu0 %v5046, 64
      %v5072 = vpop.permute.xlu0 %5071
      %5073 = vrot.lane.b32.xlu0 %v5047, 64
      %v5074 = vpop.permute.xlu0 %5073
      %5075 = vrot.lane.b32.xlu0 %v5048, 64
      %v5076 = vpop.permute.xlu0 %5075
      %5077 = vrot.lane.b32.xlu0 %v5049, 64
      %v5078 = vpop.permute.xlu0 %5077
      %5079 = vrot.lane.b32.xlu0 %v5050, 64
      %v5080 = vpop.permute.xlu0 %5079
      %5081 = vrot.lane.b32.xlu0 %v5051, 64
      %v5082 = vpop.permute.xlu0 %5081
      %5083 = vrot.lane.b32.xlu0 %v5052, 64
      %v5084 = vpop.permute.xlu0 %5083
      %5085 = vrot.lane.b32.xlu0 %v5053, 64
      %v5086 = vpop.permute.xlu0 %5085
      %5087 = vrot.lane.b32.xlu0 %v5054, 64
      %v5088 = vpop.permute.xlu0 %5087
      %5089 = vrot.lane.b32.xlu0 %v5055, 64
      %v5090 = vpop.permute.xlu0 %5089
      %5091 = vrot.lane.b32.xlu0 %v5056, 64
      %v5092 = vpop.permute.xlu0 %5091
      %v5093 = vsel %vm922, %v5070, %v5072
      %v5094 = vsel %vm922, %v5072, %v5074
      %v5095 = vsel %vm922, %v5076, %v5078
      %v5096 = vsel %vm922, %v5078, %v5080
      %v5097 = vsel %vm922, %v5082, %v5084
      %v5098 = vsel %vm922, %v5084, %v5086
      %v5099 = vsel %vm922, %v5088, %v5090
      %v5100 = vsel %vm922, %v5090, %v5092
      %v5113 = vadd.f32 %v5017, %v5093
      %v5114 = vadd.f32 %v5018, %v5094
      %v5115 = vadd.f32 %v5019, %v5074
      %v5116 = vadd.f32 %v5020, %v5095
      %v5117 = vadd.f32 %v5021, %v5096
      %v5118 = vadd.f32 %v5022, %v5080
      %v5119 = vadd.f32 %v5023, %v5097
      %v5120 = vadd.f32 %v5024, %v5098
      %v5121 = vadd.f32 %v5025, %v5086
      %v5122 = vadd.f32 %v5026, %v5099
      %v5123 = vadd.f32 %v5027, %v5100
      %v5124 = vadd.f32 %v5028, %v5092
      %s5125 = scalar_lea.vmem %s1, 16
      %v5126 = vld [vmem:[%s5125] ss:$8 sm:$0x3]
      %v5128 = vlaneseq
      %v5129 = vshrl.u32 %v5128, 7
      %v5130 = vsub.s32 0, %v5129
      %v5131 = vrot.slane %v5126, %v5130
      %v5132 = vlaneseq
      %v5133 = vshrl.u32 %v5132, 7
      %v5134 = vsub.s32 1, %v5133
      %v5135 = vrot.slane %v5126, %v5134
      %5136 = vrot.lane.b32.xlu0 %v5131, 19
      %v5137 = vpop.permute.xlu0 %5136
      %5138 = vrot.lane.b32.xlu0 %v5135, 19
      %v5139 = vpop.permute.xlu0 %5138
      %vm5140 = vcmask 154624
      %v5141 = vsel %vm5140, %v5137, %v5139
      %v5145 = vmul.f32 %v5113, %v5137
      %v5146 = vmul.f32 %v5114, %v5141
      %v5147 = vmul.f32 %v5115, %v5139
      %v5148 = vmul.f32 %v5116, %v5137
      %v5149 = vmul.f32 %v5117, %v5141
      %v5150 = vmul.f32 %v5118, %v5139
      %v5151 = vmul.f32 %v5119, %v5137
      %v5152 = vmul.f32 %v5120, %v5141
      %v5153 = vmul.f32 %v5121, %v5139
      %v5154 = vmul.f32 %v5122, %v5137
      %v5155 = vmul.f32 %v5123, %v5141
      %v5156 = vmul.f32 %v5124, %v5139
      %5169 = vrot.lane.b32.xlu0 %v5145, 119
      %v5170 = vpop.permute.xlu0 %5169
      %5171 = vrot.lane.b32.xlu0 %v5146, 119
      %v5172 = vpop.permute.xlu0 %5171
      %5173 = vrot.lane.b32.xlu0 %v5147, 119
      %v5174 = vpop.permute.xlu0 %5173
      %5175 = vrot.lane.b32.xlu0 %v5148, 119
      %v5176 = vpop.permute.xlu0 %5175
      %5177 = vrot.lane.b32.xlu0 %v5149, 119
      %v5178 = vpop.permute.xlu0 %5177
      %5179 = vrot.lane.b32.xlu0 %v5150, 119
      %v5180 = vpop.permute.xlu0 %5179
      %5181 = vrot.lane.b32.xlu0 %v5151, 119
      %v5182 = vpop.permute.xlu0 %5181
      %5183 = vrot.lane.b32.xlu0 %v5152, 119
      %v5184 = vpop.permute.xlu0 %5183
      %5185 = vrot.lane.b32.xlu0 %v5153, 119
      %v5186 = vpop.permute.xlu0 %5185
      %5187 = vrot.lane.b32.xlu0 %v5154, 119
      %v5188 = vpop.permute.xlu0 %5187
      %5189 = vrot.lane.b32.xlu0 %v5155, 119
      %v5190 = vpop.permute.xlu0 %5189
      %5191 = vrot.lane.b32.xlu0 %v5156, 119
      %v5192 = vpop.permute.xlu0 %5191
      %vm5193 = vcmask 973824
      %v5194 = vsel %vm5193, %v5170, %v5172
      %v5195 = vsel %vm5193, %v5172, %v5174
      %v5196 = vsel %vm5193, %v5176, %v5178
      %v5197 = vsel %vm5193, %v5178, %v5180
      %v5198 = vsel %vm5193, %v5182, %v5184
      %v5199 = vsel %vm5193, %v5184, %v5186
      %v5200 = vsel %vm5193, %v5188, %v5190
      %v5201 = vsel %vm5193, %v5190, %v5192
      %v5214 = vadd.f32 %v4689, %v5194
      %v5215 = vadd.f32 %v4690, %v5195
      %v5216 = vadd.f32 %v4691, %v5174
      %v5217 = vadd.f32 %v4692, %v5196
      %v5218 = vadd.f32 %v4693, %v5197
      %v5219 = vadd.f32 %v4694, %v5180
      %v5220 = vadd.f32 %v4695, %v5198
      %v5221 = vadd.f32 %v4696, %v5199
      %v5222 = vadd.f32 %v4697, %v5186
      %v5223 = vadd.f32 %v4698, %v5200
      %v5224 = vadd.f32 %v4699, %v5201
      %v5225 = vadd.f32 %v4700, %v5192
      %5226 = vset.pattern.permute.xlu0 4
      %5227 = vperm.xlu0 %5226, %v3184
      %v5228 = vpop.permute.xlu0 %5227
      %5230 = vset.pattern.permute.xlu0 4
      %5231 = vperm.xlu0 %5230, %v3185
      %v5232 = vpop.permute.xlu0 %5231
      %5234 = vset.pattern.permute.xlu0 4
      %5235 = vperm.xlu0 %5234, %v3186
      %v5236 = vpop.permute.xlu0 %5235
      %5238 = vset.pattern.permute.xlu0 4
      %5239 = vperm.xlu0 %5238, %v3187
      %v5240 = vpop.permute.xlu0 %5239
      %v5242 = vmul.f32 %v3188, %v5228
      %v5243 = vmul.f32 %v3189, %v5228
      %v5244 = vmul.f32 %v3190, %v5228
      %v5245 = vmul.f32 %v3191, %v5232
      %v5246 = vmul.f32 %v3192, %v5232
      %v5247 = vmul.f32 %v3193, %v5232
      %v5248 = vmul.f32 %v3194, %v5236
      %v5249 = vmul.f32 %v3195, %v5236
      %v5250 = vmul.f32 %v3196, %v5236
      %v5251 = vmul.f32 %v3197, %v5240
      %v5252 = vmul.f32 %v3198, %v5240
      %v5253 = vmul.f32 %v3199, %v5240
      %v5254 = vadd.f32 %v5242, 0.0
      %v5255 = vadd.f32 %v5243, 0.0
      %v5256 = vadd.f32 %v5244, 0.0
      %v5257 = vadd.f32 %v5245, 0.0
      %v5258 = vadd.f32 %v5246, 0.0
      %v5259 = vadd.f32 %v5247, 0.0
      %v5260 = vadd.f32 %v5248, 0.0
      %v5261 = vadd.f32 %v5249, 0.0
      %v5262 = vadd.f32 %v5250, 0.0
      %v5263 = vadd.f32 %v5251, 0.0
      %v5264 = vadd.f32 %v5252, 0.0
      %v5265 = vadd.f32 %v5253, 0.0
      %5266 = vset.pattern.permute.xlu0 9
      %5267 = vperm.xlu0 %5266, %v3184
      %v5268 = vpop.permute.xlu0 %5267
      %5270 = vset.pattern.permute.xlu0 9
      %5271 = vperm.xlu0 %5270, %v3185
      %v5272 = vpop.permute.xlu0 %5271
      %5274 = vset.pattern.permute.xlu0 9
      %5275 = vperm.xlu0 %5274, %v3186
      %v5276 = vpop.permute.xlu0 %5275
      %5278 = vset.pattern.permute.xlu0 9
      %5279 = vperm.xlu0 %5278, %v3187
      %v5280 = vpop.permute.xlu0 %5279
      %v5282 = vmul.f32 %v3188, %v5268
      %v5283 = vmul.f32 %v3189, %v5268
      %v5284 = vmul.f32 %v3190, %v5268
      %v5285 = vmul.f32 %v3191, %v5272
      %v5286 = vmul.f32 %v3192, %v5272
      %v5287 = vmul.f32 %v3193, %v5272
      %v5288 = vmul.f32 %v3194, %v5276
      %v5289 = vmul.f32 %v3195, %v5276
      %v5290 = vmul.f32 %v3196, %v5276
      %v5291 = vmul.f32 %v3197, %v5280
      %v5292 = vmul.f32 %v3198, %v5280
      %v5293 = vmul.f32 %v3199, %v5280
      %5306 = vrot.lane.b32.xlu0 %v5282, 80
      %v5307 = vpop.permute.xlu0 %5306
      %5308 = vrot.lane.b32.xlu0 %v5283, 80
      %v5309 = vpop.permute.xlu0 %5308
      %5310 = vrot.lane.b32.xlu0 %v5284, 80
      %v5311 = vpop.permute.xlu0 %5310
      %5312 = vrot.lane.b32.xlu0 %v5285, 80
      %v5313 = vpop.permute.xlu0 %5312
      %5314 = vrot.lane.b32.xlu0 %v5286, 80
      %v5315 = vpop.permute.xlu0 %5314
      %5316 = vrot.lane.b32.xlu0 %v5287, 80
      %v5317 = vpop.permute.xlu0 %5316
      %5318 = vrot.lane.b32.xlu0 %v5288, 80
      %v5319 = vpop.permute.xlu0 %5318
      %5320 = vrot.lane.b32.xlu0 %v5289, 80
      %v5321 = vpop.permute.xlu0 %5320
      %5322 = vrot.lane.b32.xlu0 %v5290, 80
      %v5323 = vpop.permute.xlu0 %5322
      %5324 = vrot.lane.b32.xlu0 %v5291, 80
      %v5325 = vpop.permute.xlu0 %5324
      %5326 = vrot.lane.b32.xlu0 %v5292, 80
      %v5327 = vpop.permute.xlu0 %5326
      %5328 = vrot.lane.b32.xlu0 %v5293, 80
      %v5329 = vpop.permute.xlu0 %5328
      %v5330 = vsel %vm825, %v5307, %v5309
      %v5331 = vsel %vm825, %v5309, %v5311
      %v5332 = vsel %vm825, %v5313, %v5315
      %v5333 = vsel %vm825, %v5315, %v5317
      %v5334 = vsel %vm825, %v5319, %v5321
      %v5335 = vsel %vm825, %v5321, %v5323
      %v5336 = vsel %vm825, %v5325, %v5327
      %v5337 = vsel %vm825, %v5327, %v5329
      %v5350 = vadd.f32 %v5254, %v5330
      %v5351 = vadd.f32 %v5255, %v5331
      %v5352 = vadd.f32 %v5256, %v5311
      %v5353 = vadd.f32 %v5257, %v5332
      %v5354 = vadd.f32 %v5258, %v5333
      %v5355 = vadd.f32 %v5259, %v5317
      %v5356 = vadd.f32 %v5260, %v5334
      %v5357 = vadd.f32 %v5261, %v5335
      %v5358 = vadd.f32 %v5262, %v5323
      %v5359 = vadd.f32 %v5263, %v5336
      %v5360 = vadd.f32 %v5264, %v5337
      %v5361 = vadd.f32 %v5265, %v5329
      %5362 = vset.pattern.permute.xlu0 14
      %5363 = vperm.xlu0 %5362, %v3184
      %v5364 = vpop.permute.xlu0 %5363
      %5366 = vset.pattern.permute.xlu0 14
      %5367 = vperm.xlu0 %5366, %v3185
      %v5368 = vpop.permute.xlu0 %5367
      %5370 = vset.pattern.permute.xlu0 14
      %5371 = vperm.xlu0 %5370, %v3186
      %v5372 = vpop.permute.xlu0 %5371
      %5374 = vset.pattern.permute.xlu0 14
      %5375 = vperm.xlu0 %5374, %v3187
      %v5376 = vpop.permute.xlu0 %5375
      %v5378 = vmul.f32 %v3188, %v5364
      %v5379 = vmul.f32 %v3189, %v5364
      %v5380 = vmul.f32 %v3190, %v5364
      %v5381 = vmul.f32 %v3191, %v5368
      %v5382 = vmul.f32 %v3192, %v5368
      %v5383 = vmul.f32 %v3193, %v5368
      %v5384 = vmul.f32 %v3194, %v5372
      %v5385 = vmul.f32 %v3195, %v5372
      %v5386 = vmul.f32 %v3196, %v5372
      %v5387 = vmul.f32 %v3197, %v5376
      %v5388 = vmul.f32 %v3198, %v5376
      %v5389 = vmul.f32 %v3199, %v5376
      %5402 = vrot.lane.b32.xlu0 %v5378, 32
      %v5403 = vpop.permute.xlu0 %5402
      %5404 = vrot.lane.b32.xlu0 %v5379, 32
      %v5405 = vpop.permute.xlu0 %5404
      %5406 = vrot.lane.b32.xlu0 %v5380, 32
      %v5407 = vpop.permute.xlu0 %5406
      %5408 = vrot.lane.b32.xlu0 %v5381, 32
      %v5409 = vpop.permute.xlu0 %5408
      %5410 = vrot.lane.b32.xlu0 %v5382, 32
      %v5411 = vpop.permute.xlu0 %5410
      %5412 = vrot.lane.b32.xlu0 %v5383, 32
      %v5413 = vpop.permute.xlu0 %5412
      %5414 = vrot.lane.b32.xlu0 %v5384, 32
      %v5415 = vpop.permute.xlu0 %5414
      %5416 = vrot.lane.b32.xlu0 %v5385, 32
      %v5417 = vpop.permute.xlu0 %5416
      %5418 = vrot.lane.b32.xlu0 %v5386, 32
      %v5419 = vpop.permute.xlu0 %5418
      %5420 = vrot.lane.b32.xlu0 %v5387, 32
      %v5421 = vpop.permute.xlu0 %5420
      %5422 = vrot.lane.b32.xlu0 %v5388, 32
      %v5423 = vpop.permute.xlu0 %5422
      %5424 = vrot.lane.b32.xlu0 %v5389, 32
      %v5425 = vpop.permute.xlu0 %5424
      %v5426 = vsel %vm342, %v5403, %v5405
      %v5427 = vsel %vm342, %v5405, %v5407
      %v5428 = vsel %vm342, %v5409, %v5411
      %v5429 = vsel %vm342, %v5411, %v5413
      %v5430 = vsel %vm342, %v5415, %v5417
      %v5431 = vsel %vm342, %v5417, %v5419
      %v5432 = vsel %vm342, %v5421, %v5423
      %v5433 = vsel %vm342, %v5423, %v5425
      %v5446 = vadd.f32 %v5350, %v5426
      %v5447 = vadd.f32 %v5351, %v5427
      %v5448 = vadd.f32 %v5352, %v5407
      %v5449 = vadd.f32 %v5353, %v5428
      %v5450 = vadd.f32 %v5354, %v5429
      %v5451 = vadd.f32 %v5355, %v5413
      %v5452 = vadd.f32 %v5356, %v5430
      %v5453 = vadd.f32 %v5357, %v5431
      %v5454 = vadd.f32 %v5358, %v5419
      %v5455 = vadd.f32 %v5359, %v5432
      %v5456 = vadd.f32 %v5360, %v5433
      %v5457 = vadd.f32 %v5361, %v5425
      %5458 = vset.pattern.permute.xlu0 19
      %5459 = vperm.xlu0 %5458, %v3184
      %v5460 = vpop.permute.xlu0 %5459
      %5462 = vset.pattern.permute.xlu0 19
      %5463 = vperm.xlu0 %5462, %v3185
      %v5464 = vpop.permute.xlu0 %5463
      %5466 = vset.pattern.permute.xlu0 19
      %5467 = vperm.xlu0 %5466, %v3186
      %v5468 = vpop.permute.xlu0 %5467
      %5470 = vset.pattern.permute.xlu0 19
      %5471 = vperm.xlu0 %5470, %v3187
      %v5472 = vpop.permute.xlu0 %5471
      %v5474 = vmul.f32 %v3436, %v5460
      %v5475 = vmul.f32 %v3437, %v5460
      %v5476 = vmul.f32 %v3438, %v5460
      %v5477 = vmul.f32 %v3439, %v5464
      %v5478 = vmul.f32 %v3440, %v5464
      %v5479 = vmul.f32 %v3441, %v5464
      %v5480 = vmul.f32 %v3442, %v5468
      %v5481 = vmul.f32 %v3443, %v5468
      %v5482 = vmul.f32 %v3444, %v5468
      %v5483 = vmul.f32 %v3445, %v5472
      %v5484 = vmul.f32 %v3446, %v5472
      %v5485 = vmul.f32 %v3447, %v5472
      %5498 = vrot.lane.b32.xlu0 %v5474, 112
      %v5499 = vpop.permute.xlu0 %5498
      %5500 = vrot.lane.b32.xlu0 %v5475, 112
      %v5501 = vpop.permute.xlu0 %5500
      %5502 = vrot.lane.b32.xlu0 %v5476, 112
      %v5503 = vpop.permute.xlu0 %5502
      %5504 = vrot.lane.b32.xlu0 %v5477, 112
      %v5505 = vpop.permute.xlu0 %5504
      %5506 = vrot.lane.b32.xlu0 %v5478, 112
      %v5507 = vpop.permute.xlu0 %5506
      %5508 = vrot.lane.b32.xlu0 %v5479, 112
      %v5509 = vpop.permute.xlu0 %5508
      %5510 = vrot.lane.b32.xlu0 %v5480, 112
      %v5511 = vpop.permute.xlu0 %5510
      %5512 = vrot.lane.b32.xlu0 %v5481, 112
      %v5513 = vpop.permute.xlu0 %5512
      %5514 = vrot.lane.b32.xlu0 %v5482, 112
      %v5515 = vpop.permute.xlu0 %5514
      %5516 = vrot.lane.b32.xlu0 %v5483, 112
      %v5517 = vpop.permute.xlu0 %5516
      %5518 = vrot.lane.b32.xlu0 %v5484, 112
      %v5519 = vpop.permute.xlu0 %5518
      %5520 = vrot.lane.b32.xlu0 %v5485, 112
      %v5521 = vpop.permute.xlu0 %5520
      %v5522 = vsel %vm631, %v5499, %v5501
      %v5523 = vsel %vm631, %v5501, %v5503
      %v5524 = vsel %vm631, %v5505, %v5507
      %v5525 = vsel %vm631, %v5507, %v5509
      %v5526 = vsel %vm631, %v5511, %v5513
      %v5527 = vsel %vm631, %v5513, %v5515
      %v5528 = vsel %vm631, %v5517, %v5519
      %v5529 = vsel %vm631, %v5519, %v5521
      %v5542 = vadd.f32 %v5446, %v5522
      %v5543 = vadd.f32 %v5447, %v5523
      %v5544 = vadd.f32 %v5448, %v5503
      %v5545 = vadd.f32 %v5449, %v5524
      %v5546 = vadd.f32 %v5450, %v5525
      %v5547 = vadd.f32 %v5451, %v5509
      %v5548 = vadd.f32 %v5452, %v5526
      %v5549 = vadd.f32 %v5453, %v5527
      %v5550 = vadd.f32 %v5454, %v5515
      %v5551 = vadd.f32 %v5455, %v5528
      %v5552 = vadd.f32 %v5456, %v5529
      %v5553 = vadd.f32 %v5457, %v5521
      %5554 = vset.pattern.permute.xlu0 24
      %5555 = vperm.xlu0 %5554, %v3184
      %v5556 = vpop.permute.xlu0 %5555
      %5558 = vset.pattern.permute.xlu0 24
      %5559 = vperm.xlu0 %5558, %v3185
      %v5560 = vpop.permute.xlu0 %5559
      %5562 = vset.pattern.permute.xlu0 24
      %5563 = vperm.xlu0 %5562, %v3186
      %v5564 = vpop.permute.xlu0 %5563
      %5566 = vset.pattern.permute.xlu0 24
      %5567 = vperm.xlu0 %5566, %v3187
      %v5568 = vpop.permute.xlu0 %5567
      %v5570 = vmul.f32 %v3436, %v5556
      %v5571 = vmul.f32 %v3437, %v5556
      %v5572 = vmul.f32 %v3438, %v5556
      %v5573 = vmul.f32 %v3439, %v5560
      %v5574 = vmul.f32 %v3440, %v5560
      %v5575 = vmul.f32 %v3441, %v5560
      %v5576 = vmul.f32 %v3442, %v5564
      %v5577 = vmul.f32 %v3443, %v5564
      %v5578 = vmul.f32 %v3444, %v5564
      %v5579 = vmul.f32 %v3445, %v5568
      %v5580 = vmul.f32 %v3446, %v5568
      %v5581 = vmul.f32 %v3447, %v5568
      %5594 = vrot.lane.b32.xlu0 %v5570, 64
      %v5595 = vpop.permute.xlu0 %5594
      %5596 = vrot.lane.b32.xlu0 %v5571, 64
      %v5597 = vpop.permute.xlu0 %5596
      %5598 = vrot.lane.b32.xlu0 %v5572, 64
      %v5599 = vpop.permute.xlu0 %5598
      %5600 = vrot.lane.b32.xlu0 %v5573, 64
      %v5601 = vpop.permute.xlu0 %5600
      %5602 = vrot.lane.b32.xlu0 %v5574, 64
      %v5603 = vpop.permute.xlu0 %5602
      %5604 = vrot.lane.b32.xlu0 %v5575, 64
      %v5605 = vpop.permute.xlu0 %5604
      %5606 = vrot.lane.b32.xlu0 %v5576, 64
      %v5607 = vpop.permute.xlu0 %5606
      %5608 = vrot.lane.b32.xlu0 %v5577, 64
      %v5609 = vpop.permute.xlu0 %5608
      %5610 = vrot.lane.b32.xlu0 %v5578, 64
      %v5611 = vpop.permute.xlu0 %5610
      %5612 = vrot.lane.b32.xlu0 %v5579, 64
      %v5613 = vpop.permute.xlu0 %5612
      %5614 = vrot.lane.b32.xlu0 %v5580, 64
      %v5615 = vpop.permute.xlu0 %5614
      %5616 = vrot.lane.b32.xlu0 %v5581, 64
      %v5617 = vpop.permute.xlu0 %5616
      %v5618 = vsel %vm922, %v5595, %v5597
      %v5619 = vsel %vm922, %v5597, %v5599
      %v5620 = vsel %vm922, %v5601, %v5603
      %v5621 = vsel %vm922, %v5603, %v5605
      %v5622 = vsel %vm922, %v5607, %v5609
      %v5623 = vsel %vm922, %v5609, %v5611
      %v5624 = vsel %vm922, %v5613, %v5615
      %v5625 = vsel %vm922, %v5615, %v5617
      %v5638 = vadd.f32 %v5542, %v5618
      %v5639 = vadd.f32 %v5543, %v5619
      %v5640 = vadd.f32 %v5544, %v5599
      %v5641 = vadd.f32 %v5545, %v5620
      %v5642 = vadd.f32 %v5546, %v5621
      %v5643 = vadd.f32 %v5547, %v5605
      %v5644 = vadd.f32 %v5548, %v5622
      %v5645 = vadd.f32 %v5549, %v5623
      %v5646 = vadd.f32 %v5550, %v5611
      %v5647 = vadd.f32 %v5551, %v5624
      %v5648 = vadd.f32 %v5552, %v5625
      %v5649 = vadd.f32 %v5553, %v5617
      %s5650 = scalar_lea.vmem %s1, 17
      %v5651 = vld [vmem:[%s5650] ss:$8 sm:$0x3]
      %v5653 = vlaneseq
      %v5654 = vshrl.u32 %v5653, 7
      %v5655 = vsub.s32 0, %v5654
      %v5656 = vrot.slane %v5651, %v5655
      %v5657 = vlaneseq
      %v5658 = vshrl.u32 %v5657, 7
      %v5659 = vsub.s32 1, %v5658
      %v5660 = vrot.slane %v5651, %v5659
      %5661 = vrot.lane.b32.xlu0 %v5656, 22
      %v5662 = vpop.permute.xlu0 %5661
      %5663 = vrot.lane.b32.xlu0 %v5660, 22
      %v5664 = vpop.permute.xlu0 %5663
      %vm5665 = vcmask 179200
      %v5666 = vsel %vm5665, %v5662, %v5664
      %v5670 = vmul.f32 %v5638, %v5662
      %v5671 = vmul.f32 %v5639, %v5666
      %v5672 = vmul.f32 %v5640, %v5664
      %v5673 = vmul.f32 %v5641, %v5662
      %v5674 = vmul.f32 %v5642, %v5666
      %v5675 = vmul.f32 %v5643, %v5664
      %v5676 = vmul.f32 %v5644, %v5662
      %v5677 = vmul.f32 %v5645, %v5666
      %v5678 = vmul.f32 %v5646, %v5664
      %v5679 = vmul.f32 %v5647, %v5662
      %v5680 = vmul.f32 %v5648, %v5666
      %v5681 = vmul.f32 %v5649, %v5664
      %5694 = vrot.lane.b32.xlu0 %v5670, 116
      %v5695 = vpop.permute.xlu0 %5694
      %5696 = vrot.lane.b32.xlu0 %v5671, 116
      %v5697 = vpop.permute.xlu0 %5696
      %5698 = vrot.lane.b32.xlu0 %v5672, 116
      %v5699 = vpop.permute.xlu0 %5698
      %5700 = vrot.lane.b32.xlu0 %v5673, 116
      %v5701 = vpop.permute.xlu0 %5700
      %5702 = vrot.lane.b32.xlu0 %v5674, 116
      %v5703 = vpop.permute.xlu0 %5702
      %5704 = vrot.lane.b32.xlu0 %v5675, 116
      %v5705 = vpop.permute.xlu0 %5704
      %5706 = vrot.lane.b32.xlu0 %v5676, 116
      %v5707 = vpop.permute.xlu0 %5706
      %5708 = vrot.lane.b32.xlu0 %v5677, 116
      %v5709 = vpop.permute.xlu0 %5708
      %5710 = vrot.lane.b32.xlu0 %v5678, 116
      %v5711 = vpop.permute.xlu0 %5710
      %5712 = vrot.lane.b32.xlu0 %v5679, 116
      %v5713 = vpop.permute.xlu0 %5712
      %5714 = vrot.lane.b32.xlu0 %v5680, 116
      %v5715 = vpop.permute.xlu0 %5714
      %5716 = vrot.lane.b32.xlu0 %v5681, 116
      %v5717 = vpop.permute.xlu0 %5716
      %vm5718 = vcmask 949248
      %v5719 = vsel %vm5718, %v5695, %v5697
      %v5720 = vsel %vm5718, %v5697, %v5699
      %v5721 = vsel %vm5718, %v5701, %v5703
      %v5722 = vsel %vm5718, %v5703, %v5705
      %v5723 = vsel %vm5718, %v5707, %v5709
      %v5724 = vsel %vm5718, %v5709, %v5711
      %v5725 = vsel %vm5718, %v5713, %v5715
      %v5726 = vsel %vm5718, %v5715, %v5717
      %v5739 = vadd.f32 %v5214, %v5719
      %v5740 = vadd.f32 %v5215, %v5720
      %v5741 = vadd.f32 %v5216, %v5699
      %v5742 = vadd.f32 %v5217, %v5721
      %v5743 = vadd.f32 %v5218, %v5722
      %v5744 = vadd.f32 %v5219, %v5705
      %v5745 = vadd.f32 %v5220, %v5723
      %v5746 = vadd.f32 %v5221, %v5724
      %v5747 = vadd.f32 %v5222, %v5711
      %v5748 = vadd.f32 %v5223, %v5725
      %v5749 = vadd.f32 %v5224, %v5726
      %v5750 = vadd.f32 %v5225, %v5717
      %v5751 = vld [vmem:[%s7] sm:$0xff]
      %v5752 = vld [vmem:[%s7 + $0x8] sm:$0xff]
      %v5753 = vld [vmem:[%s7 + $0x10] sm:$0xff]
      %v5754 = vld [vmem:[%s7 + $0x18] sm:$0xff]
      %5756 = vset.pattern.permute.xlu0 0
      %5757 = vperm.xlu0 %5756, %v5751
      %v5758 = vpop.permute.xlu0 %5757
      %5761 = vset.pattern.permute.xlu0 0
      %5762 = vperm.xlu0 %5761, %v5752
      %v5763 = vpop.permute.xlu0 %5762
      %5766 = vset.pattern.permute.xlu0 0
      %5767 = vperm.xlu0 %5766, %v5753
      %v5768 = vpop.permute.xlu0 %5767
      %5771 = vset.pattern.permute.xlu0 0
      %5772 = vperm.xlu0 %5771, %v5754
      %v5773 = vpop.permute.xlu0 %5772
      %v5775 = vadd.f32 %v5739, %v5758
      %v5776 = vadd.f32 %v5740, %v5758
      %v5777 = vadd.f32 %v5741, %v5758
      %v5778 = vadd.f32 %v5742, %v5763
      %v5779 = vadd.f32 %v5743, %v5763
      %v5780 = vadd.f32 %v5744, %v5763
      %v5781 = vadd.f32 %v5745, %v5768
      %v5782 = vadd.f32 %v5746, %v5768
      %v5783 = vadd.f32 %v5747, %v5768
      %v5784 = vadd.f32 %v5748, %v5773
      %v5785 = vadd.f32 %v5749, %v5773
      %v5786 = vadd.f32 %v5750, %v5773
      %5799 = vrot.lane.b32.xlu0 %v5775, 118
      %v5800 = vpop.permute.xlu0 %5799
      %5801 = vrot.lane.b32.xlu0 %v5776, 118
      %v5802 = vpop.permute.xlu0 %5801
      %5803 = vrot.lane.b32.xlu0 %v5777, 118
      %v5804 = vpop.permute.xlu0 %5803
      %5805 = vrot.lane.b32.xlu0 %v5778, 118
      %v5806 = vpop.permute.xlu0 %5805
      %5807 = vrot.lane.b32.xlu0 %v5779, 118
      %v5808 = vpop.permute.xlu0 %5807
      %5809 = vrot.lane.b32.xlu0 %v5780, 118
      %v5810 = vpop.permute.xlu0 %5809
      %5811 = vrot.lane.b32.xlu0 %v5781, 118
      %v5812 = vpop.permute.xlu0 %5811
      %5813 = vrot.lane.b32.xlu0 %v5782, 118
      %v5814 = vpop.permute.xlu0 %5813
      %5815 = vrot.lane.b32.xlu0 %v5783, 118
      %v5816 = vpop.permute.xlu0 %5815
      %5817 = vrot.lane.b32.xlu0 %v5784, 118
      %v5818 = vpop.permute.xlu0 %5817
      %5819 = vrot.lane.b32.xlu0 %v5785, 118
      %v5820 = vpop.permute.xlu0 %5819
      %5821 = vrot.lane.b32.xlu0 %v5786, 118
      %v5822 = vpop.permute.xlu0 %5821
      %vm5823 = vcmask 965632
      %v5824 = vsel %vm5823, %v5800, %v5802
      %v5825 = vsel %vm5823, %v5802, %v5804
      %v5826 = vsel %vm5823, %v5806, %v5808
      %v5827 = vsel %vm5823, %v5808, %v5810
      %v5828 = vsel %vm5823, %v5812, %v5814
      %v5829 = vsel %vm5823, %v5814, %v5816
      %v5830 = vsel %vm5823, %v5818, %v5820
      %v5831 = vsel %vm5823, %v5820, %v5822
      %v5840 = vmul.f32 %v306, %v5824
      %v5841 = vmul.f32 %v307, %v5825
      %v5842 = vmul.f32 %v308, %v5826
      %v5843 = vmul.f32 %v309, %v5827
      %v5844 = vmul.f32 %v310, %v5828
      %v5845 = vmul.f32 %v311, %v5829
      %v5846 = vmul.f32 %v312, %v5830
      %v5847 = vmul.f32 %v313, %v5831
      %5848 = vst [vmem:[%s305] sm:$0xff] %v5840
      %5849 = vst [vmem:[%s305 + $0x8] sm:$0xff] %v5841
      %5850 = vst [vmem:[%s305 + $0x10] sm:$0xff] %v5842
      %5851 = vst [vmem:[%s305 + $0x18] sm:$0xff] %v5843
      %5852 = vst [vmem:[%s305 + $0x20] sm:$0xff] %v5844
      %5853 = vst [vmem:[%s305 + $0x28] sm:$0xff] %v5845
      %5854 = vst [vmem:[%s305 + $0x30] sm:$0xff] %v5846
      %5855 = vst [vmem:[%s305 + $0x38] sm:$0xff] %v5847
      %p5856 = scmp.lt.s32.totalorder %s19, 1
      %s5857 = scalar_select %p5856, %s19, 1
      %s5858 = smul.addr %s5857, 8
      %s5859 = smul.addr %s5858, 8
      %s5860 = scalar_lea.vmem %s8, %s5859
      // Predicated region
      $region53: #{attention_forward.1} parent=51 // pred_check
        %p5861 = pneg %p210
      $region54: #{attention_forward.1} parent=51 // pred_check_branch
        %5863 = sbr.rel (%p5861) target = $region56
      $region55: #{attention_forward.1} parent=51 // pred_region
        _
      $region56: #{attention_forward.1} parent=51 // pred_fallthru
        _
    $region52: #{attention_forward.1} parent=5 // pred_fallthru
      _
    %p5864 = scmp.le.s32.totalorder 2, %s14
    // Predicated region
    $region57: #{attention_forward.1} parent=5 // pred_check
      %p5865 = pneg %p5864
    $region58: #{attention_forward.1} parent=5 // pred_check_branch
      %5867 = sbr.rel (%p5865) target = $region60
    $region59: #{attention_forward.1} parent=5 // pred_region
      %s5868 = ssub.s32 %s14, 2
      // Predicated region
      $region61: #{attention_forward.1} parent=59 // pred_check
        %p5869 = pneg %p216
      $region62: #{attention_forward.1} parent=59 // pred_check_branch
        %5871 = sbr.rel (%p5869) target = $region64
      $region63: #{attention_forward.1} parent=59 // pred_region
        %p5872 = scmp.lt.s32.totalorder %s20, 1
        %s5873 = scalar_select %p5872, %s20, 1
        %s5874 = smul.addr %s5873, 8
        %s5875 = smul.addr %s5874, 8
        %s5876 = scalar_lea.vmem %s8, %s5875
      $region64: #{attention_forward.1} parent=59 // pred_fallthru
        _
    $region60: #{attention_forward.1} parent=5 // pred_fallthru
      _
  $region6: #{attention_forward.1} parent=0 // loop_footer
    %s18 = sadd.s32 1, %s14
  $region7: #{attention_forward.1} parent=0 // loop_footer_branch
    %13 = sbr.rel target = $region3
  $region8: #{attention_forward.1} parent=0 // loop_exit
    _

</llo_original>
